<compile_context>
chip_gen: v5e
topology: v5e:2x2
jax: 0.10.0
libtpu: 0.0.40
codegen_flags: <defaults>
</compile_context>

<pallas_src>
import jax
import jax.numpy as jnp
from jax import lax
from jax.experimental import pallas as pl
from jax.experimental.pallas import tpu as pltpu

DEFAULT_SCALES = (0, 1, 2, 4, 8, 16)   # scale_list=None default (6 wavelets, 16 levels)
NUM_ACTIVATIONS = 2                    # 'blis' -> relu(x), relu(-x)
_LANE = 128
_SUBLANE_F32 = 8


def _round_up(x, m):
    return ((x + m - 1) // m) * m


def build_wavelet_constructor(scales):
    """The torch wavelet_constructor for a scale list (used by the pure-JAX reference)."""
    n = len(scales)
    levels = scales[-1] + 1
    w = jnp.zeros((n, levels), dtype=jnp.float32)
    for i in range(n - 1):
        w = w.at[i, scales[i]].set(1.0)
        w = w.at[i, scales[i + 1]].set(-1.0)
    w = w.at[-1, -1].set(1.0)
    return w


def _vmem_limit_bytes():
    # Raise the scoped-VMEM limit above the conservative default, sized from the chip.
    try:
        cap = int(pltpu.get_tpu_info().vmem_capacity_bytes)
    except Exception:
        cap = 64 * 1024 * 1024
    return min(int(cap * 0.8), 100 * 1024 * 1024)


def _make_scattering_kernel(scales, op_dtype):
    """Kernel body for a static scale list.

    Refs (per F-chunk grid step):
      mne_ref   : [Np, Ep] op_dtype  VMEM, resident across grid steps
                  = diag(D_v^-1) H diag(D_he^-1);  note m_en == m_ne^T.
      xT0_ref   : [fb, Np] f32  initial node features, feature-minor chunk
      eT0_ref   : [fb, Ep] f32  initial hyperedge features, feature-minor chunk
      out_n_ref : [B, W, 2, fb, Np]  HBM (pl.ANY), written by explicit DMA
      out_e_ref : [B, W, 2, fb, Ep]  HBM (pl.ANY)
      xT_ref    : running node diffusion state (scratch)
      prev_*    : node/edge snapshot at the previous wavelet scale (scratch)
      stg_*     : [2 slots, 2 activations, fb, Np/Ep] DMA staging (scratch)
      sem_*     : DMA semaphores, one per staging slot
    """
    num_scales = len(scales)

    def kernel(mne_ref, xT0_ref, eT0_ref, out_n_ref, out_e_ref,
               xT_ref, prev_n_ref, prev_e_ref, stg_n_ref, stg_e_ref,
               sem_n, sem_e):
        f_idx = pl.program_id(0)

        # ---- streamed output DMAs (double-buffered staging -> HBM) -------------
        def node_copy(s):
            slot = s & 1
            return pltpu.make_async_copy(stg_n_ref.at[slot], out_n_ref.at[f_idx, s],
                                         sem_n.at[slot])

        def edge_copy(s):
            slot = s & 1
            return pltpu.make_async_copy(stg_e_ref.at[slot], out_e_ref.at[f_idx, s],
                                         sem_e.at[slot])

        def emit_wavelet(s, wn, we):
            slot = s & 1
            if s >= 2:                       # free this staging slot before reuse
                node_copy(s - 2).wait()
                edge_copy(s - 2).wait()
            stg_n_ref[slot, 0] = jnp.maximum(wn, 0.0)    # relu(x)
            stg_n_ref[slot, 1] = jnp.maximum(-wn, 0.0)   # relu(-x)
            stg_e_ref[slot, 0] = jnp.maximum(we, 0.0)
            stg_e_ref[slot, 1] = jnp.maximum(-we, 0.0)
            node_copy(s).start()             # writeback hidden behind later diffusion
            edge_copy(s).start()

        # ---- right-normalized hypergraph diffusion (feature-minor) -------------
        def edge_step(xT):
            # e^T = x^T @ M_ne                      ([f, N] @ [N, E] -> [f, E])
            return jnp.dot(xT.astype(op_dtype), mne_ref[...],
                           preferred_element_type=jnp.float32)

        def node_step(eT):
            # x^T = e^T @ M_ne^T  (M_en == M_ne^T; contract both operands on E)
            return lax.dot_general(eT.astype(op_dtype), mne_ref[...],
                                   dimension_numbers=(((1,), (1,)), ((), ())),
                                   preferred_element_type=jnp.float32)

        def advance_x():
            # Intermediate diffusion levels never need the edge state stored.
            xT_ref[...] = node_step(edge_step(xT_ref[...]))

        xT_ref[...] = xT0_ref[...]
        prev_n_ref[...] = xT0_ref[...]       # snapshot at scale 0
        prev_e_ref[...] = eT0_ref[...]

        for k in range(num_scales - 1):
            nsteps = scales[k + 1] - scales[k]
            # all but the final step of the segment: node state only
            if nsteps - 1 > 0:
                if nsteps - 1 <= 2:
                    for _ in range(nsteps - 1):
                        advance_x()
                else:
                    def body(step, carry):
                        advance_x()
                        return carry
                    lax.fori_loop(0, nsteps - 1, body, 0, unroll=True)
            # peeled final step of the segment: need both new edge and node levels
            eT = edge_step(xT_ref[...])
            xT = node_step(eT)
            # wavelet k = snapshot[scales[k]] - snapshot[scales[k+1]]
            emit_wavelet(k, prev_n_ref[...] - xT, prev_e_ref[...] - eT)
            prev_n_ref[...] = xT
            prev_e_ref[...] = eT
            if k < num_scales - 2:           # last segment never reads xT_ref again
                xT_ref[...] = xT

        # last wavelet row of the constructor is the final snapshot itself
        emit_wavelet(num_scales - 1, prev_n_ref[...], prev_e_ref[...])

        # drain the copies still in flight (the last two wavelets)
        for s in range(max(0, num_scales - 2), num_scales):
            node_copy(s).wait()
            edge_copy(s).wait()

    return kernel


def hyper_scattering_forward(x, hyperedge_index, hyperedge_weight=None,
                             hyperedge_attr=None, num_edges=None,
                             scale_list=None, operator_dtype=jnp.float32,
                             feature_block=None):
    """Forward pass of HyperScatteringModule (default config). Returns (s_nodes, s_edges)."""
    scales = tuple(scale_list) if scale_list is not None else DEFAULT_SCALES
    assert len(scales) >= 2 and scales[0] == 0
    assert all(scales[i] < scales[i + 1] for i in range(len(scales) - 1))
    # (the fused two-nonzero combine only needs monotone scales starting at 0)

    x = x.astype(jnp.float32)
    num_nodes, feat = x.shape
    if num_edges is None:
        # Host sync; pass num_edges explicitly when calling under jit.
        num_edges = int(hyperedge_index[1].max()) + 1
    if hyperedge_weight is None:
        hyperedge_weight = jnp.ones((num_edges,), dtype=jnp.float32)
    assert hyperedge_attr is not None, "hyperedge_attr required (edge_features[0])"
    hyperedge_attr = hyperedge_attr.astype(jnp.float32)

    node_idx = hyperedge_index[0]
    edge_idx = hyperedge_index[1]

    # --- glue: densify the incidence and build the right-normalized operator --------
    # Duplicate (node, edge) incidences accumulate multiplicity, matching torch's
    # per-incidence scatter-add message passing.
    # TODO(synk): for very sparse incidence (nnz << N*E) replace densification with a
    # scalar-prefetch segment-sum kernel driven by hyperedge_index instead of dense matmuls.
    H = jnp.zeros((num_nodes, num_edges), dtype=jnp.float32)
    H = H.at[node_idx, edge_idx].add(1.0)

    d_v = H @ hyperedge_weight
    d_v_inv = jnp.where(d_v > 0, 1.0 / d_v, 0.0)
    d_he = jnp.sum(H, axis=0)
    d_he_inv = jnp.where(d_he > 0, 1.0 / d_he, 0.0)
    m_ne = d_v_inv[:, None] * H * d_he_inv[None, :]          # [N, E];  m_en == m_ne^T

    # --- padding: lane-dense last dims (128), sublane-multiple feature chunks --------
    n_pad = _round_up(num_nodes, _LANE)
    e_pad = _round_up(num_edges, _LANE)
    cap = feature_block if feature_block is not None else 128
    cap = max(_SUBLANE_F32, (int(cap) // _SUBLANE_F32) * _SUBLANE_F32)
    f_block = min(_round_up(feat, _SUBLANE_F32), cap)
    f_pad = _round_up(feat, f_block)
    num_f_blocks = f_pad // f_block
    # TODO(synk): batching multiple graphs / channel groups so F >= 128 would fix the
    # MXU M-axis fill (min(F,256)/256); here we only pad F to the sublane multiple.

    m_ne_p = jnp.zeros((n_pad, e_pad), operator_dtype).at[:num_nodes, :num_edges].set(
        m_ne.astype(operator_dtype))
    xT0 = jnp.zeros((f_pad, n_pad), jnp.float32).at[:feat, :num_nodes].set(x.T)
    eT0 = jnp.zeros((f_pad, e_pad), jnp.float32).at[:feat, :num_edges].set(hyperedge_attr.T)

    n_wav = len(scales)
    out_shapes = (
        jax.ShapeDtypeStruct((num_f_blocks, n_wav, NUM_ACTIVATIONS, f_block, n_pad),
                             jnp.float32),
        jax.ShapeDtypeStruct((num_f_blocks, n_wav, NUM_ACTIVATIONS, f_block, e_pad),
                             jnp.float32),
    )

    # TODO(synk): if the operator (n_pad*e_pad*op_bytes) plus the per-chunk state exceeds
    # the scoped VMEM limit (tighter on v7x's 64 MiB), add an operator-tiling fallback
    # (pltpu.emit_pipeline over E/N tiles) instead of relying on the limit alone.
    grid_spec = pltpu.PrefetchScalarGridSpec(
        num_scalar_prefetch=0,
        grid=(num_f_blocks,),
        in_specs=[
            pl.BlockSpec((n_pad, e_pad), lambda f: (0, 0)),      # operator: VMEM-resident
            pl.BlockSpec((f_block, n_pad), lambda f: (f, 0)),    # node features chunk
            pl.BlockSpec((f_block, e_pad), lambda f: (f, 0)),    # edge features chunk
        ],
        out_specs=(
            pl.BlockSpec(memory_space=pl.ANY),                   # streamed via manual DMA
            pl.BlockSpec(memory_space=pl.ANY),
        ),
        scratch_shapes=[
            pltpu.VMEM((f_block, n_pad), jnp.float32),                       # running x^T
            pltpu.VMEM((f_block, n_pad), jnp.float32),                       # prev node snap
            pltpu.VMEM((f_block, e_pad), jnp.float32),                       # prev edge snap
            pltpu.VMEM((2, NUM_ACTIVATIONS, f_block, n_pad), jnp.float32),   # node staging
            pltpu.VMEM((2, NUM_ACTIVATIONS, f_block, e_pad), jnp.float32),   # edge staging
            pltpu.SemaphoreType.DMA((2,)),                                    # node DMA sems
            pltpu.SemaphoreType.DMA((2,)),                                    # edge DMA sems
        ],
    )

    op_bytes = jnp.dtype(operator_dtype).itemsize
    cost = pl.CostEstimate(
        flops=int(4 * scales[-1] * f_pad * n_pad * e_pad),
        transcendentals=0,
        bytes_accessed=int(n_pad * e_pad * op_bytes + 4 * f_pad * (n_pad + e_pad)
                           + 4 * NUM_ACTIVATIONS * n_wav * f_pad * (n_pad + e_pad)),
    )

    act_n, act_e = pl.pallas_call(
        _make_scattering_kernel(scales, operator_dtype),
        out_shape=out_shapes,
        grid_spec=grid_spec,
        compiler_params=pltpu.CompilerParams(
            dimension_semantics=("parallel",),          # F-chunks shard across v7x's 2 TCs
            vmem_limit_bytes=_vmem_limit_bytes()),
        cost_estimate=cost,
    )(m_ne_p, xT0, eT0)

    # --- glue: (chunks, w, a, fb, n) -> torch's 'n (w f a)' (reshape=True) ----------
    # The node-major rearrange is required by the module's output contract; it is tiny
    # relative to the diffusion cascade. Consumers that accept feature-minor layout can
    # skip it entirely.
    act_n = act_n.transpose(1, 2, 0, 3, 4).reshape(n_wav, NUM_ACTIVATIONS, f_pad, n_pad)
    act_e = act_e.transpose(1, 2, 0, 3, 4).reshape(n_wav, NUM_ACTIVATIONS, f_pad, e_pad)
    s_nodes = jnp.transpose(act_n[:, :, :feat, :num_nodes], (3, 0, 2, 1)).reshape(num_nodes, -1)
    s_edges = jnp.transpose(act_e[:, :, :feat, :num_edges], (3, 0, 2, 1)).reshape(num_edges, -1)
    return s_nodes, s_edges


def _reference_forward(x, H, hyperedge_weight, hyperedge_attr, w_mat):
    """Pure-JAX float32 mirror of the PyTorch semantics (node-major), for verification."""
    hp = lax.Precision.HIGHEST
    d_v = H @ hyperedge_weight
    d_v_inv = jnp.where(d_v > 0, 1.0 / d_v, 0.0)
    d_he = jnp.sum(H, axis=0)
    d_he_inv = jnp.where(d_he > 0, 1.0 / d_he, 0.0)
    m_en = d_he_inv[:, None] * H.T * d_v_inv[None, :]     # [E, N]
    m_ne = d_v_inv[:, None] * H * d_he_inv[None, :]       # [N, E]

    node_lvls = [x]
    edge_lvls = [hyperedge_attr]
    for _ in range(w_mat.shape[1] - 1):
        e_new = jnp.dot(m_en, node_lvls[-1], precision=hp)
        x_new = jnp.dot(m_ne, e_new, precision=hp)
        edge_lvls.append(e_new)
        node_lvls.append(x_new)

    nd = jnp.stack(node_lvls)    # [L+1, N, F]
    ed = jnp.stack(edge_lvls)    # [L+1, E, F]
    wcn = jnp.einsum('ij,jkl->ikl', w_mat, nd, precision=hp)
    wce = jnp.einsum('ij,jkl->ikl', w_mat, ed, precision=hp)
    act_n = jnp.stack([jnp.maximum(wcn, 0.0), jnp.maximum(-wcn, 0.0)])   # (a, w, n, f)
    act_e = jnp.stack([jnp.maximum(wce, 0.0), jnp.maximum(-wce, 0.0)])
    s_nodes = jnp.transpose(act_n, (2, 1, 3, 0)).reshape(x.shape[0], -1)
    s_edges = jnp.transpose(act_e, (2, 1, 3, 0)).reshape(hyperedge_attr.shape[0], -1)
    return s_nodes, s_edges


if __name__ == "__main__":
    key = jax.random.PRNGKey(0)
    k_x, k_e, k_x2, k_e2 = jax.random.split(key, 4)

    num_nodes, num_edges, in_channels = 16, 8, 4

    # Deterministic small hypergraph: each hyperedge touches 3 nodes.
    nodes, edges = [], []
    for e in range(num_edges):
        for n in [(2 * e) % num_nodes, (2 * e + 1) % num_nodes, (3 * e + 2) % num_nodes]:
            nodes.append(n)
            edges.append(e)
    hyperedge_index = jnp.array([nodes, edges], dtype=jnp.int32)   # [2, 24]

    x = jax.random.normal(k_x, (num_nodes, in_channels), dtype=jnp.float32)
    hyperedge_attr = jax.random.normal(k_e, (num_edges, in_channels), dtype=jnp.float32)

    H = jnp.zeros((num_nodes, num_edges), jnp.float32).at[
        hyperedge_index[0], hyperedge_index[1]].add(1.0)
    hew = jnp.ones((num_edges,), jnp.float32)
    w_mat = build_wavelet_constructor(DEFAULT_SCALES)
    out_cols = len(DEFAULT_SCALES) * in_channels * NUM_ACTIVATIONS   # 6 * F * 2

    ref_n, ref_e = _reference_forward(x, H, hew, hyperedge_attr, w_mat)

    # Tolerances: the reference runs at HIGHEST precision; MXU f32 matmuls may use bf16
    # passes depending on the lowering, so a few 1e-2 absolute slack is allowed.

    # A) default (f32 operators + f32 state) vs the float32 torch-mirroring reference.
    s_n, s_e = hyper_scattering_forward(
        x, hyperedge_index, hyperedge_attr=hyperedge_attr, num_edges=num_edges)
    jax.block_until_ready((s_n, s_e))
    assert s_n.shape == (num_nodes, out_cols)
    assert s_e.shape == (num_edges, out_cols)
    assert jnp.allclose(s_n, ref_n, atol=3e-2, rtol=3e-2)
    assert jnp.allclose(s_e, ref_e, atol=3e-2, rtol=3e-2)

    # B) multi-chunk feature grid (exercises the F-parallel grid + per-chunk output DMA).
    in_channels_b = 12
    x_b = jax.random.normal(k_x2, (num_nodes, in_channels_b), dtype=jnp.float32)
    attr_b = jax.random.normal(k_e2, (num_edges, in_channels_b), dtype=jnp.float32)
    s_nb, s_eb = hyper_scattering_forward(
        x_b, hyperedge_index, hyperedge_attr=attr_b, num_edges=num_edges, feature_block=8)
    jax.block_until_ready((s_nb, s_eb))
    ref_nb, ref_eb = _reference_forward(x_b, H, hew, attr_b, w_mat)
    assert s_nb.shape == (num_nodes, len(DEFAULT_SCALES) * in_channels_b * NUM_ACTIVATIONS)
    assert jnp.allclose(s_nb, ref_nb, atol=3e-2, rtol=3e-2)
    assert jnp.allclose(s_eb, ref_eb, atol=3e-2, rtol=3e-2)

    # C) bf16-operator performance path, validated against the true float32 reference
    #    (documents the operator-quantization tradeoff; state stays f32 in VMEM).
    s_nq, s_eq = hyper_scattering_forward(
        x, hyperedge_index, hyperedge_attr=hyperedge_attr, num_edges=num_edges,
        operator_dtype=jnp.bfloat16)
    jax.block_until_ready((s_nq, s_eq))
    assert jnp.allclose(s_nq, ref_n, atol=6e-2, rtol=6e-2)
    assert jnp.allclose(s_eq, ref_e, atol=6e-2, rtol=6e-2)

    print("KERNEL_OK")
</pallas_src>

<mosaic_0001>
module attributes {stable_mosaic.version = 11 : i64} {
  func.func @kernel(%arg0: i32, %arg1: memref<128x128xf32, #tpu.memory_space<vmem>>, %arg2: memref<8x128xf32, #tpu.memory_space<vmem>>, %arg3: memref<8x128xf32, #tpu.memory_space<vmem>>, %arg4: memref<1x6x2x8x128xf32, #tpu.memory_space<any>>, %arg5: memref<1x6x2x8x128xf32, #tpu.memory_space<any>>, %arg6: memref<8x128xf32, #tpu.memory_space<vmem>>, %arg7: memref<8x128xf32, #tpu.memory_space<vmem>>, %arg8: memref<8x128xf32, #tpu.memory_space<vmem>>, %arg9: memref<2x2x8x128xf32, #tpu.memory_space<vmem>>, %arg10: memref<2x2x8x128xf32, #tpu.memory_space<vmem>>, %arg11: memref<2x!tpu.dma_semaphore, #tpu.memory_space<semaphore_mem>>, %arg12: memref<2x!tpu.dma_semaphore, #tpu.memory_space<semaphore_mem>>) attributes {dimension_semantics = [#tpu.dimension_semantics<parallel>], iteration_bounds = array<i64: 1>, scalar_prefetch = 0 : i64, scratch_operands = 7 : i64, tpu.core_type = #tpu.core_type<tc>, window_params = [{pipeline_mode = #tpu.pipeline_mode<synchronous>, transform_indices = @transform_0, window_bounds = array<i64: 128, 128>}, {transform_indices = @transform_1, window_bounds = array<i64: 8, 128>}, {transform_indices = @transform_2, window_bounds = array<i64: 8, 128>}, {}, {}]} {
    %c0 = arith.constant 0 : index
    %c0_0 = arith.constant 0 : index
    %0 = vector.load %arg2[%c0, %c0_0] : memref<8x128xf32, #tpu.memory_space<vmem>>, vector<8x128xf32>
    %c0_1 = arith.constant 0 : index
    %c0_2 = arith.constant 0 : index
    %1 = vector.load %arg6[%c0_1, %c0_2] : memref<8x128xf32, #tpu.memory_space<vmem>>, vector<8x128xf32>
    tpu.vector_store %arg6[%c0_1, %c0_2], %0 {strides = array<i32>} : memref<8x128xf32, #tpu.memory_space<vmem>>, vector<8x128xf32>,
    %c0_3 = arith.constant 0 : index
    %c0_4 = arith.constant 0 : index
    %2 = vector.load %arg2[%c0_3, %c0_4] : memref<8x128xf32, #tpu.memory_space<vmem>>, vector<8x128xf32>
    %c0_5 = arith.constant 0 : index
    %c0_6 = arith.constant 0 : index
    %3 = vector.load %arg7[%c0_5, %c0_6] : memref<8x128xf32, #tpu.memory_space<vmem>>, vector<8x128xf32>
    tpu.vector_store %arg7[%c0_5, %c0_6], %2 {strides = array<i32>} : memref<8x128xf32, #tpu.memory_space<vmem>>, vector<8x128xf32>,
    %c0_7 = arith.constant 0 : index
    %c0_8 = arith.constant 0 : index
    %4 = vector.load %arg3[%c0_7, %c0_8] : memref<8x128xf32, #tpu.memory_space<vmem>>, vector<8x128xf32>
    %c0_9 = arith.constant 0 : index
    %c0_10 = arith.constant 0 : index
    %5 = vector.load %arg8[%c0_9, %c0_10] : memref<8x128xf32, #tpu.memory_space<vmem>>, vector<8x128xf32>
    tpu.vector_store %arg8[%c0_9, %c0_10], %4 {strides = array<i32>} : memref<8x128xf32, #tpu.memory_space<vmem>>, vector<8x128xf32>,
    %c0_11 = arith.constant 0 : index
    %c0_12 = arith.constant 0 : index
    %6 = vector.load %arg6[%c0_11, %c0_12] : memref<8x128xf32, #tpu.memory_space<vmem>>, vector<8x128xf32>
    %c0_13 = arith.constant 0 : index
    %c0_14 = arith.constant 0 : index
    %7 = vector.load %arg1[%c0_13, %c0_14] : memref<128x128xf32, #tpu.memory_space<vmem>>, vector<128x128xf32>
    %cst = arith.constant dense<0.000000e+00> : vector<8x128xf32>
    %8 = tpu.matmul %6, %7, %cst {dimension_numbers = #tpu.dot_dimension_numbers<[1], [0], [0], [1], [0, 0, 1, 1], [], []>} : vector<8x128xf32>, vector<128x128xf32>, vector<8x128xf32> -> vector<8x128xf32>
    %c0_15 = arith.constant 0 : index
    %c0_16 = arith.constant 0 : index
    %9 = vector.load %arg1[%c0_15, %c0_16] : memref<128x128xf32, #tpu.memory_space<vmem>>, vector<128x128xf32>
    %cst_17 = arith.constant dense<0.000000e+00> : vector<8x128xf32>
    %10 = tpu.matmul %8, %9, %cst_17 {dimension_numbers = #tpu.dot_dimension_numbers<[1], [1], [0], [0], [0, 0, 1, 0], [], []>} : vector<8x128xf32>, vector<128x128xf32>, vector<8x128xf32> -> vector<8x128xf32>
    %c0_18 = arith.constant 0 : index
    %c0_19 = arith.constant 0 : index
    %11 = vector.load %arg7[%c0_18, %c0_19] : memref<8x128xf32, #tpu.memory_space<vmem>>, vector<8x128xf32>
    %12 = arith.subf %11, %10 : vector<8x128xf32>
    %c0_20 = arith.constant 0 : index
    %c0_21 = arith.constant 0 : index
    %13 = vector.load %arg8[%c0_20, %c0_21] : memref<8x128xf32, #tpu.memory_space<vmem>>, vector<8x128xf32>
    %14 = arith.subf %13, %8 : vector<8x128xf32>
    %cst_22 = arith.constant 0.000000e+00 : f32
    %15 = vector.broadcast %cst_22 : f32 to vector<8x128xf32>
    %16 = arith.maximumf %12, %15 : vector<8x128xf32>
    %c0_23 = arith.constant 0 : index
    %c0_24 = arith.constant 0 : index
    %c0_25 = arith.constant 0 : index
    %c0_26 = arith.constant 0 : index
    %17 = vector.load %arg9[%c0_23, %c0_24, %c0_25, %c0_26] : memref<2x2x8x128xf32, #tpu.memory_space<vmem>>, vector<1x1x8x128xf32>
    %18 = vector.shape_cast %17 : vector<1x1x8x128xf32> to vector<8x128xf32>
    %19 = vector.shape_cast %16 : vector<8x128xf32> to vector<1x1x8x128xf32>
    tpu.vector_store %arg9[%c0_23, %c0_24, %c0_25, %c0_26], %19 {strides = array<i32>} : memref<2x2x8x128xf32, #tpu.memory_space<vmem>>, vector<1x1x8x128xf32>,
    %cst_27 = arith.constant 0.000000e+00 : f32
    %20 = vector.broadcast %cst_27 : f32 to vector<8x128xf32>
    %21 = arith.subf %20, %12 : vector<8x128xf32>
    %cst_28 = arith.constant 0.000000e+00 : f32
    %22 = vector.broadcast %cst_28 : f32 to vector<8x128xf32>
    %23 = arith.maximumf %21, %22 : vector<8x128xf32>
    %c0_29 = arith.constant 0 : index
    %c1 = arith.constant 1 : index
    %c0_30 = arith.constant 0 : index
    %c0_31 = arith.constant 0 : index
    %24 = vector.load %arg9[%c0_29, %c1, %c0_30, %c0_31] : memref<2x2x8x128xf32, #tpu.memory_space<vmem>>, vector<1x1x8x128xf32>
    %25 = vector.shape_cast %24 : vector<1x1x8x128xf32> to vector<8x128xf32>
    %26 = vector.shape_cast %23 : vector<8x128xf32> to vector<1x1x8x128xf32>
    tpu.vector_store %arg9[%c0_29, %c1, %c0_30, %c0_31], %26 {strides = array<i32>} : memref<2x2x8x128xf32, #tpu.memory_space<vmem>>, vector<1x1x8x128xf32>,
    %cst_32 = arith.constant 0.000000e+00 : f32
    %27 = vector.broadcast %cst_32 : f32 to vector<8x128xf32>
    %28 = arith.maximumf %14, %27 : vector<8x128xf32>
    %c0_33 = arith.constant 0 : index
    %c0_34 = arith.constant 0 : index
    %c0_35 = arith.constant 0 : index
    %c0_36 = arith.constant 0 : index
    %29 = vector.load %arg10[%c0_33, %c0_34, %c0_35, %c0_36] : memref<2x2x8x128xf32, #tpu.memory_space<vmem>>, vector<1x1x8x128xf32>
    %30 = vector.shape_cast %29 : vector<1x1x8x128xf32> to vector<8x128xf32>
    %31 = vector.shape_cast %28 : vector<8x128xf32> to vector<1x1x8x128xf32>
    tpu.vector_store %arg10[%c0_33, %c0_34, %c0_35, %c0_36], %31 {strides = array<i32>} : memref<2x2x8x128xf32, #tpu.memory_space<vmem>>, vector<1x1x8x128xf32>,
    %cst_37 = arith.constant 0.000000e+00 : f32
    %32 = vector.broadcast %cst_37 : f32 to vector<8x128xf32>
    %33 = arith.subf %32, %14 : vector<8x128xf32>
    %cst_38 = arith.constant 0.000000e+00 : f32
    %34 = vector.broadcast %cst_38 : f32 to vector<8x128xf32>
    %35 = arith.maximumf %33, %34 : vector<8x128xf32>
    %c0_39 = arith.constant 0 : index
    %c1_40 = arith.constant 1 : index
    %c0_41 = arith.constant 0 : index
    %c0_42 = arith.constant 0 : index
    %36 = vector.load %arg10[%c0_39, %c1_40, %c0_41, %c0_42] : memref<2x2x8x128xf32, #tpu.memory_space<vmem>>, vector<1x1x8x128xf32>
    %37 = vector.shape_cast %36 : vector<1x1x8x128xf32> to vector<8x128xf32>
    %38 = vector.shape_cast %35 : vector<8x128xf32> to vector<1x1x8x128xf32>
    tpu.vector_store %arg10[%c0_39, %c1_40, %c0_41, %c0_42], %38 {strides = array<i32>} : memref<2x2x8x128xf32, #tpu.memory_space<vmem>>, vector<1x1x8x128xf32>,
    %c0_i32 = arith.constant 0 : i32
    %c0_i32_43 = arith.constant 0 : i32
    %c0_i32_44 = arith.constant 0 : i32
    %c0_i32_45 = arith.constant 0 : i32
    %c0_i32_46 = arith.constant 0 : i32
    %c0_i32_47 = arith.constant 0 : i32
    %39 = tpu.memref_slice %arg9[%c0_i32, %c0_i32_45, %c0_i32_46, %c0_i32_47] : memref<2x2x8x128xf32, #tpu.memory_space<vmem>> -> memref<1x2x8x128xf32, #tpu.memory_space<vmem>>
    %40 = tpu.memref_squeeze %39 : memref<1x2x8x128xf32, #tpu.memory_space<vmem>> -> memref<2x8x128xf32, #tpu.memory_space<vmem>>
    %c0_i32_48 = arith.constant 0 : i32
    %c0_i32_49 = arith.constant 0 : i32
    %c0_i32_50 = arith.constant 0 : i32
    %41 = tpu.memref_slice %arg4[%arg0, %c0_i32_43, %c0_i32_48, %c0_i32_49, %c0_i32_50] : memref<1x6x2x8x128xf32, #tpu.memory_space<any>> -> memref<1x1x2x8x128xf32, #tpu.memory_space<any>>
    %42 = tpu.memref_squeeze %41 : memref<1x1x2x8x128xf32, #tpu.memory_space<any>> -> memref<2x8x128xf32, #tpu.memory_space<any>>
    %43 = tpu.memref_slice %arg11[%c0_i32_44] : memref<2x!tpu.dma_semaphore, #tpu.memory_space<semaphore_mem>> -> memref<1x!tpu.dma_semaphore, #tpu.memory_space<semaphore_mem>>
    %44 = tpu.memref_squeeze %43 : memref<1x!tpu.dma_semaphore, #tpu.memory_space<semaphore_mem>> -> memref<!tpu.dma_semaphore, #tpu.memory_space<semaphore_mem>>
    tpu.enqueue_dma source(%40 : memref<2x8x128xf32, #tpu.memory_space<vmem>>) target(%42 : memref<2x8x128xf32, #tpu.memory_space<any>>) target_semaphore(%44 : memref<!tpu.dma_semaphore, #tpu.memory_space<semaphore_mem>>)
    %c0_i32_51 = arith.constant 0 : i32
    %c0_i32_52 = arith.constant 0 : i32
    %c0_i32_53 = arith.constant 0 : i32
    %c0_i32_54 = arith.constant 0 : i32
    %c0_i32_55 = arith.constant 0 : i32
    %c0_i32_56 = arith.constant 0 : i32
    %45 = tpu.memref_slice %arg10[%c0_i32_51, %c0_i32_54, %c0_i32_55, %c0_i32_56] : memref<2x2x8x128xf32, #tpu.memory_space<vmem>> -> memref<1x2x8x128xf32, #tpu.memory_space<vmem>>
    %46 = tpu.memref_squeeze %45 : memref<1x2x8x128xf32, #tpu.memory_space<vmem>> -> memref<2x8x128xf32, #tpu.memory_space<vmem>>
    %c0_i32_57 = arith.constant 0 : i32
    %c0_i32_58 = arith.constant 0 : i32
    %c0_i32_59 = arith.constant 0 : i32
    %47 = tpu.memref_slice %arg5[%arg0, %c0_i32_52, %c0_i32_57, %c0_i32_58, %c0_i32_59] : memref<1x6x2x8x128xf32, #tpu.memory_space<any>> -> memref<1x1x2x8x128xf32, #tpu.memory_space<any>>
    %48 = tpu.memref_squeeze %47 : memref<1x1x2x8x128xf32, #tpu.memory_space<any>> -> memref<2x8x128xf32, #tpu.memory_space<any>>
    %49 = tpu.memref_slice %arg12[%c0_i32_53] : memref<2x!tpu.dma_semaphore, #tpu.memory_space<semaphore_mem>> -> memref<1x!tpu.dma_semaphore, #tpu.memory_space<semaphore_mem>>
    %50 = tpu.memref_squeeze %49 : memref<1x!tpu.dma_semaphore, #tpu.memory_space<semaphore_mem>> -> memref<!tpu.dma_semaphore, #tpu.memory_space<semaphore_mem>>
    tpu.enqueue_dma source(%46 : memref<2x8x128xf32, #tpu.memory_space<vmem>>) target(%48 : memref<2x8x128xf32, #tpu.memory_space<any>>) target_semaphore(%50 : memref<!tpu.dma_semaphore, #tpu.memory_space<semaphore_mem>>)
    %c0_60 = arith.constant 0 : index
    %c0_61 = arith.constant 0 : index
    %51 = vector.load %arg7[%c0_60, %c0_61] : memref<8x128xf32, #tpu.memory_space<vmem>>, vector<8x128xf32>
    tpu.vector_store %arg7[%c0_60, %c0_61], %10 {strides = array<i32>} : memref<8x128xf32, #tpu.memory_space<vmem>>, vector<8x128xf32>,
    %c0_62 = arith.constant 0 : index
    %c0_63 = arith.constant 0 : index
    %52 = vector.load %arg8[%c0_62, %c0_63] : memref<8x128xf32, #tpu.memory_space<vmem>>, vector<8x128xf32>
    tpu.vector_store %arg8[%c0_62, %c0_63], %8 {strides = array<i32>} : memref<8x128xf32, #tpu.memory_space<vmem>>, vector<8x128xf32>,
    %c0_64 = arith.constant 0 : index
    %c0_65 = arith.constant 0 : index
    %53 = vector.load %arg6[%c0_64, %c0_65] : memref<8x128xf32, #tpu.memory_space<vmem>>, vector<8x128xf32>
    tpu.vector_store %arg6[%c0_64, %c0_65], %10 {strides = array<i32>} : memref<8x128xf32, #tpu.memory_space<vmem>>, vector<8x128xf32>,
    %c0_66 = arith.constant 0 : index
    %c0_67 = arith.constant 0 : index
    %54 = vector.load %arg6[%c0_66, %c0_67] : memref<8x128xf32, #tpu.memory_space<vmem>>, vector<8x128xf32>
    %c0_68 = arith.constant 0 : index
    %c0_69 = arith.constant 0 : index
    %55 = vector.load %arg1[%c0_68, %c0_69] : memref<128x128xf32, #tpu.memory_space<vmem>>, vector<128x128xf32>
    %cst_70 = arith.constant dense<0.000000e+00> : vector<8x128xf32>
    %56 = tpu.matmul %54, %55, %cst_70 {dimension_numbers = #tpu.dot_dimension_numbers<[1], [0], [0], [1], [0, 0, 1, 1], [], []>} : vector<8x128xf32>, vector<128x128xf32>, vector<8x128xf32> -> vector<8x128xf32>
    %c0_71 = arith.constant 0 : index
    %c0_72 = arith.constant 0 : index
    %57 = vector.load %arg1[%c0_71, %c0_72] : memref<128x128xf32, #tpu.memory_space<vmem>>, vector<128x128xf32>
    %cst_73 = arith.constant dense<0.000000e+00> : vector<8x128xf32>
    %58 = tpu.matmul %56, %57, %cst_73 {dimension_numbers = #tpu.dot_dimension_numbers<[1], [1], [0], [0], [0, 0, 1, 0], [], []>} : vector<8x128xf32>, vector<128x128xf32>, vector<8x128xf32> -> vector<8x128xf32>
    %c0_74 = arith.constant 0 : index
    %c0_75 = arith.constant 0 : index
    %59 = vector.load %arg7[%c0_74, %c0_75] : memref<8x128xf32, #tpu.memory_space<vmem>>, vector<8x128xf32>
    %60 = arith.subf %59, %58 : vector<8x128xf32>
    %c0_76 = arith.constant 0 : index
    %c0_77 = arith.constant 0 : index
    %61 = vector.load %arg8[%c0_76, %c0_77] : memref<8x128xf32, #tpu.memory_space<vmem>>, vector<8x128xf32>
    %62 = arith.subf %61, %56 : vector<8x128xf32>
    %cst_78 = arith.constant 0.000000e+00 : f32
    %63 = vector.broadcast %cst_78 : f32 to vector<8x128xf32>
    %64 = arith.maximumf %60, %63 : vector<8x128xf32>
    %c1_79 = arith.constant 1 : index
    %c0_80 = arith.constant 0 : index
    %c0_81 = arith.constant 0 : index
    %c0_82 = arith.constant 0 : index
    %65 = vector.load %arg9[%c1_79, %c0_80, %c0_81, %c0_82] : memref<2x2x8x128xf32, #tpu.memory_space<vmem>>, vector<1x1x8x128xf32>
    %66 = vector.shape_cast %65 : vector<1x1x8x128xf32> to vector<8x128xf32>
    %67 = vector.shape_cast %64 : vector<8x128xf32> to vector<1x1x8x128xf32>
    tpu.vector_store %arg9[%c1_79, %c0_80, %c0_81, %c0_82], %67 {strides = array<i32>} : memref<2x2x8x128xf32, #tpu.memory_space<vmem>>, vector<1x1x8x128xf32>,
    %cst_83 = arith.constant 0.000000e+00 : f32
    %68 = vector.broadcast %cst_83 : f32 to vector<8x128xf32>
    %69 = arith.subf %68, %60 : vector<8x128xf32>
    %cst_84 = arith.constant 0.000000e+00 : f32
    %70 = vector.broadcast %cst_84 : f32 to vector<8x128xf32>
    %71 = arith.maximumf %69, %70 : vector<8x128xf32>
    %c1_85 = arith.constant 1 : index
    %c1_86 = arith.constant 1 : index
    %c0_87 = arith.constant 0 : index
    %c0_88 = arith.constant 0 : index
    %72 = vector.load %arg9[%c1_85, %c1_86, %c0_87, %c0_88] : memref<2x2x8x128xf32, #tpu.memory_space<vmem>>, vector<1x1x8x128xf32>
    %73 = vector.shape_cast %72 : vector<1x1x8x128xf32> to vector<8x128xf32>
    %74 = vector.shape_cast %71 : vector<8x128xf32> to vector<1x1x8x128xf32>
    tpu.vector_store %arg9[%c1_85, %c1_86, %c0_87, %c0_88], %74 {strides = array<i32>} : memref<2x2x8x128xf32, #tpu.memory_space<vmem>>, vector<1x1x8x128xf32>,
    %cst_89 = arith.constant 0.000000e+00 : f32
    %75 = vector.broadcast %cst_89 : f32 to vector<8x128xf32>
    %76 = arith.maximumf %62, %75 : vector<8x128xf32>
    %c1_90 = arith.constant 1 : index
    %c0_91 = arith.constant 0 : index
    %c0_92 = arith.constant 0 : index
    %c0_93 = arith.constant 0 : index
    %77 = vector.load %arg10[%c1_90, %c0_91, %c0_92, %c0_93] : memref<2x2x8x128xf32, #tpu.memory_space<vmem>>, vector<1x1x8x128xf32>
    %78 = vector.shape_cast %77 : vector<1x1x8x128xf32> to vector<8x128xf32>
    %79 = vector.shape_cast %76 : vector<8x128xf32> to vector<1x1x8x128xf32>
    tpu.vector_store %arg10[%c1_90, %c0_91, %c0_92, %c0_93], %79 {strides = array<i32>} : memref<2x2x8x128xf32, #tpu.memory_space<vmem>>, vector<1x1x8x128xf32>,
    %cst_94 = arith.constant 0.000000e+00 : f32
    %80 = vector.broadcast %cst_94 : f32 to vector<8x128xf32>
    %81 = arith.subf %80, %62 : vector<8x128xf32>
    %cst_95 = arith.constant 0.000000e+00 : f32
    %82 = vector.broadcast %cst_95 : f32 to vector<8x128xf32>
    %83 = arith.maximumf %81, %82 : vector<8x128xf32>
    %c1_96 = arith.constant 1 : index
    %c1_97 = arith.constant 1 : index
    %c0_98 = arith.constant 0 : index
    %c0_99 = arith.constant 0 : index
    %84 = vector.load %arg10[%c1_96, %c1_97, %c0_98, %c0_99] : memref<2x2x8x128xf32, #tpu.memory_space<vmem>>, vector<1x1x8x128xf32>
    %85 = vector.shape_cast %84 : vector<1x1x8x128xf32> to vector<8x128xf32>
    %86 = vector.shape_cast %83 : vector<8x128xf32> to vector<1x1x8x128xf32>
    tpu.vector_store %arg10[%c1_96, %c1_97, %c0_98, %c0_99], %86 {strides = array<i32>} : memref<2x2x8x128xf32, #tpu.memory_space<vmem>>, vector<1x1x8x128xf32>,
    %c1_i32 = arith.constant 1 : i32
    %c1_i32_100 = arith.constant 1 : i32
    %c1_i32_101 = arith.constant 1 : i32
    %c0_i32_102 = arith.constant 0 : i32
    %c0_i32_103 = arith.constant 0 : i32
    %c0_i32_104 = arith.constant 0 : i32
    %87 = tpu.memref_slice %arg9[%c1_i32, %c0_i32_102, %c0_i32_103, %c0_i32_104] : memref<2x2x8x128xf32, #tpu.memory_space<vmem>> -> memref<1x2x8x128xf32, #tpu.memory_space<vmem>>
    %88 = tpu.memref_squeeze %87 : memref<1x2x8x128xf32, #tpu.memory_space<vmem>> -> memref<2x8x128xf32, #tpu.memory_space<vmem>>
    %c0_i32_105 = arith.constant 0 : i32
    %c0_i32_106 = arith.constant 0 : i32
    %c0_i32_107 = arith.constant 0 : i32
    %89 = tpu.memref_slice %arg4[%arg0, %c1_i32_100, %c0_i32_105, %c0_i32_106, %c0_i32_107] : memref<1x6x2x8x128xf32, #tpu.memory_space<any>> -> memref<1x1x2x8x128xf32, #tpu.memory_space<any>>
    %90 = tpu.memref_squeeze %89 : memref<1x1x2x8x128xf32, #tpu.memory_space<any>> -> memref<2x8x128xf32, #tpu.memory_space<any>>
    %91 = tpu.memref_slice %arg11[%c1_i32_101] : memref<2x!tpu.dma_semaphore, #tpu.memory_space<semaphore_mem>> -> memref<1x!tpu.dma_semaphore, #tpu.memory_space<semaphore_mem>>
    %92 = tpu.memref_squeeze %91 : memref<1x!tpu.dma_semaphore, #tpu.memory_space<semaphore_mem>> -> memref<!tpu.dma_semaphore, #tpu.memory_space<semaphore_mem>>
    tpu.enqueue_dma source(%88 : memref<2x8x128xf32, #tpu.memory_space<vmem>>) target(%90 : memref<2x8x128xf32, #tpu.memory_space<any>>) target_semaphore(%92 : memref<!tpu.dma_semaphore, #tpu.memory_space<semaphore_mem>>)
    %c1_i32_108 = arith.constant 1 : i32
    %c1_i32_109 = arith.constant 1 : i32
    %c1_i32_110 = arith.constant 1 : i32
    %c0_i32_111 = arith.constant 0 : i32
    %c0_i32_112 = arith.constant 0 : i32
    %c0_i32_113 = arith.constant 0 : i32
    %93 = tpu.memref_slice %arg10[%c1_i32_108, %c0_i32_111, %c0_i32_112, %c0_i32_113] : memref<2x2x8x128xf32, #tpu.memory_space<vmem>> -> memref<1x2x8x128xf32, #tpu.memory_space<vmem>>
    %94 = tpu.memref_squeeze %93 : memref<1x2x8x128xf32, #tpu.memory_space<vmem>> -> memref<2x8x128xf32, #tpu.memory_space<vmem>>
    %c0_i32_114 = arith.constant 0 : i32
    %c0_i32_115 = arith.constant 0 : i32
    %c0_i32_116 = arith.constant 0 : i32
    %95 = tpu.memref_slice %arg5[%arg0, %c1_i32_109, %c0_i32_114, %c0_i32_115, %c0_i32_116] : memref<1x6x2x8x128xf32, #tpu.memory_space<any>> -> memref<1x1x2x8x128xf32, #tpu.memory_space<any>>
    %96 = tpu.memref_squeeze %95 : memref<1x1x2x8x128xf32, #tpu.memory_space<any>> -> memref<2x8x128xf32, #tpu.memory_space<any>>
    %97 = tpu.memref_slice %arg12[%c1_i32_110] : memref<2x!tpu.dma_semaphore, #tpu.memory_space<semaphore_mem>> -> memref<1x!tpu.dma_semaphore, #tpu.memory_space<semaphore_mem>>
    %98 = tpu.memref_squeeze %97 : memref<1x!tpu.dma_semaphore, #tpu.memory_space<semaphore_mem>> -> memref<!tpu.dma_semaphore, #tpu.memory_space<semaphore_mem>>
    tpu.enqueue_dma source(%94 : memref<2x8x128xf32, #tpu.memory_space<vmem>>) target(%96 : memref<2x8x128xf32, #tpu.memory_space<any>>) target_semaphore(%98 : memref<!tpu.dma_semaphore, #tpu.memory_space<semaphore_mem>>)
    %c0_117 = arith.constant 0 : index
    %c0_118 = arith.constant 0 : index
    %99 = vector.load %arg7[%c0_117, %c0_118] : memref<8x128xf32, #tpu.memory_space<vmem>>, vector<8x128xf32>
    tpu.vector_store %arg7[%c0_117, %c0_118], %58 {strides = array<i32>} : memref<8x128xf32, #tpu.memory_space<vmem>>, vector<8x128xf32>,
    %c0_119 = arith.constant 0 : index
    %c0_120 = arith.constant 0 : index
    %100 = vector.load %arg8[%c0_119, %c0_120] : memref<8x128xf32, #tpu.memory_space<vmem>>, vector<8x128xf32>
    tpu.vector_store %arg8[%c0_119, %c0_120], %56 {strides = array<i32>} : memref<8x128xf32, #tpu.memory_space<vmem>>, vector<8x128xf32>,
    %c0_121 = arith.constant 0 : index
    %c0_122 = arith.constant 0 : index
    %101 = vector.load %arg6[%c0_121, %c0_122] : memref<8x128xf32, #tpu.memory_space<vmem>>, vector<8x128xf32>
    tpu.vector_store %arg6[%c0_121, %c0_122], %58 {strides = array<i32>} : memref<8x128xf32, #tpu.memory_space<vmem>>, vector<8x128xf32>,
    %c0_123 = arith.constant 0 : index
    %c0_124 = arith.constant 0 : index
    %102 = vector.load %arg6[%c0_123, %c0_124] : memref<8x128xf32, #tpu.memory_space<vmem>>, vector<8x128xf32>
    %c0_125 = arith.constant 0 : index
    %c0_126 = arith.constant 0 : index
    %103 = vector.load %arg1[%c0_125, %c0_126] : memref<128x128xf32, #tpu.memory_space<vmem>>, vector<128x128xf32>
    %cst_127 = arith.constant dense<0.000000e+00> : vector<8x128xf32>
    %104 = tpu.matmul %102, %103, %cst_127 {dimension_numbers = #tpu.dot_dimension_numbers<[1], [0], [0], [1], [0, 0, 1, 1], [], []>} : vector<8x128xf32>, vector<128x128xf32>, vector<8x128xf32> -> vector<8x128xf32>
    %c0_128 = arith.constant 0 : index
    %c0_129 = arith.constant 0 : index
    %105 = vector.load %arg1[%c0_128, %c0_129] : memref<128x128xf32, #tpu.memory_space<vmem>>, vector<128x128xf32>
    %cst_130 = arith.constant dense<0.000000e+00> : vector<8x128xf32>
    %106 = tpu.matmul %104, %105, %cst_130 {dimension_numbers = #tpu.dot_dimension_numbers<[1], [1], [0], [0], [0, 0, 1, 0], [], []>} : vector<8x128xf32>, vector<128x128xf32>, vector<8x128xf32> -> vector<8x128xf32>
    %c0_131 = arith.constant 0 : index
    %c0_132 = arith.constant 0 : index
    %107 = vector.load %arg6[%c0_131, %c0_132] : memref<8x128xf32, #tpu.memory_space<vmem>>, vector<8x128xf32>
    tpu.vector_store %arg6[%c0_131, %c0_132], %106 {strides = array<i32>} : memref<8x128xf32, #tpu.memory_space<vmem>>, vector<8x128xf32>,
    %c0_133 = arith.constant 0 : index
    %c0_134 = arith.constant 0 : index
    %108 = vector.load %arg6[%c0_133, %c0_134] : memref<8x128xf32, #tpu.memory_space<vmem>>, vector<8x128xf32>
    %c0_135 = arith.constant 0 : index
    %c0_136 = arith.constant 0 : index
    %109 = vector.load %arg1[%c0_135, %c0_136] : memref<128x128xf32, #tpu.memory_space<vmem>>, vector<128x128xf32>
    %cst_137 = arith.constant dense<0.000000e+00> : vector<8x128xf32>
    %110 = tpu.matmul %108, %109, %cst_137 {dimension_numbers = #tpu.dot_dimension_numbers<[1], [0], [0], [1], [0, 0, 1, 1], [], []>} : vector<8x128xf32>, vector<128x128xf32>, vector<8x128xf32> -> vector<8x128xf32>
    %c0_138 = arith.constant 0 : index
    %c0_139 = arith.constant 0 : index
    %111 = vector.load %arg1[%c0_138, %c0_139] : memref<128x128xf32, #tpu.memory_space<vmem>>, vector<128x128xf32>
    %cst_140 = arith.constant dense<0.000000e+00> : vector<8x128xf32>
    %112 = tpu.matmul %110, %111, %cst_140 {dimension_numbers = #tpu.dot_dimension_numbers<[1], [1], [0], [0], [0, 0, 1, 0], [], []>} : vector<8x128xf32>, vector<128x128xf32>, vector<8x128xf32> -> vector<8x128xf32>
    %c0_141 = arith.constant 0 : index
    %c0_142 = arith.constant 0 : index
    %113 = vector.load %arg7[%c0_141, %c0_142] : memref<8x128xf32, #tpu.memory_space<vmem>>, vector<8x128xf32>
    %114 = arith.subf %113, %112 : vector<8x128xf32>
    %c0_143 = arith.constant 0 : index
    %c0_144 = arith.constant 0 : index
    %115 = vector.load %arg8[%c0_143, %c0_144] : memref<8x128xf32, #tpu.memory_space<vmem>>, vector<8x128xf32>
    %116 = arith.subf %115, %110 : vector<8x128xf32>
    %c0_i32_145 = arith.constant 0 : i32
    %c0_i32_146 = arith.constant 0 : i32
    %c0_i32_147 = arith.constant 0 : i32
    %c0_i32_148 = arith.constant 0 : i32
    %c0_i32_149 = arith.constant 0 : i32
    %c0_i32_150 = arith.constant 0 : i32
    %117 = tpu.memref_slice %arg9[%c0_i32_145, %c0_i32_148, %c0_i32_149, %c0_i32_150] : memref<2x2x8x128xf32, #tpu.memory_space<vmem>> -> memref<1x2x8x128xf32, #tpu.memory_space<vmem>>
    %118 = tpu.memref_squeeze %117 : memref<1x2x8x128xf32, #tpu.memory_space<vmem>> -> memref<2x8x128xf32, #tpu.memory_space<vmem>>
    %c0_i32_151 = arith.constant 0 : i32
    %c0_i32_152 = arith.constant 0 : i32
    %c0_i32_153 = arith.constant 0 : i32
    %119 = tpu.memref_slice %arg4[%arg0, %c0_i32_146, %c0_i32_151, %c0_i32_152, %c0_i32_153] : memref<1x6x2x8x128xf32, #tpu.memory_space<any>> -> memref<1x1x2x8x128xf32, #tpu.memory_space<any>>
    %120 = tpu.memref_squeeze %119 : memref<1x1x2x8x128xf32, #tpu.memory_space<any>> -> memref<2x8x128xf32, #tpu.memory_space<any>>
    %121 = tpu.memref_slice %arg11[%c0_i32_147] : memref<2x!tpu.dma_semaphore, #tpu.memory_space<semaphore_mem>> -> memref<1x!tpu.dma_semaphore, #tpu.memory_space<semaphore_mem>>
    %122 = tpu.memref_squeeze %121 : memref<1x!tpu.dma_semaphore, #tpu.memory_space<semaphore_mem>> -> memref<!tpu.dma_semaphore, #tpu.memory_space<semaphore_mem>>
    tpu.wait_dma2 semaphore(%122 : memref<!tpu.dma_semaphore, #tpu.memory_space<semaphore_mem>>) src(%118 : memref<2x8x128xf32, #tpu.memory_space<vmem>>) dst(%120 : memref<2x8x128xf32, #tpu.memory_space<any>>)
    %c0_i32_154 = arith.constant 0 : i32
    %c0_i32_155 = arith.constant 0 : i32
    %c0_i32_156 = arith.constant 0 : i32
    %c0_i32_157 = arith.constant 0 : i32
    %c0_i32_158 = arith.constant 0 : i32
    %c0_i32_159 = arith.constant 0 : i32
    %123 = tpu.memref_slice %arg10[%c0_i32_154, %c0_i32_157, %c0_i32_158, %c0_i32_159] : memref<2x2x8x128xf32, #tpu.memory_space<vmem>> -> memref<1x2x8x128xf32, #tpu.memory_space<vmem>>
    %124 = tpu.memref_squeeze %123 : memref<1x2x8x128xf32, #tpu.memory_space<vmem>> -> memref<2x8x128xf32, #tpu.memory_space<vmem>>
    %c0_i32_160 = arith.constant 0 : i32
    %c0_i32_161 = arith.constant 0 : i32
    %c0_i32_162 = arith.constant 0 : i32
    %125 = tpu.memref_slice %arg5[%arg0, %c0_i32_155, %c0_i32_160, %c0_i32_161, %c0_i32_162] : memref<1x6x2x8x128xf32, #tpu.memory_space<any>> -> memref<1x1x2x8x128xf32, #tpu.memory_space<any>>
    %126 = tpu.memref_squeeze %125 : memref<1x1x2x8x128xf32, #tpu.memory_space<any>> -> memref<2x8x128xf32, #tpu.memory_space<any>>
    %127 = tpu.memref_slice %arg12[%c0_i32_156] : memref<2x!tpu.dma_semaphore, #tpu.memory_space<semaphore_mem>> -> memref<1x!tpu.dma_semaphore, #tpu.memory_space<semaphore_mem>>
    %128 = tpu.memref_squeeze %127 : memref<1x!tpu.dma_semaphore, #tpu.memory_space<semaphore_mem>> -> memref<!tpu.dma_semaphore, #tpu.memory_space<semaphore_mem>>
    tpu.wait_dma2 semaphore(%128 : memref<!tpu.dma_semaphore, #tpu.memory_space<semaphore_mem>>) src(%124 : memref<2x8x128xf32, #tpu.memory_space<vmem>>) dst(%126 : memref<2x8x128xf32, #tpu.memory_space<any>>)
    %cst_163 = arith.constant 0.000000e+00 : f32
    %129 = vector.broadcast %cst_163 : f32 to vector<8x128xf32>
    %130 = arith.maximumf %114, %129 : vector<8x128xf32>
    %c0_164 = arith.constant 0 : index
    %c0_165 = arith.constant 0 : index
    %c0_166 = arith.constant 0 : index
    %c0_167 = arith.constant 0 : index
    %131 = vector.load %arg9[%c0_164, %c0_165, %c0_166, %c0_167] : memref<2x2x8x128xf32, #tpu.memory_space<vmem>>, vector<1x1x8x128xf32>
    %132 = vector.shape_cast %131 : vector<1x1x8x128xf32> to vector<8x128xf32>
    %133 = vector.shape_cast %130 : vector<8x128xf32> to vector<1x1x8x128xf32>
    tpu.vector_store %arg9[%c0_164, %c0_165, %c0_166, %c0_167], %133 {strides = array<i32>} : memref<2x2x8x128xf32, #tpu.memory_space<vmem>>, vector<1x1x8x128xf32>,
    %cst_168 = arith.constant 0.000000e+00 : f32
    %134 = vector.broadcast %cst_168 : f32 to vector<8x128xf32>
    %135 = arith.subf %134, %114 : vector<8x128xf32>
    %cst_169 = arith.constant 0.000000e+00 : f32
    %136 = vector.broadcast %cst_169 : f32 to vector<8x128xf32>
    %137 = arith.maximumf %135, %136 : vector<8x128xf32>
    %c0_170 = arith.constant 0 : index
    %c1_171 = arith.constant 1 : index
    %c0_172 = arith.constant 0 : index
    %c0_173 = arith.constant 0 : index
    %138 = vector.load %arg9[%c0_170, %c1_171, %c0_172, %c0_173] : memref<2x2x8x128xf32, #tpu.memory_space<vmem>>, vector<1x1x8x128xf32>
    %139 = vector.shape_cast %138 : vector<1x1x8x128xf32> to vector<8x128xf32>
    %140 = vector.shape_cast %137 : vector<8x128xf32> to vector<1x1x8x128xf32>
    tpu.vector_store %arg9[%c0_170, %c1_171, %c0_172, %c0_173], %140 {strides = array<i32>} : memref<2x2x8x128xf32, #tpu.memory_space<vmem>>, vector<1x1x8x128xf32>,
    %cst_174 = arith.constant 0.000000e+00 : f32
    %141 = vector.broadcast %cst_174 : f32 to vector<8x128xf32>
    %142 = arith.maximumf %116, %141 : vector<8x128xf32>
    %c0_175 = arith.constant 0 : index
    %c0_176 = arith.constant 0 : index
    %c0_177 = arith.constant 0 : index
    %c0_178 = arith.constant 0 : index
    %143 = vector.load %arg10[%c0_175, %c0_176, %c0_177, %c0_178] : memref<2x2x8x128xf32, #tpu.memory_space<vmem>>, vector<1x1x8x128xf32>
    %144 = vector.shape_cast %143 : vector<1x1x8x128xf32> to vector<8x128xf32>
    %145 = vector.shape_cast %142 : vector<8x128xf32> to vector<1x1x8x128xf32>
    tpu.vector_store %arg10[%c0_175, %c0_176, %c0_177, %c0_178], %145 {strides = array<i32>} : memref<2x2x8x128xf32, #tpu.memory_space<vmem>>, vector<1x1x8x128xf32>,
    %cst_179 = arith.constant 0.000000e+00 : f32
    %146 = vector.broadcast %cst_179 : f32 to vector<8x128xf32>
    %147 = arith.subf %146, %116 : vector<8x128xf32>
    %cst_180 = arith.constant 0.000000e+00 : f32
    %148 = vector.broadcast %cst_180 : f32 to vector<8x128xf32>
    %149 = arith.maximumf %147, %148 : vector<8x128xf32>
    %c0_181 = arith.constant 0 : index
    %c1_182 = arith.constant 1 : index
    %c0_183 = arith.constant 0 : index
    %c0_184 = arith.constant 0 : index
    %150 = vector.load %arg10[%c0_181, %c1_182, %c0_183, %c0_184] : memref<2x2x8x128xf32, #tpu.memory_space<vmem>>, vector<1x1x8x128xf32>
    %151 = vector.shape_cast %150 : vector<1x1x8x128xf32> to vector<8x128xf32>
    %152 = vector.shape_cast %149 : vector<8x128xf32> to vector<1x1x8x128xf32>
    tpu.vector_store %arg10[%c0_181, %c1_182, %c0_183, %c0_184], %152 {strides = array<i32>} : memref<2x2x8x128xf32, #tpu.memory_space<vmem>>, vector<1x1x8x128xf32>,
    %c0_i32_185 = arith.constant 0 : i32
    %c2_i32 = arith.constant 2 : i32
    %c0_i32_186 = arith.constant 0 : i32
    %c0_i32_187 = arith.constant 0 : i32
    %c0_i32_188 = arith.constant 0 : i32
    %c0_i32_189 = arith.constant 0 : i32
    %153 = tpu.memref_slice %arg9[%c0_i32_185, %c0_i32_187, %c0_i32_188, %c0_i32_189] : memref<2x2x8x128xf32, #tpu.memory_space<vmem>> -> memref<1x2x8x128xf32, #tpu.memory_space<vmem>>
    %154 = tpu.memref_squeeze %153 : memref<1x2x8x128xf32, #tpu.memory_space<vmem>> -> memref<2x8x128xf32, #tpu.memory_space<vmem>>
    %c0_i32_190 = arith.constant 0 : i32
    %c0_i32_191 = arith.constant 0 : i32
    %c0_i32_192 = arith.constant 0 : i32
    %155 = tpu.memref_slice %arg4[%arg0, %c2_i32, %c0_i32_190, %c0_i32_191, %c0_i32_192] : memref<1x6x2x8x128xf32, #tpu.memory_space<any>> -> memref<1x1x2x8x128xf32, #tpu.memory_space<any>>
    %156 = tpu.memref_squeeze %155 : memref<1x1x2x8x128xf32, #tpu.memory_space<any>> -> memref<2x8x128xf32, #tpu.memory_space<any>>
    %157 = tpu.memref_slice %arg11[%c0_i32_186] : memref<2x!tpu.dma_semaphore, #tpu.memory_space<semaphore_mem>> -> memref<1x!tpu.dma_semaphore, #tpu.memory_space<semaphore_mem>>
    %158 = tpu.memref_squeeze %157 : memref<1x!tpu.dma_semaphore, #tpu.memory_space<semaphore_mem>> -> memref<!tpu.dma_semaphore, #tpu.memory_space<semaphore_mem>>
    tpu.enqueue_dma source(%154 : memref<2x8x128xf32, #tpu.memory_space<vmem>>) target(%156 : memref<2x8x128xf32, #tpu.memory_space<any>>) target_semaphore(%158 : memref<!tpu.dma_semaphore, #tpu.memory_space<semaphore_mem>>)
    %c0_i32_193 = arith.constant 0 : i32
    %c2_i32_194 = arith.constant 2 : i32
    %c0_i32_195 = arith.constant 0 : i32
    %c0_i32_196 = arith.constant 0 : i32
    %c0_i32_197 = arith.constant 0 : i32
    %c0_i32_198 = arith.constant 0 : i32
    %159 = tpu.memref_slice %arg10[%c0_i32_193, %c0_i32_196, %c0_i32_197, %c0_i32_198] : memref<2x2x8x128xf32, #tpu.memory_space<vmem>> -> memref<1x2x8x128xf32, #tpu.memory_space<vmem>>
    %160 = tpu.memref_squeeze %159 : memref<1x2x8x128xf32, #tpu.memory_space<vmem>> -> memref<2x8x128xf32, #tpu.memory_space<vmem>>
    %c0_i32_199 = arith.constant 0 : i32
    %c0_i32_200 = arith.constant 0 : i32
    %c0_i32_201 = arith.constant 0 : i32
    %161 = tpu.memref_slice %arg5[%arg0, %c2_i32_194, %c0_i32_199, %c0_i32_200, %c0_i32_201] : memref<1x6x2x8x128xf32, #tpu.memory_space<any>> -> memref<1x1x2x8x128xf32, #tpu.memory_space<any>>
    %162 = tpu.memref_squeeze %161 : memref<1x1x2x8x128xf32, #tpu.memory_space<any>> -> memref<2x8x128xf32, #tpu.memory_space<any>>
    %163 = tpu.memref_slice %arg12[%c0_i32_195] : memref<2x!tpu.dma_semaphore, #tpu.memory_space<semaphore_mem>> -> memref<1x!tpu.dma_semaphore, #tpu.memory_space<semaphore_mem>>
    %164 = tpu.memref_squeeze %163 : memref<1x!tpu.dma_semaphore, #tpu.memory_space<semaphore_mem>> -> memref<!tpu.dma_semaphore, #tpu.memory_space<semaphore_mem>>
    tpu.enqueue_dma source(%160 : memref<2x8x128xf32, #tpu.memory_space<vmem>>) target(%162 : memref<2x8x128xf32, #tpu.memory_space<any>>) target_semaphore(%164 : memref<!tpu.dma_semaphore, #tpu.memory_space<semaphore_mem>>)
    %c0_202 = arith.constant 0 : index
    %c0_203 = arith.constant 0 : index
    %165 = vector.load %arg7[%c0_202, %c0_203] : memref<8x128xf32, #tpu.memory_space<vmem>>, vector<8x128xf32>
    tpu.vector_store %arg7[%c0_202, %c0_203], %112 {strides = array<i32>} : memref<8x128xf32, #tpu.memory_space<vmem>>, vector<8x128xf32>,
    %c0_204 = arith.constant 0 : index
    %c0_205 = arith.constant 0 : index
    %166 = vector.load %arg8[%c0_204, %c0_205] : memref<8x128xf32, #tpu.memory_space<vmem>>, vector<8x128xf32>
    tpu.vector_store %arg8[%c0_204, %c0_205], %110 {strides = array<i32>} : memref<8x128xf32, #tpu.memory_space<vmem>>, vector<8x128xf32>,
    %c0_206 = arith.constant 0 : index
    %c0_207 = arith.constant 0 : index
    %167 = vector.load %arg6[%c0_206, %c0_207] : memref<8x128xf32, #tpu.memory_space<vmem>>, vector<8x128xf32>
    tpu.vector_store %arg6[%c0_206, %c0_207], %112 {strides = array<i32>} : memref<8x128xf32, #tpu.memory_space<vmem>>, vector<8x128xf32>,
    %c0_i32_208 = arith.constant 0 : i32
    %c0_209 = arith.constant 0 : index
    %c0_210 = arith.constant 0 : index
    %168 = vector.load %arg6[%c0_209, %c0_210] : memref<8x128xf32, #tpu.memory_space<vmem>>, vector<8x128xf32>
    %c0_211 = arith.constant 0 : index
    %c0_212 = arith.constant 0 : index
    %169 = vector.load %arg1[%c0_211, %c0_212] : memref<128x128xf32, #tpu.memory_space<vmem>>, vector<128x128xf32>
    %cst_213 = arith.constant dense<0.000000e+00> : vector<8x128xf32>
    %170 = tpu.matmul %168, %169, %cst_213 {dimension_numbers = #tpu.dot_dimension_numbers<[1], [0], [0], [1], [0, 0, 1, 1], [], []>} : vector<8x128xf32>, vector<128x128xf32>, vector<8x128xf32> -> vector<8x128xf32>
    %c0_214 = arith.constant 0 : index
    %c0_215 = arith.constant 0 : index
    %171 = vector.load %arg1[%c0_214, %c0_215] : memref<128x128xf32, #tpu.memory_space<vmem>>, vector<128x128xf32>
    %cst_216 = arith.constant dense<0.000000e+00> : vector<8x128xf32>
    %172 = tpu.matmul %170, %171, %cst_216 {dimension_numbers = #tpu.dot_dimension_numbers<[1], [1], [0], [0], [0, 0, 1, 0], [], []>} : vector<8x128xf32>, vector<128x128xf32>, vector<8x128xf32> -> vector<8x128xf32>
    %c0_217 = arith.constant 0 : index
    %c0_218 = arith.constant 0 : index
    %173 = vector.load %arg6[%c0_217, %c0_218] : memref<8x128xf32, #tpu.memory_space<vmem>>, vector<8x128xf32>
    tpu.vector_store %arg6[%c0_217, %c0_218], %172 {strides = array<i32>} : memref<8x128xf32, #tpu.memory_space<vmem>>, vector<8x128xf32>,
    %c1_i32_219 = arith.constant 1 : i32
    %c0_220 = arith.constant 0 : index
    %c0_221 = arith.constant 0 : index
    %174 = vector.load %arg6[%c0_220, %c0_221] : memref<8x128xf32, #tpu.memory_space<vmem>>, vector<8x128xf32>
    %c0_222 = arith.constant 0 : index
    %c0_223 = arith.constant 0 : index
    %175 = vector.load %arg1[%c0_222, %c0_223] : memref<128x128xf32, #tpu.memory_space<vmem>>, vector<128x128xf32>
    %cst_224 = arith.constant dense<0.000000e+00> : vector<8x128xf32>
    %176 = tpu.matmul %174, %175, %cst_224 {dimension_numbers = #tpu.dot_dimension_numbers<[1], [0], [0], [1], [0, 0, 1, 1], [], []>} : vector<8x128xf32>, vector<128x128xf32>, vector<8x128xf32> -> vector<8x128xf32>
    %c0_225 = arith.constant 0 : index
    %c0_226 = arith.constant 0 : index
    %177 = vector.load %arg1[%c0_225, %c0_226] : memref<128x128xf32, #tpu.memory_space<vmem>>, vector<128x128xf32>
    %cst_227 = arith.constant dense<0.000000e+00> : vector<8x128xf32>
    %178 = tpu.matmul %176, %177, %cst_227 {dimension_numbers = #tpu.dot_dimension_numbers<[1], [1], [0], [0], [0, 0, 1, 0], [], []>} : vector<8x128xf32>, vector<128x128xf32>, vector<8x128xf32> -> vector<8x128xf32>
    %c0_228 = arith.constant 0 : index
    %c0_229 = arith.constant 0 : index
    %179 = vector.load %arg6[%c0_228, %c0_229] : memref<8x128xf32, #tpu.memory_space<vmem>>, vector<8x128xf32>
    tpu.vector_store %arg6[%c0_228, %c0_229], %178 {strides = array<i32>} : memref<8x128xf32, #tpu.memory_space<vmem>>, vector<8x128xf32>,
    %c2_i32_230 = arith.constant 2 : i32
    %c0_231 = arith.constant 0 : index
    %c0_232 = arith.constant 0 : index
    %180 = vector.load %arg6[%c0_231, %c0_232] : memref<8x128xf32, #tpu.memory_space<vmem>>, vector<8x128xf32>
    %c0_233 = arith.constant 0 : index
    %c0_234 = arith.constant 0 : index
    %181 = vector.load %arg1[%c0_233, %c0_234] : memref<128x128xf32, #tpu.memory_space<vmem>>, vector<128x128xf32>
    %cst_235 = arith.constant dense<0.000000e+00> : vector<8x128xf32>
    %182 = tpu.matmul %180, %181, %cst_235 {dimension_numbers = #tpu.dot_dimension_numbers<[1], [0], [0], [1], [0, 0, 1, 1], [], []>} : vector<8x128xf32>, vector<128x128xf32>, vector<8x128xf32> -> vector<8x128xf32>
    %c0_236 = arith.constant 0 : index
    %c0_237 = arith.constant 0 : index
    %183 = vector.load %arg1[%c0_236, %c0_237] : memref<128x128xf32, #tpu.memory_space<vmem>>, vector<128x128xf32>
    %cst_238 = arith.constant dense<0.000000e+00> : vector<8x128xf32>
    %184 = tpu.matmul %182, %183, %cst_238 {dimension_numbers = #tpu.dot_dimension_numbers<[1], [1], [0], [0], [0, 0, 1, 0], [], []>} : vector<8x128xf32>, vector<128x128xf32>, vector<8x128xf32> -> vector<8x128xf32>
    %c0_239 = arith.constant 0 : index
    %c0_240 = arith.constant 0 : index
    %185 = vector.load %arg6[%c0_239, %c0_240] : memref<8x128xf32, #tpu.memory_space<vmem>>, vector<8x128xf32>
    tpu.vector_store %arg6[%c0_239, %c0_240], %184 {strides = array<i32>} : memref<8x128xf32, #tpu.memory_space<vmem>>, vector<8x128xf32>,
    %c0_241 = arith.constant 0 : index
    %c0_242 = arith.constant 0 : index
    %186 = vector.load %arg6[%c0_241, %c0_242] : memref<8x128xf32, #tpu.memory_space<vmem>>, vector<8x128xf32>
    %c0_243 = arith.constant 0 : index
    %c0_244 = arith.constant 0 : index
    %187 = vector.load %arg1[%c0_243, %c0_244] : memref<128x128xf32, #tpu.memory_space<vmem>>, vector<128x128xf32>
    %cst_245 = arith.constant dense<0.000000e+00> : vector<8x128xf32>
    %188 = tpu.matmul %186, %187, %cst_245 {dimension_numbers = #tpu.dot_dimension_numbers<[1], [0], [0], [1], [0, 0, 1, 1], [], []>} : vector<8x128xf32>, vector<128x128xf32>, vector<8x128xf32> -> vector<8x128xf32>
    %c0_246 = arith.constant 0 : index
    %c0_247 = arith.constant 0 : index
    %189 = vector.load %arg1[%c0_246, %c0_247] : memref<128x128xf32, #tpu.memory_space<vmem>>, vector<128x128xf32>
    %cst_248 = arith.constant dense<0.000000e+00> : vector<8x128xf32>
    %190 = tpu.matmul %188, %189, %cst_248 {dimension_numbers = #tpu.dot_dimension_numbers<[1], [1], [0], [0], [0, 0, 1, 0], [], []>} : vector<8x128xf32>, vector<128x128xf32>, vector<8x128xf32> -> vector<8x128xf32>
    %c0_249 = arith.constant 0 : index
    %c0_250 = arith.constant 0 : index
    %191 = vector.load %arg7[%c0_249, %c0_250] : memref<8x128xf32, #tpu.memory_space<vmem>>, vector<8x128xf32>
    %192 = arith.subf %191, %190 : vector<8x128xf32>
    %c0_251 = arith.constant 0 : index
    %c0_252 = arith.constant 0 : index
    %193 = vector.load %arg8[%c0_251, %c0_252] : memref<8x128xf32, #tpu.memory_space<vmem>>, vector<8x128xf32>
    %194 = arith.subf %193, %188 : vector<8x128xf32>
    %c1_i32_253 = arith.constant 1 : i32
    %c1_i32_254 = arith.constant 1 : i32
    %c1_i32_255 = arith.constant 1 : i32
    %c0_i32_256 = arith.constant 0 : i32
    %c0_i32_257 = arith.constant 0 : i32
    %c0_i32_258 = arith.constant 0 : i32
    %195 = tpu.memref_slice %arg9[%c1_i32_253, %c0_i32_256, %c0_i32_257, %c0_i32_258] : memref<2x2x8x128xf32, #tpu.memory_space<vmem>> -> memref<1x2x8x128xf32, #tpu.memory_space<vmem>>
    %196 = tpu.memref_squeeze %195 : memref<1x2x8x128xf32, #tpu.memory_space<vmem>> -> memref<2x8x128xf32, #tpu.memory_space<vmem>>
    %c0_i32_259 = arith.constant 0 : i32
    %c0_i32_260 = arith.constant 0 : i32
    %c0_i32_261 = arith.constant 0 : i32
    %197 = tpu.memref_slice %arg4[%arg0, %c1_i32_254, %c0_i32_259, %c0_i32_260, %c0_i32_261] : memref<1x6x2x8x128xf32, #tpu.memory_space<any>> -> memref<1x1x2x8x128xf32, #tpu.memory_space<any>>
    %198 = tpu.memref_squeeze %197 : memref<1x1x2x8x128xf32, #tpu.memory_space<any>> -> memref<2x8x128xf32, #tpu.memory_space<any>>
    %199 = tpu.memref_slice %arg11[%c1_i32_255] : memref<2x!tpu.dma_semaphore, #tpu.memory_space<semaphore_mem>> -> memref<1x!tpu.dma_semaphore, #tpu.memory_space<semaphore_mem>>
    %200 = tpu.memref_squeeze %199 : memref<1x!tpu.dma_semaphore, #tpu.memory_space<semaphore_mem>> -> memref<!tpu.dma_semaphore, #tpu.memory_space<semaphore_mem>>
    tpu.wait_dma2 semaphore(%200 : memref<!tpu.dma_semaphore, #tpu.memory_space<semaphore_mem>>) src(%196 : memref<2x8x128xf32, #tpu.memory_space<vmem>>) dst(%198 : memref<2x8x128xf32, #tpu.memory_space<any>>)
    %c1_i32_262 = arith.constant 1 : i32
    %c1_i32_263 = arith.constant 1 : i32
    %c1_i32_264 = arith.constant 1 : i32
    %c0_i32_265 = arith.constant 0 : i32
    %c0_i32_266 = arith.constant 0 : i32
    %c0_i32_267 = arith.constant 0 : i32
    %201 = tpu.memref_slice %arg10[%c1_i32_262, %c0_i32_265, %c0_i32_266, %c0_i32_267] : memref<2x2x8x128xf32, #tpu.memory_space<vmem>> -> memref<1x2x8x128xf32, #tpu.memory_space<vmem>>
    %202 = tpu.memref_squeeze %201 : memref<1x2x8x128xf32, #tpu.memory_space<vmem>> -> memref<2x8x128xf32, #tpu.memory_space<vmem>>
    %c0_i32_268 = arith.constant 0 : i32
    %c0_i32_269 = arith.constant 0 : i32
    %c0_i32_270 = arith.constant 0 : i32
    %203 = tpu.memref_slice %arg5[%arg0, %c1_i32_263, %c0_i32_268, %c0_i32_269, %c0_i32_270] : memref<1x6x2x8x128xf32, #tpu.memory_space<any>> -> memref<1x1x2x8x128xf32, #tpu.memory_space<any>>
    %204 = tpu.memref_squeeze %203 : memref<1x1x2x8x128xf32, #tpu.memory_space<any>> -> memref<2x8x128xf32, #tpu.memory_space<any>>
    %205 = tpu.memref_slice %arg12[%c1_i32_264] : memref<2x!tpu.dma_semaphore, #tpu.memory_space<semaphore_mem>> -> memref<1x!tpu.dma_semaphore, #tpu.memory_space<semaphore_mem>>
    %206 = tpu.memref_squeeze %205 : memref<1x!tpu.dma_semaphore, #tpu.memory_space<semaphore_mem>> -> memref<!tpu.dma_semaphore, #tpu.memory_space<semaphore_mem>>
    tpu.wait_dma2 semaphore(%206 : memref<!tpu.dma_semaphore, #tpu.memory_space<semaphore_mem>>) src(%202 : memref<2x8x128xf32, #tpu.memory_space<vmem>>) dst(%204 : memref<2x8x128xf32, #tpu.memory_space<any>>)
    %cst_271 = arith.constant 0.000000e+00 : f32
    %207 = vector.broadcast %cst_271 : f32 to vector<8x128xf32>
    %208 = arith.maximumf %192, %207 : vector<8x128xf32>
    %c1_272 = arith.constant 1 : index
    %c0_273 = arith.constant 0 : index
    %c0_274 = arith.constant 0 : index
    %c0_275 = arith.constant 0 : index
    %209 = vector.load %arg9[%c1_272, %c0_273, %c0_274, %c0_275] : memref<2x2x8x128xf32, #tpu.memory_space<vmem>>, vector<1x1x8x128xf32>
    %210 = vector.shape_cast %209 : vector<1x1x8x128xf32> to vector<8x128xf32>
    %211 = vector.shape_cast %208 : vector<8x128xf32> to vector<1x1x8x128xf32>
    tpu.vector_store %arg9[%c1_272, %c0_273, %c0_274, %c0_275], %211 {strides = array<i32>} : memref<2x2x8x128xf32, #tpu.memory_space<vmem>>, vector<1x1x8x128xf32>,
    %cst_276 = arith.constant 0.000000e+00 : f32
    %212 = vector.broadcast %cst_276 : f32 to vector<8x128xf32>
    %213 = arith.subf %212, %192 : vector<8x128xf32>
    %cst_277 = arith.constant 0.000000e+00 : f32
    %214 = vector.broadcast %cst_277 : f32 to vector<8x128xf32>
    %215 = arith.maximumf %213, %214 : vector<8x128xf32>
    %c1_278 = arith.constant 1 : index
    %c1_279 = arith.constant 1 : index
    %c0_280 = arith.constant 0 : index
    %c0_281 = arith.constant 0 : index
    %216 = vector.load %arg9[%c1_278, %c1_279, %c0_280, %c0_281] : memref<2x2x8x128xf32, #tpu.memory_space<vmem>>, vector<1x1x8x128xf32>
    %217 = vector.shape_cast %216 : vector<1x1x8x128xf32> to vector<8x128xf32>
    %218 = vector.shape_cast %215 : vector<8x128xf32> to vector<1x1x8x128xf32>
    tpu.vector_store %arg9[%c1_278, %c1_279, %c0_280, %c0_281], %218 {strides = array<i32>} : memref<2x2x8x128xf32, #tpu.memory_space<vmem>>, vector<1x1x8x128xf32>,
    %cst_282 = arith.constant 0.000000e+00 : f32
    %219 = vector.broadcast %cst_282 : f32 to vector<8x128xf32>
    %220 = arith.maximumf %194, %219 : vector<8x128xf32>
    %c1_283 = arith.constant 1 : index
    %c0_284 = arith.constant 0 : index
    %c0_285 = arith.constant 0 : index
    %c0_286 = arith.constant 0 : index
    %221 = vector.load %arg10[%c1_283, %c0_284, %c0_285, %c0_286] : memref<2x2x8x128xf32, #tpu.memory_space<vmem>>, vector<1x1x8x128xf32>
    %222 = vector.shape_cast %221 : vector<1x1x8x128xf32> to vector<8x128xf32>
    %223 = vector.shape_cast %220 : vector<8x128xf32> to vector<1x1x8x128xf32>
    tpu.vector_store %arg10[%c1_283, %c0_284, %c0_285, %c0_286], %223 {strides = array<i32>} : memref<2x2x8x128xf32, #tpu.memory_space<vmem>>, vector<1x1x8x128xf32>,
    %cst_287 = arith.constant 0.000000e+00 : f32
    %224 = vector.broadcast %cst_287 : f32 to vector<8x128xf32>
    %225 = arith.subf %224, %194 : vector<8x128xf32>
    %cst_288 = arith.constant 0.000000e+00 : f32
    %226 = vector.broadcast %cst_288 : f32 to vector<8x128xf32>
    %227 = arith.maximumf %225, %226 : vector<8x128xf32>
    %c1_289 = arith.constant 1 : index
    %c1_290 = arith.constant 1 : index
    %c0_291 = arith.constant 0 : index
    %c0_292 = arith.constant 0 : index
    %228 = vector.load %arg10[%c1_289, %c1_290, %c0_291, %c0_292] : memref<2x2x8x128xf32, #tpu.memory_space<vmem>>, vector<1x1x8x128xf32>
    %229 = vector.shape_cast %228 : vector<1x1x8x128xf32> to vector<8x128xf32>
    %230 = vector.shape_cast %227 : vector<8x128xf32> to vector<1x1x8x128xf32>
    tpu.vector_store %arg10[%c1_289, %c1_290, %c0_291, %c0_292], %230 {strides = array<i32>} : memref<2x2x8x128xf32, #tpu.memory_space<vmem>>, vector<1x1x8x128xf32>,
    %c1_i32_293 = arith.constant 1 : i32
    %c3_i32 = arith.constant 3 : i32
    %c1_i32_294 = arith.constant 1 : i32
    %c0_i32_295 = arith.constant 0 : i32
    %c0_i32_296 = arith.constant 0 : i32
    %c0_i32_297 = arith.constant 0 : i32
    %231 = tpu.memref_slice %arg9[%c1_i32_293, %c0_i32_295, %c0_i32_296, %c0_i32_297] : memref<2x2x8x128xf32, #tpu.memory_space<vmem>> -> memref<1x2x8x128xf32, #tpu.memory_space<vmem>>
    %232 = tpu.memref_squeeze %231 : memref<1x2x8x128xf32, #tpu.memory_space<vmem>> -> memref<2x8x128xf32, #tpu.memory_space<vmem>>
    %c0_i32_298 = arith.constant 0 : i32
    %c0_i32_299 = arith.constant 0 : i32
    %c0_i32_300 = arith.constant 0 : i32
    %233 = tpu.memref_slice %arg4[%arg0, %c3_i32, %c0_i32_298, %c0_i32_299, %c0_i32_300] : memref<1x6x2x8x128xf32, #tpu.memory_space<any>> -> memref<1x1x2x8x128xf32, #tpu.memory_space<any>>
    %234 = tpu.memref_squeeze %233 : memref<1x1x2x8x128xf32, #tpu.memory_space<any>> -> memref<2x8x128xf32, #tpu.memory_space<any>>
    %235 = tpu.memref_slice %arg11[%c1_i32_294] : memref<2x!tpu.dma_semaphore, #tpu.memory_space<semaphore_mem>> -> memref<1x!tpu.dma_semaphore, #tpu.memory_space<semaphore_mem>>
    %236 = tpu.memref_squeeze %235 : memref<1x!tpu.dma_semaphore, #tpu.memory_space<semaphore_mem>> -> memref<!tpu.dma_semaphore, #tpu.memory_space<semaphore_mem>>
    tpu.enqueue_dma source(%232 : memref<2x8x128xf32, #tpu.memory_space<vmem>>) target(%234 : memref<2x8x128xf32, #tpu.memory_space<any>>) target_semaphore(%236 : memref<!tpu.dma_semaphore, #tpu.memory_space<semaphore_mem>>)
    %c1_i32_301 = arith.constant 1 : i32
    %c3_i32_302 = arith.constant 3 : i32
    %c1_i32_303 = arith.constant 1 : i32
    %c0_i32_304 = arith.constant 0 : i32
    %c0_i32_305 = arith.constant 0 : i32
    %c0_i32_306 = arith.constant 0 : i32
    %237 = tpu.memref_slice %arg10[%c1_i32_301, %c0_i32_304, %c0_i32_305, %c0_i32_306] : memref<2x2x8x128xf32, #tpu.memory_space<vmem>> -> memref<1x2x8x128xf32, #tpu.memory_space<vmem>>
    %238 = tpu.memref_squeeze %237 : memref<1x2x8x128xf32, #tpu.memory_space<vmem>> -> memref<2x8x128xf32, #tpu.memory_space<vmem>>
    %c0_i32_307 = arith.constant 0 : i32
    %c0_i32_308 = arith.constant 0 : i32
    %c0_i32_309 = arith.constant 0 : i32
    %239 = tpu.memref_slice %arg5[%arg0, %c3_i32_302, %c0_i32_307, %c0_i32_308, %c0_i32_309] : memref<1x6x2x8x128xf32, #tpu.memory_space<any>> -> memref<1x1x2x8x128xf32, #tpu.memory_space<any>>
    %240 = tpu.memref_squeeze %239 : memref<1x1x2x8x128xf32, #tpu.memory_space<any>> -> memref<2x8x128xf32, #tpu.memory_space<any>>
    %241 = tpu.memref_slice %arg12[%c1_i32_303] : memref<2x!tpu.dma_semaphore, #tpu.memory_space<semaphore_mem>> -> memref<1x!tpu.dma_semaphore, #tpu.memory_space<semaphore_mem>>
    %242 = tpu.memref_squeeze %241 : memref<1x!tpu.dma_semaphore, #tpu.memory_space<semaphore_mem>> -> memref<!tpu.dma_semaphore, #tpu.memory_space<semaphore_mem>>
    tpu.enqueue_dma source(%238 : memref<2x8x128xf32, #tpu.memory_space<vmem>>) target(%240 : memref<2x8x128xf32, #tpu.memory_space<any>>) target_semaphore(%242 : memref<!tpu.dma_semaphore, #tpu.memory_space<semaphore_mem>>)
    %c0_310 = arith.constant 0 : index
    %c0_311 = arith.constant 0 : index
    %243 = vector.load %arg7[%c0_310, %c0_311] : memref<8x128xf32, #tpu.memory_space<vmem>>, vector<8x128xf32>
    tpu.vector_store %arg7[%c0_310, %c0_311], %190 {strides = array<i32>} : memref<8x128xf32, #tpu.memory_space<vmem>>, vector<8x128xf32>,
    %c0_312 = arith.constant 0 : index
    %c0_313 = arith.constant 0 : index
    %244 = vector.load %arg8[%c0_312, %c0_313] : memref<8x128xf32, #tpu.memory_space<vmem>>, vector<8x128xf32>
    tpu.vector_store %arg8[%c0_312, %c0_313], %188 {strides = array<i32>} : memref<8x128xf32, #tpu.memory_space<vmem>>, vector<8x128xf32>,
    %c0_314 = arith.constant 0 : index
    %c0_315 = arith.constant 0 : index
    %245 = vector.load %arg6[%c0_314, %c0_315] : memref<8x128xf32, #tpu.memory_space<vmem>>, vector<8x128xf32>
    tpu.vector_store %arg6[%c0_314, %c0_315], %190 {strides = array<i32>} : memref<8x128xf32, #tpu.memory_space<vmem>>, vector<8x128xf32>,
    %c0_i32_316 = arith.constant 0 : i32
    %c0_317 = arith.constant 0 : index
    %c0_318 = arith.constant 0 : index
    %246 = vector.load %arg6[%c0_317, %c0_318] : memref<8x128xf32, #tpu.memory_space<vmem>>, vector<8x128xf32>
    %c0_319 = arith.constant 0 : index
    %c0_320 = arith.constant 0 : index
    %247 = vector.load %arg1[%c0_319, %c0_320] : memref<128x128xf32, #tpu.memory_space<vmem>>, vector<128x128xf32>
    %cst_321 = arith.constant dense<0.000000e+00> : vector<8x128xf32>
    %248 = tpu.matmul %246, %247, %cst_321 {dimension_numbers = #tpu.dot_dimension_numbers<[1], [0], [0], [1], [0, 0, 1, 1], [], []>} : vector<8x128xf32>, vector<128x128xf32>, vector<8x128xf32> -> vector<8x128xf32>
    %c0_322 = arith.constant 0 : index
    %c0_323 = arith.constant 0 : index
    %249 = vector.load %arg1[%c0_322, %c0_323] : memref<128x128xf32, #tpu.memory_space<vmem>>, vector<128x128xf32>
    %cst_324 = arith.constant dense<0.000000e+00> : vector<8x128xf32>
    %250 = tpu.matmul %248, %249, %cst_324 {dimension_numbers = #tpu.dot_dimension_numbers<[1], [1], [0], [0], [0, 0, 1, 0], [], []>} : vector<8x128xf32>, vector<128x128xf32>, vector<8x128xf32> -> vector<8x128xf32>
    %c0_325 = arith.constant 0 : index
    %c0_326 = arith.constant 0 : index
    %251 = vector.load %arg6[%c0_325, %c0_326] : memref<8x128xf32, #tpu.memory_space<vmem>>, vector<8x128xf32>
    tpu.vector_store %arg6[%c0_325, %c0_326], %250 {strides = array<i32>} : memref<8x128xf32, #tpu.memory_space<vmem>>, vector<8x128xf32>,
    %c1_i32_327 = arith.constant 1 : i32
    %c0_328 = arith.constant 0 : index
    %c0_329 = arith.constant 0 : index
    %252 = vector.load %arg6[%c0_328, %c0_329] : memref<8x128xf32, #tpu.memory_space<vmem>>, vector<8x128xf32>
    %c0_330 = arith.constant 0 : index
    %c0_331 = arith.constant 0 : index
    %253 = vector.load %arg1[%c0_330, %c0_331] : memref<128x128xf32, #tpu.memory_space<vmem>>, vector<128x128xf32>
    %cst_332 = arith.constant dense<0.000000e+00> : vector<8x128xf32>
    %254 = tpu.matmul %252, %253, %cst_332 {dimension_numbers = #tpu.dot_dimension_numbers<[1], [0], [0], [1], [0, 0, 1, 1], [], []>} : vector<8x128xf32>, vector<128x128xf32>, vector<8x128xf32> -> vector<8x128xf32>
    %c0_333 = arith.constant 0 : index
    %c0_334 = arith.constant 0 : index
    %255 = vector.load %arg1[%c0_333, %c0_334] : memref<128x128xf32, #tpu.memory_space<vmem>>, vector<128x128xf32>
    %cst_335 = arith.constant dense<0.000000e+00> : vector<8x128xf32>
    %256 = tpu.matmul %254, %255, %cst_335 {dimension_numbers = #tpu.dot_dimension_numbers<[1], [1], [0], [0], [0, 0, 1, 0], [], []>} : vector<8x128xf32>, vector<128x128xf32>, vector<8x128xf32> -> vector<8x128xf32>
    %c0_336 = arith.constant 0 : index
    %c0_337 = arith.constant 0 : index
    %257 = vector.load %arg6[%c0_336, %c0_337] : memref<8x128xf32, #tpu.memory_space<vmem>>, vector<8x128xf32>
    tpu.vector_store %arg6[%c0_336, %c0_337], %256 {strides = array<i32>} : memref<8x128xf32, #tpu.memory_space<vmem>>, vector<8x128xf32>,
    %c2_i32_338 = arith.constant 2 : i32
    %c0_339 = arith.constant 0 : index
    %c0_340 = arith.constant 0 : index
    %258 = vector.load %arg6[%c0_339, %c0_340] : memref<8x128xf32, #tpu.memory_space<vmem>>, vector<8x128xf32>
    %c0_341 = arith.constant 0 : index
    %c0_342 = arith.constant 0 : index
    %259 = vector.load %arg1[%c0_341, %c0_342] : memref<128x128xf32, #tpu.memory_space<vmem>>, vector<128x128xf32>
    %cst_343 = arith.constant dense<0.000000e+00> : vector<8x128xf32>
    %260 = tpu.matmul %258, %259, %cst_343 {dimension_numbers = #tpu.dot_dimension_numbers<[1], [0], [0], [1], [0, 0, 1, 1], [], []>} : vector<8x128xf32>, vector<128x128xf32>, vector<8x128xf32> -> vector<8x128xf32>
    %c0_344 = arith.constant 0 : index
    %c0_345 = arith.constant 0 : index
    %261 = vector.load %arg1[%c0_344, %c0_345] : memref<128x128xf32, #tpu.memory_space<vmem>>, vector<128x128xf32>
    %cst_346 = arith.constant dense<0.000000e+00> : vector<8x128xf32>
    %262 = tpu.matmul %260, %261, %cst_346 {dimension_numbers = #tpu.dot_dimension_numbers<[1], [1], [0], [0], [0, 0, 1, 0], [], []>} : vector<8x128xf32>, vector<128x128xf32>, vector<8x128xf32> -> vector<8x128xf32>
    %c0_347 = arith.constant 0 : index
    %c0_348 = arith.constant 0 : index
    %263 = vector.load %arg6[%c0_347, %c0_348] : memref<8x128xf32, #tpu.memory_space<vmem>>, vector<8x128xf32>
    tpu.vector_store %arg6[%c0_347, %c0_348], %262 {strides = array<i32>} : memref<8x128xf32, #tpu.memory_space<vmem>>, vector<8x128xf32>,
    %c3_i32_349 = arith.constant 3 : i32
    %c0_350 = arith.constant 0 : index
    %c0_351 = arith.constant 0 : index
    %264 = vector.load %arg6[%c0_350, %c0_351] : memref<8x128xf32, #tpu.memory_space<vmem>>, vector<8x128xf32>
    %c0_352 = arith.constant 0 : index
    %c0_353 = arith.constant 0 : index
    %265 = vector.load %arg1[%c0_352, %c0_353] : memref<128x128xf32, #tpu.memory_space<vmem>>, vector<128x128xf32>
    %cst_354 = arith.constant dense<0.000000e+00> : vector<8x128xf32>
    %266 = tpu.matmul %264, %265, %cst_354 {dimension_numbers = #tpu.dot_dimension_numbers<[1], [0], [0], [1], [0, 0, 1, 1], [], []>} : vector<8x128xf32>, vector<128x128xf32>, vector<8x128xf32> -> vector<8x128xf32>
    %c0_355 = arith.constant 0 : index
    %c0_356 = arith.constant 0 : index
    %267 = vector.load %arg1[%c0_355, %c0_356] : memref<128x128xf32, #tpu.memory_space<vmem>>, vector<128x128xf32>
    %cst_357 = arith.constant dense<0.000000e+00> : vector<8x128xf32>
    %268 = tpu.matmul %266, %267, %cst_357 {dimension_numbers = #tpu.dot_dimension_numbers<[1], [1], [0], [0], [0, 0, 1, 0], [], []>} : vector<8x128xf32>, vector<128x128xf32>, vector<8x128xf32> -> vector<8x128xf32>
    %c0_358 = arith.constant 0 : index
    %c0_359 = arith.constant 0 : index
    %269 = vector.load %arg6[%c0_358, %c0_359] : memref<8x128xf32, #tpu.memory_space<vmem>>, vector<8x128xf32>
    tpu.vector_store %arg6[%c0_358, %c0_359], %268 {strides = array<i32>} : memref<8x128xf32, #tpu.memory_space<vmem>>, vector<8x128xf32>,
    %c4_i32 = arith.constant 4 : i32
    %c0_360 = arith.constant 0 : index
    %c0_361 = arith.constant 0 : index
    %270 = vector.load %arg6[%c0_360, %c0_361] : memref<8x128xf32, #tpu.memory_space<vmem>>, vector<8x128xf32>
    %c0_362 = arith.constant 0 : index
    %c0_363 = arith.constant 0 : index
    %271 = vector.load %arg1[%c0_362, %c0_363] : memref<128x128xf32, #tpu.memory_space<vmem>>, vector<128x128xf32>
    %cst_364 = arith.constant dense<0.000000e+00> : vector<8x128xf32>
    %272 = tpu.matmul %270, %271, %cst_364 {dimension_numbers = #tpu.dot_dimension_numbers<[1], [0], [0], [1], [0, 0, 1, 1], [], []>} : vector<8x128xf32>, vector<128x128xf32>, vector<8x128xf32> -> vector<8x128xf32>
    %c0_365 = arith.constant 0 : index
    %c0_366 = arith.constant 0 : index
    %273 = vector.load %arg1[%c0_365, %c0_366] : memref<128x128xf32, #tpu.memory_space<vmem>>, vector<128x128xf32>
    %cst_367 = arith.constant dense<0.000000e+00> : vector<8x128xf32>
    %274 = tpu.matmul %272, %273, %cst_367 {dimension_numbers = #tpu.dot_dimension_numbers<[1], [1], [0], [0], [0, 0, 1, 0], [], []>} : vector<8x128xf32>, vector<128x128xf32>, vector<8x128xf32> -> vector<8x128xf32>
    %c0_368 = arith.constant 0 : index
    %c0_369 = arith.constant 0 : index
    %275 = vector.load %arg6[%c0_368, %c0_369] : memref<8x128xf32, #tpu.memory_space<vmem>>, vector<8x128xf32>
    tpu.vector_store %arg6[%c0_368, %c0_369], %274 {strides = array<i32>} : memref<8x128xf32, #tpu.memory_space<vmem>>, vector<8x128xf32>,
    %c5_i32 = arith.constant 5 : i32
    %c0_370 = arith.constant 0 : index
    %c0_371 = arith.constant 0 : index
    %276 = vector.load %arg6[%c0_370, %c0_371] : memref<8x128xf32, #tpu.memory_space<vmem>>, vector<8x128xf32>
    %c0_372 = arith.constant 0 : index
    %c0_373 = arith.constant 0 : index
    %277 = vector.load %arg1[%c0_372, %c0_373] : memref<128x128xf32, #tpu.memory_space<vmem>>, vector<128x128xf32>
    %cst_374 = arith.constant dense<0.000000e+00> : vector<8x128xf32>
    %278 = tpu.matmul %276, %277, %cst_374 {dimension_numbers = #tpu.dot_dimension_numbers<[1], [0], [0], [1], [0, 0, 1, 1], [], []>} : vector<8x128xf32>, vector<128x128xf32>, vector<8x128xf32> -> vector<8x128xf32>
    %c0_375 = arith.constant 0 : index
    %c0_376 = arith.constant 0 : index
    %279 = vector.load %arg1[%c0_375, %c0_376] : memref<128x128xf32, #tpu.memory_space<vmem>>, vector<128x128xf32>
    %cst_377 = arith.constant dense<0.000000e+00> : vector<8x128xf32>
    %280 = tpu.matmul %278, %279, %cst_377 {dimension_numbers = #tpu.dot_dimension_numbers<[1], [1], [0], [0], [0, 0, 1, 0], [], []>} : vector<8x128xf32>, vector<128x128xf32>, vector<8x128xf32> -> vector<8x128xf32>
    %c0_378 = arith.constant 0 : index
    %c0_379 = arith.constant 0 : index
    %281 = vector.load %arg6[%c0_378, %c0_379] : memref<8x128xf32, #tpu.memory_space<vmem>>, vector<8x128xf32>
    tpu.vector_store %arg6[%c0_378, %c0_379], %280 {strides = array<i32>} : memref<8x128xf32, #tpu.memory_space<vmem>>, vector<8x128xf32>,
    %c6_i32 = arith.constant 6 : i32
    %c0_380 = arith.constant 0 : index
    %c0_381 = arith.constant 0 : index
    %282 = vector.load %arg6[%c0_380, %c0_381] : memref<8x128xf32, #tpu.memory_space<vmem>>, vector<8x128xf32>
    %c0_382 = arith.constant 0 : index
    %c0_383 = arith.constant 0 : index
    %283 = vector.load %arg1[%c0_382, %c0_383] : memref<128x128xf32, #tpu.memory_space<vmem>>, vector<128x128xf32>
    %cst_384 = arith.constant dense<0.000000e+00> : vector<8x128xf32>
    %284 = tpu.matmul %282, %283, %cst_384 {dimension_numbers = #tpu.dot_dimension_numbers<[1], [0], [0], [1], [0, 0, 1, 1], [], []>} : vector<8x128xf32>, vector<128x128xf32>, vector<8x128xf32> -> vector<8x128xf32>
    %c0_385 = arith.constant 0 : index
    %c0_386 = arith.constant 0 : index
    %285 = vector.load %arg1[%c0_385, %c0_386] : memref<128x128xf32, #tpu.memory_space<vmem>>, vector<128x128xf32>
    %cst_387 = arith.constant dense<0.000000e+00> : vector<8x128xf32>
    %286 = tpu.matmul %284, %285, %cst_387 {dimension_numbers = #tpu.dot_dimension_numbers<[1], [1], [0], [0], [0, 0, 1, 0], [], []>} : vector<8x128xf32>, vector<128x128xf32>, vector<8x128xf32> -> vector<8x128xf32>
    %c0_388 = arith.constant 0 : index
    %c0_389 = arith.constant 0 : index
    %287 = vector.load %arg6[%c0_388, %c0_389] : memref<8x128xf32, #tpu.memory_space<vmem>>, vector<8x128xf32>
    tpu.vector_store %arg6[%c0_388, %c0_389], %286 {strides = array<i32>} : memref<8x128xf32, #tpu.memory_space<vmem>>, vector<8x128xf32>,
    %c0_390 = arith.constant 0 : index
    %c0_391 = arith.constant 0 : index
    %288 = vector.load %arg6[%c0_390, %c0_391] : memref<8x128xf32, #tpu.memory_space<vmem>>, vector<8x128xf32>
    %c0_392 = arith.constant 0 : index
    %c0_393 = arith.constant 0 : index
    %289 = vector.load %arg1[%c0_392, %c0_393] : memref<128x128xf32, #tpu.memory_space<vmem>>, vector<128x128xf32>
    %cst_394 = arith.constant dense<0.000000e+00> : vector<8x128xf32>
    %290 = tpu.matmul %288, %289, %cst_394 {dimension_numbers = #tpu.dot_dimension_numbers<[1], [0], [0], [1], [0, 0, 1, 1], [], []>} : vector<8x128xf32>, vector<128x128xf32>, vector<8x128xf32> -> vector<8x128xf32>
    %c0_395 = arith.constant 0 : index
    %c0_396 = arith.constant 0 : index
    %291 = vector.load %arg1[%c0_395, %c0_396] : memref<128x128xf32, #tpu.memory_space<vmem>>, vector<128x128xf32>
    %cst_397 = arith.constant dense<0.000000e+00> : vector<8x128xf32>
    %292 = tpu.matmul %290, %291, %cst_397 {dimension_numbers = #tpu.dot_dimension_numbers<[1], [1], [0], [0], [0, 0, 1, 0], [], []>} : vector<8x128xf32>, vector<128x128xf32>, vector<8x128xf32> -> vector<8x128xf32>
    %c0_398 = arith.constant 0 : index
    %c0_399 = arith.constant 0 : index
    %293 = vector.load %arg7[%c0_398, %c0_399] : memref<8x128xf32, #tpu.memory_space<vmem>>, vector<8x128xf32>
    %294 = arith.subf %293, %292 : vector<8x128xf32>
    %c0_400 = arith.constant 0 : index
    %c0_401 = arith.constant 0 : index
    %295 = vector.load %arg8[%c0_400, %c0_401] : memref<8x128xf32, #tpu.memory_space<vmem>>, vector<8x128xf32>
    %296 = arith.subf %295, %290 : vector<8x128xf32>
    %c0_i32_402 = arith.constant 0 : i32
    %c2_i32_403 = arith.constant 2 : i32
    %c0_i32_404 = arith.constant 0 : i32
    %c0_i32_405 = arith.constant 0 : i32
    %c0_i32_406 = arith.constant 0 : i32
    %c0_i32_407 = arith.constant 0 : i32
    %297 = tpu.memref_slice %arg9[%c0_i32_402, %c0_i32_405, %c0_i32_406, %c0_i32_407] : memref<2x2x8x128xf32, #tpu.memory_space<vmem>> -> memref<1x2x8x128xf32, #tpu.memory_space<vmem>>
    %298 = tpu.memref_squeeze %297 : memref<1x2x8x128xf32, #tpu.memory_space<vmem>> -> memref<2x8x128xf32, #tpu.memory_space<vmem>>
    %c0_i32_408 = arith.constant 0 : i32
    %c0_i32_409 = arith.constant 0 : i32
    %c0_i32_410 = arith.constant 0 : i32
    %299 = tpu.memref_slice %arg4[%arg0, %c2_i32_403, %c0_i32_408, %c0_i32_409, %c0_i32_410] : memref<1x6x2x8x128xf32, #tpu.memory_space<any>> -> memref<1x1x2x8x128xf32, #tpu.memory_space<any>>
    %300 = tpu.memref_squeeze %299 : memref<1x1x2x8x128xf32, #tpu.memory_space<any>> -> memref<2x8x128xf32, #tpu.memory_space<any>>
    %301 = tpu.memref_slice %arg11[%c0_i32_404] : memref<2x!tpu.dma_semaphore, #tpu.memory_space<semaphore_mem>> -> memref<1x!tpu.dma_semaphore, #tpu.memory_space<semaphore_mem>>
    %302 = tpu.memref_squeeze %301 : memref<1x!tpu.dma_semaphore, #tpu.memory_space<semaphore_mem>> -> memref<!tpu.dma_semaphore, #tpu.memory_space<semaphore_mem>>
    tpu.wait_dma2 semaphore(%302 : memref<!tpu.dma_semaphore, #tpu.memory_space<semaphore_mem>>) src(%298 : memref<2x8x128xf32, #tpu.memory_space<vmem>>) dst(%300 : memref<2x8x128xf32, #tpu.memory_space<any>>)
    %c0_i32_411 = arith.constant 0 : i32
    %c2_i32_412 = arith.constant 2 : i32
    %c0_i32_413 = arith.constant 0 : i32
    %c0_i32_414 = arith.constant 0 : i32
    %c0_i32_415 = arith.constant 0 : i32
    %c0_i32_416 = arith.constant 0 : i32
    %303 = tpu.memref_slice %arg10[%c0_i32_411, %c0_i32_414, %c0_i32_415, %c0_i32_416] : memref<2x2x8x128xf32, #tpu.memory_space<vmem>> -> memref<1x2x8x128xf32, #tpu.memory_space<vmem>>
    %304 = tpu.memref_squeeze %303 : memref<1x2x8x128xf32, #tpu.memory_space<vmem>> -> memref<2x8x128xf32, #tpu.memory_space<vmem>>
    %c0_i32_417 = arith.constant 0 : i32
    %c0_i32_418 = arith.constant 0 : i32
    %c0_i32_419 = arith.constant 0 : i32
    %305 = tpu.memref_slice %arg5[%arg0, %c2_i32_412, %c0_i32_417, %c0_i32_418, %c0_i32_419] : memref<1x6x2x8x128xf32, #tpu.memory_space<any>> -> memref<1x1x2x8x128xf32, #tpu.memory_space<any>>
    %306 = tpu.memref_squeeze %305 : memref<1x1x2x8x128xf32, #tpu.memory_space<any>> -> memref<2x8x128xf32, #tpu.memory_space<any>>
    %307 = tpu.memref_slice %arg12[%c0_i32_413] : memref<2x!tpu.dma_semaphore, #tpu.memory_space<semaphore_mem>> -> memref<1x!tpu.dma_semaphore, #tpu.memory_space<semaphore_mem>>
    %308 = tpu.memref_squeeze %307 : memref<1x!tpu.dma_semaphore, #tpu.memory_space<semaphore_mem>> -> memref<!tpu.dma_semaphore, #tpu.memory_space<semaphore_mem>>
    tpu.wait_dma2 semaphore(%308 : memref<!tpu.dma_semaphore, #tpu.memory_space<semaphore_mem>>) src(%304 : memref<2x8x128xf32, #tpu.memory_space<vmem>>) dst(%306 : memref<2x8x128xf32, #tpu.memory_space<any>>)
    %cst_420 = arith.constant 0.000000e+00 : f32
    %309 = vector.broadcast %cst_420 : f32 to vector<8x128xf32>
    %310 = arith.maximumf %294, %309 : vector<8x128xf32>
    %c0_421 = arith.constant 0 : index
    %c0_422 = arith.constant 0 : index
    %c0_423 = arith.constant 0 : index
    %c0_424 = arith.constant 0 : index
    %311 = vector.load %arg9[%c0_421, %c0_422, %c0_423, %c0_424] : memref<2x2x8x128xf32, #tpu.memory_space<vmem>>, vector<1x1x8x128xf32>
    %312 = vector.shape_cast %311 : vector<1x1x8x128xf32> to vector<8x128xf32>
    %313 = vector.shape_cast %310 : vector<8x128xf32> to vector<1x1x8x128xf32>
    tpu.vector_store %arg9[%c0_421, %c0_422, %c0_423, %c0_424], %313 {strides = array<i32>} : memref<2x2x8x128xf32, #tpu.memory_space<vmem>>, vector<1x1x8x128xf32>,
    %cst_425 = arith.constant 0.000000e+00 : f32
    %314 = vector.broadcast %cst_425 : f32 to vector<8x128xf32>
    %315 = arith.subf %314, %294 : vector<8x128xf32>
    %cst_426 = arith.constant 0.000000e+00 : f32
    %316 = vector.broadcast %cst_426 : f32 to vector<8x128xf32>
    %317 = arith.maximumf %315, %316 : vector<8x128xf32>
    %c0_427 = arith.constant 0 : index
    %c1_428 = arith.constant 1 : index
    %c0_429 = arith.constant 0 : index
    %c0_430 = arith.constant 0 : index
    %318 = vector.load %arg9[%c0_427, %c1_428, %c0_429, %c0_430] : memref<2x2x8x128xf32, #tpu.memory_space<vmem>>, vector<1x1x8x128xf32>
    %319 = vector.shape_cast %318 : vector<1x1x8x128xf32> to vector<8x128xf32>
    %320 = vector.shape_cast %317 : vector<8x128xf32> to vector<1x1x8x128xf32>
    tpu.vector_store %arg9[%c0_427, %c1_428, %c0_429, %c0_430], %320 {strides = array<i32>} : memref<2x2x8x128xf32, #tpu.memory_space<vmem>>, vector<1x1x8x128xf32>,
    %cst_431 = arith.constant 0.000000e+00 : f32
    %321 = vector.broadcast %cst_431 : f32 to vector<8x128xf32>
    %322 = arith.maximumf %296, %321 : vector<8x128xf32>
    %c0_432 = arith.constant 0 : index
    %c0_433 = arith.constant 0 : index
    %c0_434 = arith.constant 0 : index
    %c0_435 = arith.constant 0 : index
    %323 = vector.load %arg10[%c0_432, %c0_433, %c0_434, %c0_435] : memref<2x2x8x128xf32, #tpu.memory_space<vmem>>, vector<1x1x8x128xf32>
    %324 = vector.shape_cast %323 : vector<1x1x8x128xf32> to vector<8x128xf32>
    %325 = vector.shape_cast %322 : vector<8x128xf32> to vector<1x1x8x128xf32>
    tpu.vector_store %arg10[%c0_432, %c0_433, %c0_434, %c0_435], %325 {strides = array<i32>} : memref<2x2x8x128xf32, #tpu.memory_space<vmem>>, vector<1x1x8x128xf32>,
    %cst_436 = arith.constant 0.000000e+00 : f32
    %326 = vector.broadcast %cst_436 : f32 to vector<8x128xf32>
    %327 = arith.subf %326, %296 : vector<8x128xf32>
    %cst_437 = arith.constant 0.000000e+00 : f32
    %328 = vector.broadcast %cst_437 : f32 to vector<8x128xf32>
    %329 = arith.maximumf %327, %328 : vector<8x128xf32>
    %c0_438 = arith.constant 0 : index
    %c1_439 = arith.constant 1 : index
    %c0_440 = arith.constant 0 : index
    %c0_441 = arith.constant 0 : index
    %330 = vector.load %arg10[%c0_438, %c1_439, %c0_440, %c0_441] : memref<2x2x8x128xf32, #tpu.memory_space<vmem>>, vector<1x1x8x128xf32>
    %331 = vector.shape_cast %330 : vector<1x1x8x128xf32> to vector<8x128xf32>
    %332 = vector.shape_cast %329 : vector<8x128xf32> to vector<1x1x8x128xf32>
    tpu.vector_store %arg10[%c0_438, %c1_439, %c0_440, %c0_441], %332 {strides = array<i32>} : memref<2x2x8x128xf32, #tpu.memory_space<vmem>>, vector<1x1x8x128xf32>,
    %c0_i32_442 = arith.constant 0 : i32
    %c4_i32_443 = arith.constant 4 : i32
    %c0_i32_444 = arith.constant 0 : i32
    %c0_i32_445 = arith.constant 0 : i32
    %c0_i32_446 = arith.constant 0 : i32
    %c0_i32_447 = arith.constant 0 : i32
    %333 = tpu.memref_slice %arg9[%c0_i32_442, %c0_i32_445, %c0_i32_446, %c0_i32_447] : memref<2x2x8x128xf32, #tpu.memory_space<vmem>> -> memref<1x2x8x128xf32, #tpu.memory_space<vmem>>
    %334 = tpu.memref_squeeze %333 : memref<1x2x8x128xf32, #tpu.memory_space<vmem>> -> memref<2x8x128xf32, #tpu.memory_space<vmem>>
    %c0_i32_448 = arith.constant 0 : i32
    %c0_i32_449 = arith.constant 0 : i32
    %c0_i32_450 = arith.constant 0 : i32
    %335 = tpu.memref_slice %arg4[%arg0, %c4_i32_443, %c0_i32_448, %c0_i32_449, %c0_i32_450] : memref<1x6x2x8x128xf32, #tpu.memory_space<any>> -> memref<1x1x2x8x128xf32, #tpu.memory_space<any>>
    %336 = tpu.memref_squeeze %335 : memref<1x1x2x8x128xf32, #tpu.memory_space<any>> -> memref<2x8x128xf32, #tpu.memory_space<any>>
    %337 = tpu.memref_slice %arg11[%c0_i32_444] : memref<2x!tpu.dma_semaphore, #tpu.memory_space<semaphore_mem>> -> memref<1x!tpu.dma_semaphore, #tpu.memory_space<semaphore_mem>>
    %338 = tpu.memref_squeeze %337 : memref<1x!tpu.dma_semaphore, #tpu.memory_space<semaphore_mem>> -> memref<!tpu.dma_semaphore, #tpu.memory_space<semaphore_mem>>
    tpu.enqueue_dma source(%334 : memref<2x8x128xf32, #tpu.memory_space<vmem>>) target(%336 : memref<2x8x128xf32, #tpu.memory_space<any>>) target_semaphore(%338 : memref<!tpu.dma_semaphore, #tpu.memory_space<semaphore_mem>>)
    %c0_i32_451 = arith.constant 0 : i32
    %c4_i32_452 = arith.constant 4 : i32
    %c0_i32_453 = arith.constant 0 : i32
    %c0_i32_454 = arith.constant 0 : i32
    %c0_i32_455 = arith.constant 0 : i32
    %c0_i32_456 = arith.constant 0 : i32
    %339 = tpu.memref_slice %arg10[%c0_i32_451, %c0_i32_454, %c0_i32_455, %c0_i32_456] : memref<2x2x8x128xf32, #tpu.memory_space<vmem>> -> memref<1x2x8x128xf32, #tpu.memory_space<vmem>>
    %340 = tpu.memref_squeeze %339 : memref<1x2x8x128xf32, #tpu.memory_space<vmem>> -> memref<2x8x128xf32, #tpu.memory_space<vmem>>
    %c0_i32_457 = arith.constant 0 : i32
    %c0_i32_458 = arith.constant 0 : i32
    %c0_i32_459 = arith.constant 0 : i32
    %341 = tpu.memref_slice %arg5[%arg0, %c4_i32_452, %c0_i32_457, %c0_i32_458, %c0_i32_459] : memref<1x6x2x8x128xf32, #tpu.memory_space<any>> -> memref<1x1x2x8x128xf32, #tpu.memory_space<any>>
    %342 = tpu.memref_squeeze %341 : memref<1x1x2x8x128xf32, #tpu.memory_space<any>> -> memref<2x8x128xf32, #tpu.memory_space<any>>
    %343 = tpu.memref_slice %arg12[%c0_i32_453] : memref<2x!tpu.dma_semaphore, #tpu.memory_space<semaphore_mem>> -> memref<1x!tpu.dma_semaphore, #tpu.memory_space<semaphore_mem>>
    %344 = tpu.memref_squeeze %343 : memref<1x!tpu.dma_semaphore, #tpu.memory_space<semaphore_mem>> -> memref<!tpu.dma_semaphore, #tpu.memory_space<semaphore_mem>>
    tpu.enqueue_dma source(%340 : memref<2x8x128xf32, #tpu.memory_space<vmem>>) target(%342 : memref<2x8x128xf32, #tpu.memory_space<any>>) target_semaphore(%344 : memref<!tpu.dma_semaphore, #tpu.memory_space<semaphore_mem>>)
    %c0_460 = arith.constant 0 : index
    %c0_461 = arith.constant 0 : index
    %345 = vector.load %arg7[%c0_460, %c0_461] : memref<8x128xf32, #tpu.memory_space<vmem>>, vector<8x128xf32>
    tpu.vector_store %arg7[%c0_460, %c0_461], %292 {strides = array<i32>} : memref<8x128xf32, #tpu.memory_space<vmem>>, vector<8x128xf32>,
    %c0_462 = arith.constant 0 : index
    %c0_463 = arith.constant 0 : index
    %346 = vector.load %arg8[%c0_462, %c0_463] : memref<8x128xf32, #tpu.memory_space<vmem>>, vector<8x128xf32>
    tpu.vector_store %arg8[%c0_462, %c0_463], %290 {strides = array<i32>} : memref<8x128xf32, #tpu.memory_space<vmem>>, vector<8x128xf32>,
    %c0_464 = arith.constant 0 : index
    %c0_465 = arith.constant 0 : index
    %347 = vector.load %arg7[%c0_464, %c0_465] : memref<8x128xf32, #tpu.memory_space<vmem>>, vector<8x128xf32>
    %c0_466 = arith.constant 0 : index
    %c0_467 = arith.constant 0 : index
    %348 = vector.load %arg8[%c0_466, %c0_467] : memref<8x128xf32, #tpu.memory_space<vmem>>, vector<8x128xf32>
    %c1_i32_468 = arith.constant 1 : i32
    %c3_i32_469 = arith.constant 3 : i32
    %c1_i32_470 = arith.constant 1 : i32
    %c0_i32_471 = arith.constant 0 : i32
    %c0_i32_472 = arith.constant 0 : i32
    %c0_i32_473 = arith.constant 0 : i32
    %349 = tpu.memref_slice %arg9[%c1_i32_468, %c0_i32_471, %c0_i32_472, %c0_i32_473] : memref<2x2x8x128xf32, #tpu.memory_space<vmem>> -> memref<1x2x8x128xf32, #tpu.memory_space<vmem>>
    %350 = tpu.memref_squeeze %349 : memref<1x2x8x128xf32, #tpu.memory_space<vmem>> -> memref<2x8x128xf32, #tpu.memory_space<vmem>>
    %c0_i32_474 = arith.constant 0 : i32
    %c0_i32_475 = arith.constant 0 : i32
    %c0_i32_476 = arith.constant 0 : i32
    %351 = tpu.memref_slice %arg4[%arg0, %c3_i32_469, %c0_i32_474, %c0_i32_475, %c0_i32_476] : memref<1x6x2x8x128xf32, #tpu.memory_space<any>> -> memref<1x1x2x8x128xf32, #tpu.memory_space<any>>
    %352 = tpu.memref_squeeze %351 : memref<1x1x2x8x128xf32, #tpu.memory_space<any>> -> memref<2x8x128xf32, #tpu.memory_space<any>>
    %353 = tpu.memref_slice %arg11[%c1_i32_470] : memref<2x!tpu.dma_semaphore, #tpu.memory_space<semaphore_mem>> -> memref<1x!tpu.dma_semaphore, #tpu.memory_space<semaphore_mem>>
    %354 = tpu.memref_squeeze %353 : memref<1x!tpu.dma_semaphore, #tpu.memory_space<semaphore_mem>> -> memref<!tpu.dma_semaphore, #tpu.memory_space<semaphore_mem>>
    tpu.wait_dma2 semaphore(%354 : memref<!tpu.dma_semaphore, #tpu.memory_space<semaphore_mem>>) src(%350 : memref<2x8x128xf32, #tpu.memory_space<vmem>>) dst(%352 : memref<2x8x128xf32, #tpu.memory_space<any>>)
    %c1_i32_477 = arith.constant 1 : i32
    %c3_i32_478 = arith.constant 3 : i32
    %c1_i32_479 = arith.constant 1 : i32
    %c0_i32_480 = arith.constant 0 : i32
    %c0_i32_481 = arith.constant 0 : i32
    %c0_i32_482 = arith.constant 0 : i32
    %355 = tpu.memref_slice %arg10[%c1_i32_477, %c0_i32_480, %c0_i32_481, %c0_i32_482] : memref<2x2x8x128xf32, #tpu.memory_space<vmem>> -> memref<1x2x8x128xf32, #tpu.memory_space<vmem>>
    %356 = tpu.memref_squeeze %355 : memref<1x2x8x128xf32, #tpu.memory_space<vmem>> -> memref<2x8x128xf32, #tpu.memory_space<vmem>>
    %c0_i32_483 = arith.constant 0 : i32
    %c0_i32_484 = arith.constant 0 : i32
    %c0_i32_485 = arith.constant 0 : i32
    %357 = tpu.memref_slice %arg5[%arg0, %c3_i32_478, %c0_i32_483, %c0_i32_484, %c0_i32_485] : memref<1x6x2x8x128xf32, #tpu.memory_space<any>> -> memref<1x1x2x8x128xf32, #tpu.memory_space<any>>
    %358 = tpu.memref_squeeze %357 : memref<1x1x2x8x128xf32, #tpu.memory_space<any>> -> memref<2x8x128xf32, #tpu.memory_space<any>>
    %359 = tpu.memref_slice %arg12[%c1_i32_479] : memref<2x!tpu.dma_semaphore, #tpu.memory_space<semaphore_mem>> -> memref<1x!tpu.dma_semaphore, #tpu.memory_space<semaphore_mem>>
    %360 = tpu.memref_squeeze %359 : memref<1x!tpu.dma_semaphore, #tpu.memory_space<semaphore_mem>> -> memref<!tpu.dma_semaphore, #tpu.memory_space<semaphore_mem>>
    tpu.wait_dma2 semaphore(%360 : memref<!tpu.dma_semaphore, #tpu.memory_space<semaphore_mem>>) src(%356 : memref<2x8x128xf32, #tpu.memory_space<vmem>>) dst(%358 : memref<2x8x128xf32, #tpu.memory_space<any>>)
    %cst_486 = arith.constant 0.000000e+00 : f32
    %361 = vector.broadcast %cst_486 : f32 to vector<8x128xf32>
    %362 = arith.maximumf %347, %361 : vector<8x128xf32>
    %c1_487 = arith.constant 1 : index
    %c0_488 = arith.constant 0 : index
    %c0_489 = arith.constant 0 : index
    %c0_490 = arith.constant 0 : index
    %363 = vector.load %arg9[%c1_487, %c0_488, %c0_489, %c0_490] : memref<2x2x8x128xf32, #tpu.memory_space<vmem>>, vector<1x1x8x128xf32>
    %364 = vector.shape_cast %363 : vector<1x1x8x128xf32> to vector<8x128xf32>
    %365 = vector.shape_cast %362 : vector<8x128xf32> to vector<1x1x8x128xf32>
    tpu.vector_store %arg9[%c1_487, %c0_488, %c0_489, %c0_490], %365 {strides = array<i32>} : memref<2x2x8x128xf32, #tpu.memory_space<vmem>>, vector<1x1x8x128xf32>,
    %cst_491 = arith.constant 0.000000e+00 : f32
    %366 = vector.broadcast %cst_491 : f32 to vector<8x128xf32>
    %367 = arith.subf %366, %347 : vector<8x128xf32>
    %cst_492 = arith.constant 0.000000e+00 : f32
    %368 = vector.broadcast %cst_492 : f32 to vector<8x128xf32>
    %369 = arith.maximumf %367, %368 : vector<8x128xf32>
    %c1_493 = arith.constant 1 : index
    %c1_494 = arith.constant 1 : index
    %c0_495 = arith.constant 0 : index
    %c0_496 = arith.constant 0 : index
    %370 = vector.load %arg9[%c1_493, %c1_494, %c0_495, %c0_496] : memref<2x2x8x128xf32, #tpu.memory_space<vmem>>, vector<1x1x8x128xf32>
    %371 = vector.shape_cast %370 : vector<1x1x8x128xf32> to vector<8x128xf32>
    %372 = vector.shape_cast %369 : vector<8x128xf32> to vector<1x1x8x128xf32>
    tpu.vector_store %arg9[%c1_493, %c1_494, %c0_495, %c0_496], %372 {strides = array<i32>} : memref<2x2x8x128xf32, #tpu.memory_space<vmem>>, vector<1x1x8x128xf32>,
    %cst_497 = arith.constant 0.000000e+00 : f32
    %373 = vector.broadcast %cst_497 : f32 to vector<8x128xf32>
    %374 = arith.maximumf %348, %373 : vector<8x128xf32>
    %c1_498 = arith.constant 1 : index
    %c0_499 = arith.constant 0 : index
    %c0_500 = arith.constant 0 : index
    %c0_501 = arith.constant 0 : index
    %375 = vector.load %arg10[%c1_498, %c0_499, %c0_500, %c0_501] : memref<2x2x8x128xf32, #tpu.memory_space<vmem>>, vector<1x1x8x128xf32>
    %376 = vector.shape_cast %375 : vector<1x1x8x128xf32> to vector<8x128xf32>
    %377 = vector.shape_cast %374 : vector<8x128xf32> to vector<1x1x8x128xf32>
    tpu.vector_store %arg10[%c1_498, %c0_499, %c0_500, %c0_501], %377 {strides = array<i32>} : memref<2x2x8x128xf32, #tpu.memory_space<vmem>>, vector<1x1x8x128xf32>,
    %cst_502 = arith.constant 0.000000e+00 : f32
    %378 = vector.broadcast %cst_502 : f32 to vector<8x128xf32>
    %379 = arith.subf %378, %348 : vector<8x128xf32>
    %cst_503 = arith.constant 0.000000e+00 : f32
    %380 = vector.broadcast %cst_503 : f32 to vector<8x128xf32>
    %381 = arith.maximumf %379, %380 : vector<8x128xf32>
    %c1_504 = arith.constant 1 : index
    %c1_505 = arith.constant 1 : index
    %c0_506 = arith.constant 0 : index
    %c0_507 = arith.constant 0 : index
    %382 = vector.load %arg10[%c1_504, %c1_505, %c0_506, %c0_507] : memref<2x2x8x128xf32, #tpu.memory_space<vmem>>, vector<1x1x8x128xf32>
    %383 = vector.shape_cast %382 : vector<1x1x8x128xf32> to vector<8x128xf32>
    %384 = vector.shape_cast %381 : vector<8x128xf32> to vector<1x1x8x128xf32>
    tpu.vector_store %arg10[%c1_504, %c1_505, %c0_506, %c0_507], %384 {strides = array<i32>} : memref<2x2x8x128xf32, #tpu.memory_space<vmem>>, vector<1x1x8x128xf32>,
    %c1_i32_508 = arith.constant 1 : i32
    %c5_i32_509 = arith.constant 5 : i32
    %c1_i32_510 = arith.constant 1 : i32
    %c0_i32_511 = arith.constant 0 : i32
    %c0_i32_512 = arith.constant 0 : i32
    %c0_i32_513 = arith.constant 0 : i32
    %385 = tpu.memref_slice %arg9[%c1_i32_508, %c0_i32_511, %c0_i32_512, %c0_i32_513] : memref<2x2x8x128xf32, #tpu.memory_space<vmem>> -> memref<1x2x8x128xf32, #tpu.memory_space<vmem>>
    %386 = tpu.memref_squeeze %385 : memref<1x2x8x128xf32, #tpu.memory_space<vmem>> -> memref<2x8x128xf32, #tpu.memory_space<vmem>>
    %c0_i32_514 = arith.constant 0 : i32
    %c0_i32_515 = arith.constant 0 : i32
    %c0_i32_516 = arith.constant 0 : i32
    %387 = tpu.memref_slice %arg4[%arg0, %c5_i32_509, %c0_i32_514, %c0_i32_515, %c0_i32_516] : memref<1x6x2x8x128xf32, #tpu.memory_space<any>> -> memref<1x1x2x8x128xf32, #tpu.memory_space<any>>
    %388 = tpu.memref_squeeze %387 : memref<1x1x2x8x128xf32, #tpu.memory_space<any>> -> memref<2x8x128xf32, #tpu.memory_space<any>>
    %389 = tpu.memref_slice %arg11[%c1_i32_510] : memref<2x!tpu.dma_semaphore, #tpu.memory_space<semaphore_mem>> -> memref<1x!tpu.dma_semaphore, #tpu.memory_space<semaphore_mem>>
    %390 = tpu.memref_squeeze %389 : memref<1x!tpu.dma_semaphore, #tpu.memory_space<semaphore_mem>> -> memref<!tpu.dma_semaphore, #tpu.memory_space<semaphore_mem>>
    tpu.enqueue_dma source(%386 : memref<2x8x128xf32, #tpu.memory_space<vmem>>) target(%388 : memref<2x8x128xf32, #tpu.memory_space<any>>) target_semaphore(%390 : memref<!tpu.dma_semaphore, #tpu.memory_space<semaphore_mem>>)
    %c1_i32_517 = arith.constant 1 : i32
    %c5_i32_518 = arith.constant 5 : i32
    %c1_i32_519 = arith.constant 1 : i32
    %c0_i32_520 = arith.constant 0 : i32
    %c0_i32_521 = arith.constant 0 : i32
    %c0_i32_522 = arith.constant 0 : i32
    %391 = tpu.memref_slice %arg10[%c1_i32_517, %c0_i32_520, %c0_i32_521, %c0_i32_522] : memref<2x2x8x128xf32, #tpu.memory_space<vmem>> -> memref<1x2x8x128xf32, #tpu.memory_space<vmem>>
    %392 = tpu.memref_squeeze %391 : memref<1x2x8x128xf32, #tpu.memory_space<vmem>> -> memref<2x8x128xf32, #tpu.memory_space<vmem>>
    %c0_i32_523 = arith.constant 0 : i32
    %c0_i32_524 = arith.constant 0 : i32
    %c0_i32_525 = arith.constant 0 : i32
    %393 = tpu.memref_slice %arg5[%arg0, %c5_i32_518, %c0_i32_523, %c0_i32_524, %c0_i32_525] : memref<1x6x2x8x128xf32, #tpu.memory_space<any>> -> memref<1x1x2x8x128xf32, #tpu.memory_space<any>>
    %394 = tpu.memref_squeeze %393 : memref<1x1x2x8x128xf32, #tpu.memory_space<any>> -> memref<2x8x128xf32, #tpu.memory_space<any>>
    %395 = tpu.memref_slice %arg12[%c1_i32_519] : memref<2x!tpu.dma_semaphore, #tpu.memory_space<semaphore_mem>> -> memref<1x!tpu.dma_semaphore, #tpu.memory_space<semaphore_mem>>
    %396 = tpu.memref_squeeze %395 : memref<1x!tpu.dma_semaphore, #tpu.memory_space<semaphore_mem>> -> memref<!tpu.dma_semaphore, #tpu.memory_space<semaphore_mem>>
    tpu.enqueue_dma source(%392 : memref<2x8x128xf32, #tpu.memory_space<vmem>>) target(%394 : memref<2x8x128xf32, #tpu.memory_space<any>>) target_semaphore(%396 : memref<!tpu.dma_semaphore, #tpu.memory_space<semaphore_mem>>)
    %c0_i32_526 = arith.constant 0 : i32
    %c4_i32_527 = arith.constant 4 : i32
    %c0_i32_528 = arith.constant 0 : i32
    %c0_i32_529 = arith.constant 0 : i32
    %c0_i32_530 = arith.constant 0 : i32
    %c0_i32_531 = arith.constant 0 : i32
    %397 = tpu.memref_slice %arg9[%c0_i32_526, %c0_i32_529, %c0_i32_530, %c0_i32_531] : memref<2x2x8x128xf32, #tpu.memory_space<vmem>> -> memref<1x2x8x128xf32, #tpu.memory_space<vmem>>
    %398 = tpu.memref_squeeze %397 : memref<1x2x8x128xf32, #tpu.memory_space<vmem>> -> memref<2x8x128xf32, #tpu.memory_space<vmem>>
    %c0_i32_532 = arith.constant 0 : i32
    %c0_i32_533 = arith.constant 0 : i32
    %c0_i32_534 = arith.constant 0 : i32
    %399 = tpu.memref_slice %arg4[%arg0, %c4_i32_527, %c0_i32_532, %c0_i32_533, %c0_i32_534] : memref<1x6x2x8x128xf32, #tpu.memory_space<any>> -> memref<1x1x2x8x128xf32, #tpu.memory_space<any>>
    %400 = tpu.memref_squeeze %399 : memref<1x1x2x8x128xf32, #tpu.memory_space<any>> -> memref<2x8x128xf32, #tpu.memory_space<any>>
    %401 = tpu.memref_slice %arg11[%c0_i32_528] : memref<2x!tpu.dma_semaphore, #tpu.memory_space<semaphore_mem>> -> memref<1x!tpu.dma_semaphore, #tpu.memory_space<semaphore_mem>>
    %402 = tpu.memref_squeeze %401 : memref<1x!tpu.dma_semaphore, #tpu.memory_space<semaphore_mem>> -> memref<!tpu.dma_semaphore, #tpu.memory_space<semaphore_mem>>
    tpu.wait_dma2 semaphore(%402 : memref<!tpu.dma_semaphore, #tpu.memory_space<semaphore_mem>>) src(%398 : memref<2x8x128xf32, #tpu.memory_space<vmem>>) dst(%400 : memref<2x8x128xf32, #tpu.memory_space<any>>)
    %c0_i32_535 = arith.constant 0 : i32
    %c4_i32_536 = arith.constant 4 : i32
    %c0_i32_537 = arith.constant 0 : i32
    %c0_i32_538 = arith.constant 0 : i32
    %c0_i32_539 = arith.constant 0 : i32
    %c0_i32_540 = arith.constant 0 : i32
    %403 = tpu.memref_slice %arg10[%c0_i32_535, %c0_i32_538, %c0_i32_539, %c0_i32_540] : memref<2x2x8x128xf32, #tpu.memory_space<vmem>> -> memref<1x2x8x128xf32, #tpu.memory_space<vmem>>
    %404 = tpu.memref_squeeze %403 : memref<1x2x8x128xf32, #tpu.memory_space<vmem>> -> memref<2x8x128xf32, #tpu.memory_space<vmem>>
    %c0_i32_541 = arith.constant 0 : i32
    %c0_i32_542 = arith.constant 0 : i32
    %c0_i32_543 = arith.constant 0 : i32
    %405 = tpu.memref_slice %arg5[%arg0, %c4_i32_536, %c0_i32_541, %c0_i32_542, %c0_i32_543] : memref<1x6x2x8x128xf32, #tpu.memory_space<any>> -> memref<1x1x2x8x128xf32, #tpu.memory_space<any>>
    %406 = tpu.memref_squeeze %405 : memref<1x1x2x8x128xf32, #tpu.memory_space<any>> -> memref<2x8x128xf32, #tpu.memory_space<any>>
    %407 = tpu.memref_slice %arg12[%c0_i32_537] : memref<2x!tpu.dma_semaphore, #tpu.memory_space<semaphore_mem>> -> memref<1x!tpu.dma_semaphore, #tpu.memory_space<semaphore_mem>>
    %408 = tpu.memref_squeeze %407 : memref<1x!tpu.dma_semaphore, #tpu.memory_space<semaphore_mem>> -> memref<!tpu.dma_semaphore, #tpu.memory_space<semaphore_mem>>
    tpu.wait_dma2 semaphore(%408 : memref<!tpu.dma_semaphore, #tpu.memory_space<semaphore_mem>>) src(%404 : memref<2x8x128xf32, #tpu.memory_space<vmem>>) dst(%406 : memref<2x8x128xf32, #tpu.memory_space<any>>)
    %c1_i32_544 = arith.constant 1 : i32
    %c5_i32_545 = arith.constant 5 : i32
    %c1_i32_546 = arith.constant 1 : i32
    %c0_i32_547 = arith.constant 0 : i32
    %c0_i32_548 = arith.constant 0 : i32
    %c0_i32_549 = arith.constant 0 : i32
    %409 = tpu.memref_slice %arg9[%c1_i32_544, %c0_i32_547, %c0_i32_548, %c0_i32_549] : memref<2x2x8x128xf32, #tpu.memory_space<vmem>> -> memref<1x2x8x128xf32, #tpu.memory_space<vmem>>
    %410 = tpu.memref_squeeze %409 : memref<1x2x8x128xf32, #tpu.memory_space<vmem>> -> memref<2x8x128xf32, #tpu.memory_space<vmem>>
    %c0_i32_550 = arith.constant 0 : i32
    %c0_i32_551 = arith.constant 0 : i32
    %c0_i32_552 = arith.constant 0 : i32
    %411 = tpu.memref_slice %arg4[%arg0, %c5_i32_545, %c0_i32_550, %c0_i32_551, %c0_i32_552] : memref<1x6x2x8x128xf32, #tpu.memory_space<any>> -> memref<1x1x2x8x128xf32, #tpu.memory_space<any>>
    %412 = tpu.memref_squeeze %411 : memref<1x1x2x8x128xf32, #tpu.memory_space<any>> -> memref<2x8x128xf32, #tpu.memory_space<any>>
    %413 = tpu.memref_slice %arg11[%c1_i32_546] : memref<2x!tpu.dma_semaphore, #tpu.memory_space<semaphore_mem>> -> memref<1x!tpu.dma_semaphore, #tpu.memory_space<semaphore_mem>>
    %414 = tpu.memref_squeeze %413 : memref<1x!tpu.dma_semaphore, #tpu.memory_space<semaphore_mem>> -> memref<!tpu.dma_semaphore, #tpu.memory_space<semaphore_mem>>
    tpu.wait_dma2 semaphore(%414 : memref<!tpu.dma_semaphore, #tpu.memory_space<semaphore_mem>>) src(%410 : memref<2x8x128xf32, #tpu.memory_space<vmem>>) dst(%412 : memref<2x8x128xf32, #tpu.memory_space<any>>)
    %c1_i32_553 = arith.constant 1 : i32
    %c5_i32_554 = arith.constant 5 : i32
    %c1_i32_555 = arith.constant 1 : i32
    %c0_i32_556 = arith.constant 0 : i32
    %c0_i32_557 = arith.constant 0 : i32
    %c0_i32_558 = arith.constant 0 : i32
    %415 = tpu.memref_slice %arg10[%c1_i32_553, %c0_i32_556, %c0_i32_557, %c0_i32_558] : memref<2x2x8x128xf32, #tpu.memory_space<vmem>> -> memref<1x2x8x128xf32, #tpu.memory_space<vmem>>
    %416 = tpu.memref_squeeze %415 : memref<1x2x8x128xf32, #tpu.memory_space<vmem>> -> memref<2x8x128xf32, #tpu.memory_space<vmem>>
    %c0_i32_559 = arith.constant 0 : i32
    %c0_i32_560 = arith.constant 0 : i32
    %c0_i32_561 = arith.constant 0 : i32
    %417 = tpu.memref_slice %arg5[%arg0, %c5_i32_554, %c0_i32_559, %c0_i32_560, %c0_i32_561] : memref<1x6x2x8x128xf32, #tpu.memory_space<any>> -> memref<1x1x2x8x128xf32, #tpu.memory_space<any>>
    %418 = tpu.memref_squeeze %417 : memref<1x1x2x8x128xf32, #tpu.memory_space<any>> -> memref<2x8x128xf32, #tpu.memory_space<any>>
    %419 = tpu.memref_slice %arg12[%c1_i32_555] : memref<2x!tpu.dma_semaphore, #tpu.memory_space<semaphore_mem>> -> memref<1x!tpu.dma_semaphore, #tpu.memory_space<semaphore_mem>>
    %420 = tpu.memref_squeeze %419 : memref<1x!tpu.dma_semaphore, #tpu.memory_space<semaphore_mem>> -> memref<!tpu.dma_semaphore, #tpu.memory_space<semaphore_mem>>
    tpu.wait_dma2 semaphore(%420 : memref<!tpu.dma_semaphore, #tpu.memory_space<semaphore_mem>>) src(%416 : memref<2x8x128xf32, #tpu.memory_space<vmem>>) dst(%418 : memref<2x8x128xf32, #tpu.memory_space<any>>)
    return
  }
  func.func @transform_0(%arg0: i32) -> (i32, i32) {
    %c0_i32 = arith.constant 0 : i32
    %c0_i32_0 = arith.constant 0 : i32
    %c0_i32_1 = arith.constant 0 : i32
    return %c0_i32, %c0_i32_0 : i32, i32
  }
  func.func @transform_1(%arg0: i32) -> (i32, i32) {
    %c0_i32 = arith.constant 0 : i32
    %c0_i32_0 = arith.constant 0 : i32
    return %arg0, %c0_i32 : i32, i32
  }
  func.func @transform_2(%arg0: i32) -> (i32, i32) {
    %c0_i32 = arith.constant 0 : i32
    %c0_i32_0 = arith.constant 0 : i32
    return %arg0, %c0_i32 : i32, i32
  }
}

</mosaic_0001>

<llo_original>
// kernel: tpu_custom_call.1
$region0: #{tpu_custom_call.1}
  #allocation0 [shape = 'u32[]', space=smem, size = 0x4, offset = 0x4, fixed_abs, tag = 'smem constant byte address 0x4 - core index']
  #allocation1 [shape = 'u32[72,128]{1,0:T(1,128)}', space=vmem, size = 0x9000, scoped, tag = 'internal scratch']
  #allocation2 [shape = 'f32[8,128]{1,0:T(8,128)}', space=vmem, size = 0x1000, scoped, tag = 'scratch operand']
  #allocation3 [shape = 'f32[8,128]{1,0:T(8,128)}', space=vmem, size = 0x1000, scoped, tag = 'scratch operand']
  #allocation4 [shape = 'f32[8,128]{1,0:T(8,128)}', space=vmem, size = 0x1000, scoped, tag = 'scratch operand']
  #allocation5 [shape = 'f32[2,2,8,128]{3,2,1,0:T(8,128)}', space=vmem, size = 0x4000, scoped, tag = 'scratch operand']
  #allocation6 [shape = 'f32[2,2,8,128]{3,2,1,0:T(8,128)}', space=vmem, size = 0x4000, scoped, tag = 'scratch operand']
  #allocation7 [shape = 's32[2]{0}', space=sflag, size = 0x8, scoped, tag = 'scratch operand']
  #allocation8 [shape = 's32[2]{0}', space=sflag, size = 0x8, scoped, tag = 'scratch operand']
  #allocation14 [shape = 's32[]', space=sflag, size = 0x4, offset = 0, fixed_abs, tag = 'sflag constant byte address 0x0 - dummy sync flag']
  #allocation15 [shape = 's32[]', space=sflag, size = 0x4, offset = 0, fixed_abs, tag = 'sflag constant byte address 0x0 - dummy sync flag']
  #allocation16 [shape = 'u32[]', space=smem, size = 0x4, offset = 0x44, fixed_abs, tag = 'smem constant byte address 0x44 - assertion arg 0']
  #allocation17 [shape = 'u32[]', space=smem, size = 0x4, offset = 0x48, fixed_abs, tag = 'smem constant byte address 0x48 - assertion arg 1']
  #allocation18 [shape = 's32[]', space=sflag, size = 0x4, offset = 0, fixed_abs, tag = 'sflag constant byte address 0x0 - dummy sync flag']
  #allocation19 [shape = 's32[]', space=sflag, size = 0x4, offset = 0, fixed_abs, tag = 'sflag constant byte address 0x0 - dummy sync flag']
  #allocation20 [shape = 's32[]', space=sflag, size = 0x4, offset = 0, fixed_abs, tag = 'sflag constant byte address 0x0 - dummy sync flag']
  #allocation21 [shape = 's32[]', space=sflag, size = 0x4, offset = 0, fixed_abs, tag = 'sflag constant byte address 0x0 - dummy sync flag']
  #allocation22 [shape = 's32[]', space=sflag, size = 0x4, offset = 0, fixed_abs, tag = 'sflag constant byte address 0x0 - dummy sync flag']
  #allocation23 [shape = 's32[]', space=sflag, size = 0x4, offset = 0, fixed_abs, tag = 'sflag constant byte address 0x0 - dummy sync flag']
  #allocation24 [shape = 's32[]', space=sflag, size = 0x4, offset = 0, fixed_abs, tag = 'sflag constant byte address 0x0 - dummy sync flag']
  #allocation25 [shape = 's32[]', space=sflag, size = 0x4, offset = 0, fixed_abs, tag = 'sflag constant byte address 0x0 - dummy sync flag']
  #allocation26 [shape = 's32[]', space=sflag, size = 0x4, offset = 0, fixed_abs, tag = 'sflag constant byte address 0x0 - dummy sync flag']
  #allocation27 [shape = 's32[]', space=sflag, size = 0x4, offset = 0, fixed_abs, tag = 'sflag constant byte address 0x0 - dummy sync flag']
  #allocation28 [shape = 's32[]', space=sflag, size = 0x4, offset = 0, fixed_abs, tag = 'sflag constant byte address 0x0 - dummy sync flag']
  #allocation29 [shape = 's32[]', space=sflag, size = 0x4, offset = 0, fixed_abs, tag = 'sflag constant byte address 0x0 - dummy sync flag']
  #allocation30 [shape = 's32[]', space=sflag, size = 0x4, offset = 0, fixed_abs, tag = 'sflag constant byte address 0x0 - dummy sync flag']
  #allocation31 [shape = 's32[]', space=sflag, size = 0x4, offset = 0, fixed_abs, tag = 'sflag constant byte address 0x0 - dummy sync flag']
  #allocation32 [shape = 's32[]', space=sflag, size = 0x4, offset = 0, fixed_abs, tag = 'sflag constant byte address 0x0 - dummy sync flag']
  #allocation33 [shape = 's32[]', space=sflag, size = 0x4, offset = 0, fixed_abs, tag = 'sflag constant byte address 0x0 - dummy sync flag']
  #allocation34 [shape = 's32[]', space=sflag, size = 0x4, offset = 0, fixed_abs, tag = 'sflag constant byte address 0x0 - dummy sync flag']
  #allocation35 [shape = 's32[]', space=sflag, size = 0x4, offset = 0, fixed_abs, tag = 'sflag constant byte address 0x0 - dummy sync flag']
  #allocation36 [shape = 's32[]', space=sflag, size = 0x4, offset = 0, fixed_abs, tag = 'sflag constant byte address 0x0 - dummy sync flag']
  #allocation37 [shape = 's32[]', space=sflag, size = 0x4, offset = 0, fixed_abs, tag = 'sflag constant byte address 0x0 - dummy sync flag']
  #allocation38 [shape = 's32[]', space=sflag, size = 0x4, offset = 0, fixed_abs, tag = 'sflag constant byte address 0x0 - dummy sync flag']
  #allocation39 [shape = 's32[]', space=sflag, size = 0x4, offset = 0, fixed_abs, tag = 'sflag constant byte address 0x0 - dummy sync flag']
  %s0 = inlined_call_operand.hbm [shape: f32[128,128], index: 0, kind: input, shape index: {}]
  %s1 = inlined_call_operand.hbm [shape: f32[8,128], index: 1, kind: input, shape index: {}]
  %s2 = inlined_call_operand.hbm [shape: f32[8,128], index: 2, kind: input, shape index: {}]
  %s3 = inlined_call_operand.hbm [shape: f32[1,6,2,8,128], index: 3, kind: output, shape index: {0}]
  %s4 = inlined_call_operand.hbm [shape: f32[1,6,2,8,128], index: 4, kind: output, shape index: {1}]
  %5 = xla_tuple %s3, %s4
  %s6 = sld [smem:[#allocation0]]
  $region74: #{tpu_custom_call.1} parent=0
    _
  %s8 = ssub.s32 1, %s6
  %s9 = scalar_select 0, %s8, %s6
  $region1: #{tpu_custom_call.1} parent=0
    #allocation9 [shape = 'u8[65536]{0}', space=vmem, size = 0x10000, scoped, tag = 'input window, operand 0, single buffered']
    #allocation10 [shape = 's32[1]{0}', space=sflag, size = 0x4, scoped, tag = 'scoped memory for tpu_custom_call.1']
    #allocation11 [shape = 'u8[4096]{0}', space=vmem, size = 0x1000, scoped, tag = 'input window, operand 1, single buffered']
    #allocation12 [shape = 's32[1]{0}', space=sflag, size = 0x4, scoped, tag = 'scoped memory for tpu_custom_call.1']
    #allocation13 [shape = 'u8[4096]{0}', space=vmem, size = 0x1000, scoped, tag = 'input window, operand 2, single buffered']
    %10 = vsyncpa [#allocation10], 0
    %11 = vsyncpa [#allocation12], 0
    // Predicated region
    $region2: #{tpu_custom_call.1} parent=1 // pred_check
      _
    $region3: #{tpu_custom_call.1} parent=1 // pred_check_branch
      %13 = sbr.rel (0) target = $region5
    $region4: #{tpu_custom_call.1} parent=1 // pred_region
      %15 = vsyncadd [#allocation10], 0
      %s16 = sshll.u32 %s0, 4
      %s17 = int_to_ptr.hbm [resolvable:$true] %s16
      %s18 = sshll.u32 [#allocation9], 4
      %s19 = int_to_ptr.vmem [resolvable:$true] %s18
      %24 = dma.hbm_to_vmem [thread:$0]  %s17, 2048, %s19, [#allocation10], 128, 128, 8
    $region5: #{tpu_custom_call.1} parent=1 // pred_fallthru
      _
    // Predicated region
    $region6: #{tpu_custom_call.1} parent=1 // pred_check
      _
    $region7: #{tpu_custom_call.1} parent=1 // pred_check_branch
      %26 = sbr.rel (0) target = $region9
    $region8: #{tpu_custom_call.1} parent=1 // pred_region
      %28 = vsyncadd [#allocation12], 0
      %s30 = sshll.u32 %s1, 4
      %s31 = int_to_ptr.hbm [resolvable:$true] %s30
      %s32 = sshll.u32 [#allocation11], 4
      %s33 = int_to_ptr.vmem [resolvable:$true] %s32
      %35 = dma.hbm_to_vmem [thread:$0]  %s31, 128, %s33, [#allocation12]
    $region9: #{tpu_custom_call.1} parent=1 // pred_fallthru
      _
    // Predicated region
    $region10: #{tpu_custom_call.1} parent=1 // pred_check
      _
    $region11: #{tpu_custom_call.1} parent=1 // pred_check_branch
      %37 = sbr.rel (0) target = $region13
    $region12: #{tpu_custom_call.1} parent=1 // pred_region
      %39 = vsyncadd [#allocation12], 0
      %s41 = sshll.u32 %s2, 4
      %s42 = int_to_ptr.hbm [resolvable:$true] %s41
      %s43 = sshll.u32 [#allocation13], 4
      %s44 = int_to_ptr.vmem [resolvable:$true] %s43
      %46 = dma.hbm_to_vmem [thread:$0]  %s42, 128, %s44, [#allocation12]
    $region13: #{tpu_custom_call.1} parent=1 // pred_fallthru
      _
    // Predicated region
    $region14: #{tpu_custom_call.1} parent=1 // pred_check
      _
    $region15: #{tpu_custom_call.1} parent=1 // pred_check_branch
      %48 = sbr.rel (0) target = $region17
    $region16: #{tpu_custom_call.1} parent=1 // pred_region
      %50 = dma.done [#allocation10], 2048
    $region17: #{tpu_custom_call.1} parent=1 // pred_fallthru
      _
    // Predicated region
    $region18: #{tpu_custom_call.1} parent=1 // pred_check
      _
    $region19: #{tpu_custom_call.1} parent=1 // pred_check_branch
      %52 = sbr.rel (0) target = $region21
    $region20: #{tpu_custom_call.1} parent=1 // pred_region
      %54 = dma.done [#allocation12], 128
    $region21: #{tpu_custom_call.1} parent=1 // pred_fallthru
      _
    // Predicated region
    $region22: #{tpu_custom_call.1} parent=1 // pred_check
      _
    $region23: #{tpu_custom_call.1} parent=1 // pred_check_branch
      %56 = sbr.rel (0) target = $region25
    $region24: #{tpu_custom_call.1} parent=1 // pred_region
      %58 = dma.done [#allocation12], 128
    $region25: #{tpu_custom_call.1} parent=1 // pred_fallthru
      _
    %v59 = vld [vmem:[#allocation11] sm:$0xff]
    %60 = vst [vmem:[#allocation2] sm:$0xff] %v59
    %v61 = vld [vmem:[#allocation11] sm:$0xff]
    %62 = vst [vmem:[#allocation3] sm:$0xff] %v61
    %v63 = vld [vmem:[#allocation13] sm:$0xff]
    %64 = vst [vmem:[#allocation4] sm:$0xff] %v63
    %v65 = vld [vmem:[#allocation2] sm:$0xff]
    %v66 = vld [vmem:[#allocation9] sm:$0xff]
    %v67 = vld [vmem:[#allocation9 + $0x8] sm:$0xff]
    %v68 = vld [vmem:[#allocation9 + $0x10] sm:$0xff]
    %v69 = vld [vmem:[#allocation9 + $0x18] sm:$0xff]
    %v70 = vld [vmem:[#allocation9 + $0x20] sm:$0xff]
    %v71 = vld [vmem:[#allocation9 + $0x28] sm:$0xff]
    %v72 = vld [vmem:[#allocation9 + $0x30] sm:$0xff]
    %v73 = vld [vmem:[#allocation9 + $0x38] sm:$0xff]
    %v74 = vld [vmem:[#allocation9 + $0x40] sm:$0xff]
    %v75 = vld [vmem:[#allocation9 + $0x48] sm:$0xff]
    %v76 = vld [vmem:[#allocation9 + $0x50] sm:$0xff]
    %v77 = vld [vmem:[#allocation9 + $0x58] sm:$0xff]
    %v78 = vld [vmem:[#allocation9 + $0x60] sm:$0xff]
    %v79 = vld [vmem:[#allocation9 + $0x68] sm:$0xff]
    %v80 = vld [vmem:[#allocation9 + $0x70] sm:$0xff]
    %v81 = vld [vmem:[#allocation9 + $0x78] sm:$0xff]
    %82 = vmatpush.msra.mxu0 %v81
    %83 = vmatpush.msra.mxu0 %v80
    %84 = vmatpush.msra.mxu0 %v79
    %85 = vmatpush.msra.mxu0 %v78
    %86 = vmatpush.msra.mxu0 %v77
    %87 = vmatpush.msra.mxu0 %v76
    %88 = vmatpush.msra.mxu0 %v75
    %89 = vmatpush.msra.mxu0 %v74
    %90 = vmatpush.msra.mxu0 %v73
    %91 = vmatpush.msra.mxu0 %v72
    %92 = vmatpush.msra.mxu0 %v71
    %93 = vmatpush.msra.mxu0 %v70
    %94 = vmatpush.msra.mxu0 %v69
    %95 = vmatpush.msra.mxu0 %v68
    %96 = vmatpush.msra.mxu0 %v67
    %97 = vmatpush.msra.mxu0 %v66
    %98 = vmatmul.f32.gmra.mxu0 %v65
    %v99 = vpop.f32.mrf.mxu0
    %v100 = vadd.f32 0.0, %v99
    %101 = vdwg.mxu0
    %102 = vmatpush.xpose.msra.mxu0 %v81
    %103 = vmatpush.xpose.msra.mxu0 %v80
    %104 = vmatpush.xpose.msra.mxu0 %v79
    %105 = vmatpush.xpose.msra.mxu0 %v78
    %106 = vmatpush.xpose.msra.mxu0 %v77
    %107 = vmatpush.xpose.msra.mxu0 %v76
    %108 = vmatpush.xpose.msra.mxu0 %v75
    %109 = vmatpush.xpose.msra.mxu0 %v74
    %110 = vmatpush.xpose.msra.mxu0 %v73
    %111 = vmatpush.xpose.msra.mxu0 %v72
    %112 = vmatpush.xpose.msra.mxu0 %v71
    %113 = vmatpush.xpose.msra.mxu0 %v70
    %114 = vmatpush.xpose.msra.mxu0 %v69
    %115 = vmatpush.xpose.msra.mxu0 %v68
    %116 = vmatpush.xpose.msra.mxu0 %v67
    %117 = vmatpush.xpose.msra.mxu0 %v66
    %118 = vmatmul.f32.gmra.mxu0 %v100
    %v119 = vpop.f32.mrf.mxu0
    %v120 = vadd.f32 0.0, %v119
    %121 = vdwg.mxu0
    %v122 = vld [vmem:[#allocation3] sm:$0xff]
    %v123 = vsub.f32 %v122, %v120
    %v124 = vld [vmem:[#allocation4] sm:$0xff]
    %v125 = vsub.f32 %v124, %v100
    %v126 = vmax.f32 %v123, 0.0
    %127 = vst [vmem:[#allocation5] sm:$0xff] %v126
    %v128 = vsub.f32 0.0, %v123
    %v129 = vmax.f32 %v128, 0.0
    %s130 = scalar_lea.vmem [#allocation5], 8
    %131 = vst [vmem:[%s130] sm:$0xff] %v129
    %v132 = vmax.f32 %v125, 0.0
    %133 = vst [vmem:[#allocation6] sm:$0xff] %v132
    %v134 = vsub.f32 0.0, %v125
    %v135 = vmax.f32 %v134, 0.0
    %s136 = scalar_lea.vmem [#allocation6], 8
    %137 = vst [vmem:[%s136] sm:$0xff] %v135
    %s138 = smul.u32 0, 96
    %s139 = scalar_lea.hbm %s3, %s138
    // Predicated region
    $region26: #{tpu_custom_call.1} parent=1 // pred_check
      _
    $region27: #{tpu_custom_call.1} parent=1 // pred_check_branch
      %141 = sbr.rel target = $region29
    $region28: #{tpu_custom_call.1} parent=1 // pred_region
      %142 = sst [smem:[#allocation16]] [#allocation15]
      %143 = sst [smem:[#allocation17]] [#allocation14]
    $region29: #{tpu_custom_call.1} parent=1 // pred_fallthru
      _
    %145 = shalt.err (0)
    %s147 = sshll.u32 [#allocation5], 4
    %s148 = int_to_ptr.vmem [resolvable:$true] %s147
    %s149 = sshll.u32 %s139, 4
    %s150 = int_to_ptr.hbm [resolvable:$true] %s149
    %152 = dma.vmem_to_hbm [thread:$0]  %s148, 256, %s150, [#allocation7]
    %s153 = scalar_lea.hbm %s4, %s138
    // Predicated region
    $region30: #{tpu_custom_call.1} parent=1 // pred_check
      _
    $region31: #{tpu_custom_call.1} parent=1 // pred_check_branch
      %155 = sbr.rel target = $region33
    $region32: #{tpu_custom_call.1} parent=1 // pred_region
      %156 = sst [smem:[#allocation16]] [#allocation19]
      %157 = sst [smem:[#allocation17]] [#allocation18]
    $region33: #{tpu_custom_call.1} parent=1 // pred_fallthru
      _
    %159 = shalt.err (0)
    %s161 = sshll.u32 [#allocation6], 4
    %s162 = int_to_ptr.vmem [resolvable:$true] %s161
    %s163 = sshll.u32 %s153, 4
    %s164 = int_to_ptr.hbm [resolvable:$true] %s163
    %166 = dma.vmem_to_hbm [thread:$0]  %s162, 256, %s164, [#allocation8]
    %167 = vst [vmem:[#allocation3] sm:$0xff] %v120
    %168 = vst [vmem:[#allocation4] sm:$0xff] %v100
    %169 = vst [vmem:[#allocation2] sm:$0xff] %v120
    %v170 = vld [vmem:[#allocation2] sm:$0xff]
    %v171 = vld [vmem:[#allocation9] sm:$0xff]
    %v172 = vld [vmem:[#allocation9 + $0x8] sm:$0xff]
    %v173 = vld [vmem:[#allocation9 + $0x10] sm:$0xff]
    %v174 = vld [vmem:[#allocation9 + $0x18] sm:$0xff]
    %v175 = vld [vmem:[#allocation9 + $0x20] sm:$0xff]
    %v176 = vld [vmem:[#allocation9 + $0x28] sm:$0xff]
    %v177 = vld [vmem:[#allocation9 + $0x30] sm:$0xff]
    %v178 = vld [vmem:[#allocation9 + $0x38] sm:$0xff]
    %v179 = vld [vmem:[#allocation9 + $0x40] sm:$0xff]
    %v180 = vld [vmem:[#allocation9 + $0x48] sm:$0xff]
    %v181 = vld [vmem:[#allocation9 + $0x50] sm:$0xff]
    %v182 = vld [vmem:[#allocation9 + $0x58] sm:$0xff]
    %v183 = vld [vmem:[#allocation9 + $0x60] sm:$0xff]
    %v184 = vld [vmem:[#allocation9 + $0x68] sm:$0xff]
    %v185 = vld [vmem:[#allocation9 + $0x70] sm:$0xff]
    %v186 = vld [vmem:[#allocation9 + $0x78] sm:$0xff]
    %187 = vmatpush.msra.mxu0 %v186
    %188 = vmatpush.msra.mxu0 %v185
    %189 = vmatpush.msra.mxu0 %v184
    %190 = vmatpush.msra.mxu0 %v183
    %191 = vmatpush.msra.mxu0 %v182
    %192 = vmatpush.msra.mxu0 %v181
    %193 = vmatpush.msra.mxu0 %v180
    %194 = vmatpush.msra.mxu0 %v179
    %195 = vmatpush.msra.mxu0 %v178
    %196 = vmatpush.msra.mxu0 %v177
    %197 = vmatpush.msra.mxu0 %v176
    %198 = vmatpush.msra.mxu0 %v175
    %199 = vmatpush.msra.mxu0 %v174
    %200 = vmatpush.msra.mxu0 %v173
    %201 = vmatpush.msra.mxu0 %v172
    %202 = vmatpush.msra.mxu0 %v171
    %203 = vmatmul.f32.gmra.mxu0 %v170
    %v204 = vpop.f32.mrf.mxu0
    %v205 = vadd.f32 0.0, %v204
    %206 = vdwg.mxu0
    %207 = vmatpush.xpose.msra.mxu0 %v186
    %208 = vmatpush.xpose.msra.mxu0 %v185
    %209 = vmatpush.xpose.msra.mxu0 %v184
    %210 = vmatpush.xpose.msra.mxu0 %v183
    %211 = vmatpush.xpose.msra.mxu0 %v182
    %212 = vmatpush.xpose.msra.mxu0 %v181
    %213 = vmatpush.xpose.msra.mxu0 %v180
    %214 = vmatpush.xpose.msra.mxu0 %v179
    %215 = vmatpush.xpose.msra.mxu0 %v178
    %216 = vmatpush.xpose.msra.mxu0 %v177
    %217 = vmatpush.xpose.msra.mxu0 %v176
    %218 = vmatpush.xpose.msra.mxu0 %v175
    %219 = vmatpush.xpose.msra.mxu0 %v174
    %220 = vmatpush.xpose.msra.mxu0 %v173
    %221 = vmatpush.xpose.msra.mxu0 %v172
    %222 = vmatpush.xpose.msra.mxu0 %v171
    %223 = vmatmul.f32.gmra.mxu0 %v205
    %v224 = vpop.f32.mrf.mxu0
    %v225 = vadd.f32 0.0, %v224
    %226 = vdwg.mxu0
    %v227 = vld [vmem:[#allocation3] sm:$0xff]
    %v228 = vsub.f32 %v227, %v225
    %v229 = vld [vmem:[#allocation4] sm:$0xff]
    %v230 = vsub.f32 %v229, %v205
    %v231 = vmax.f32 %v228, 0.0
    %s232 = scalar_lea.vmem [#allocation5], 16
    %233 = vst [vmem:[%s232] sm:$0xff] %v231
    %v234 = vsub.f32 0.0, %v228
    %v235 = vmax.f32 %v234, 0.0
    %s236 = scalar_lea.vmem [#allocation5], 24
    %237 = vst [vmem:[%s236] sm:$0xff] %v235
    %v238 = vmax.f32 %v230, 0.0
    %s239 = scalar_lea.vmem [#allocation6], 16
    %240 = vst [vmem:[%s239] sm:$0xff] %v238
    %v241 = vsub.f32 0.0, %v230
    %v242 = vmax.f32 %v241, 0.0
    %s243 = scalar_lea.vmem [#allocation6], 24
    %244 = vst [vmem:[%s243] sm:$0xff] %v242
    %s245 = sadd.s32 16, %s138
    %s246 = scalar_lea.hbm %s3, %s245
    %s247 = scalar_lea.sflag [#allocation7], 1
    // Predicated region
    $region34: #{tpu_custom_call.1} parent=1 // pred_check
      _
    $region35: #{tpu_custom_call.1} parent=1 // pred_check_branch
      %249 = sbr.rel target = $region37
    $region36: #{tpu_custom_call.1} parent=1 // pred_region
      %250 = sst [smem:[#allocation16]] [#allocation21]
      %251 = sst [smem:[#allocation17]] [#allocation20]
    $region37: #{tpu_custom_call.1} parent=1 // pred_fallthru
      _
    %253 = shalt.err (0)
    %s255 = sshll.u32 %s232, 4
    %s256 = int_to_ptr.vmem [resolvable:$true] %s255
    %s257 = sshll.u32 %s246, 4
    %s258 = int_to_ptr.hbm [resolvable:$true] %s257
    %260 = dma.vmem_to_hbm [thread:$0]  %s256, 256, %s258, %s247
    %s261 = scalar_lea.hbm %s4, %s245
    %s262 = scalar_lea.sflag [#allocation8], 1
    // Predicated region
    $region38: #{tpu_custom_call.1} parent=1 // pred_check
      _
    $region39: #{tpu_custom_call.1} parent=1 // pred_check_branch
      %264 = sbr.rel target = $region41
    $region40: #{tpu_custom_call.1} parent=1 // pred_region
      %265 = sst [smem:[#allocation16]] [#allocation23]
      %266 = sst [smem:[#allocation17]] [#allocation22]
    $region41: #{tpu_custom_call.1} parent=1 // pred_fallthru
      _
    %268 = shalt.err (0)
    %s270 = sshll.u32 %s239, 4
    %s271 = int_to_ptr.vmem [resolvable:$true] %s270
    %s272 = sshll.u32 %s261, 4
    %s273 = int_to_ptr.hbm [resolvable:$true] %s272
    %275 = dma.vmem_to_hbm [thread:$0]  %s271, 256, %s273, %s262
    %276 = vst [vmem:[#allocation3] sm:$0xff] %v225
    %277 = vst [vmem:[#allocation4] sm:$0xff] %v205
    %278 = vst [vmem:[#allocation2] sm:$0xff] %v225
    %v279 = vld [vmem:[#allocation2] sm:$0xff]
    %v280 = vld [vmem:[#allocation9] sm:$0xff]
    %v281 = vld [vmem:[#allocation9 + $0x8] sm:$0xff]
    %v282 = vld [vmem:[#allocation9 + $0x10] sm:$0xff]
    %v283 = vld [vmem:[#allocation9 + $0x18] sm:$0xff]
    %v284 = vld [vmem:[#allocation9 + $0x20] sm:$0xff]
    %v285 = vld [vmem:[#allocation9 + $0x28] sm:$0xff]
    %v286 = vld [vmem:[#allocation9 + $0x30] sm:$0xff]
    %v287 = vld [vmem:[#allocation9 + $0x38] sm:$0xff]
    %v288 = vld [vmem:[#allocation9 + $0x40] sm:$0xff]
    %v289 = vld [vmem:[#allocation9 + $0x48] sm:$0xff]
    %v290 = vld [vmem:[#allocation9 + $0x50] sm:$0xff]
    %v291 = vld [vmem:[#allocation9 + $0x58] sm:$0xff]
    %v292 = vld [vmem:[#allocation9 + $0x60] sm:$0xff]
    %v293 = vld [vmem:[#allocation9 + $0x68] sm:$0xff]
    %v294 = vld [vmem:[#allocation9 + $0x70] sm:$0xff]
    %v295 = vld [vmem:[#allocation9 + $0x78] sm:$0xff]
    %296 = vmatpush.msra.mxu0 %v295
    %297 = vmatpush.msra.mxu0 %v294
    %298 = vmatpush.msra.mxu0 %v293
    %299 = vmatpush.msra.mxu0 %v292
    %300 = vmatpush.msra.mxu0 %v291
    %301 = vmatpush.msra.mxu0 %v290
    %302 = vmatpush.msra.mxu0 %v289
    %303 = vmatpush.msra.mxu0 %v288
    %304 = vmatpush.msra.mxu0 %v287
    %305 = vmatpush.msra.mxu0 %v286
    %306 = vmatpush.msra.mxu0 %v285
    %307 = vmatpush.msra.mxu0 %v284
    %308 = vmatpush.msra.mxu0 %v283
    %309 = vmatpush.msra.mxu0 %v282
    %310 = vmatpush.msra.mxu0 %v281
    %311 = vmatpush.msra.mxu0 %v280
    %312 = vmatmul.f32.gmra.mxu0 %v279
    %v313 = vpop.f32.mrf.mxu0
    %v314 = vadd.f32 0.0, %v313
    %315 = vdwg.mxu0
    %316 = vmatpush.xpose.msra.mxu0 %v295
    %317 = vmatpush.xpose.msra.mxu0 %v294
    %318 = vmatpush.xpose.msra.mxu0 %v293
    %319 = vmatpush.xpose.msra.mxu0 %v292
    %320 = vmatpush.xpose.msra.mxu0 %v291
    %321 = vmatpush.xpose.msra.mxu0 %v290
    %322 = vmatpush.xpose.msra.mxu0 %v289
    %323 = vmatpush.xpose.msra.mxu0 %v288
    %324 = vmatpush.xpose.msra.mxu0 %v287
    %325 = vmatpush.xpose.msra.mxu0 %v286
    %326 = vmatpush.xpose.msra.mxu0 %v285
    %327 = vmatpush.xpose.msra.mxu0 %v284
    %328 = vmatpush.xpose.msra.mxu0 %v283
    %329 = vmatpush.xpose.msra.mxu0 %v282
    %330 = vmatpush.xpose.msra.mxu0 %v281
    %331 = vmatpush.xpose.msra.mxu0 %v280
    %332 = vmatmul.f32.gmra.mxu0 %v314
    %v333 = vpop.f32.mrf.mxu0
    %v334 = vadd.f32 0.0, %v333
    %335 = vdwg.mxu0
    %336 = vst [vmem:[#allocation2] sm:$0xff] %v334
    %v337 = vld [vmem:[#allocation2] sm:$0xff]
    %v338 = vld [vmem:[#allocation9] sm:$0xff]
    %v339 = vld [vmem:[#allocation9 + $0x8] sm:$0xff]
    %v340 = vld [vmem:[#allocation9 + $0x10] sm:$0xff]
    %v341 = vld [vmem:[#allocation9 + $0x18] sm:$0xff]
    %v342 = vld [vmem:[#allocation9 + $0x20] sm:$0xff]
    %v343 = vld [vmem:[#allocation9 + $0x28] sm:$0xff]
    %v344 = vld [vmem:[#allocation9 + $0x30] sm:$0xff]
    %v345 = vld [vmem:[#allocation9 + $0x38] sm:$0xff]
    %v346 = vld [vmem:[#allocation9 + $0x40] sm:$0xff]
    %v347 = vld [vmem:[#allocation9 + $0x48] sm:$0xff]
    %v348 = vld [vmem:[#allocation9 + $0x50] sm:$0xff]
    %v349 = vld [vmem:[#allocation9 + $0x58] sm:$0xff]
    %v350 = vld [vmem:[#allocation9 + $0x60] sm:$0xff]
    %v351 = vld [vmem:[#allocation9 + $0x68] sm:$0xff]
    %v352 = vld [vmem:[#allocation9 + $0x70] sm:$0xff]
    %v353 = vld [vmem:[#allocation9 + $0x78] sm:$0xff]
    %354 = vmatpush.msra.mxu0 %v353
    %355 = vmatpush.msra.mxu0 %v352
    %356 = vmatpush.msra.mxu0 %v351
    %357 = vmatpush.msra.mxu0 %v350
    %358 = vmatpush.msra.mxu0 %v349
    %359 = vmatpush.msra.mxu0 %v348
    %360 = vmatpush.msra.mxu0 %v347
    %361 = vmatpush.msra.mxu0 %v346
    %362 = vmatpush.msra.mxu0 %v345
    %363 = vmatpush.msra.mxu0 %v344
    %364 = vmatpush.msra.mxu0 %v343
    %365 = vmatpush.msra.mxu0 %v342
    %366 = vmatpush.msra.mxu0 %v341
    %367 = vmatpush.msra.mxu0 %v340
    %368 = vmatpush.msra.mxu0 %v339
    %369 = vmatpush.msra.mxu0 %v338
    %370 = vmatmul.f32.gmra.mxu0 %v337
    %v371 = vpop.f32.mrf.mxu0
    %v372 = vadd.f32 0.0, %v371
    %373 = vdwg.mxu0
    %374 = vmatpush.xpose.msra.mxu0 %v353
    %375 = vmatpush.xpose.msra.mxu0 %v352
    %376 = vmatpush.xpose.msra.mxu0 %v351
    %377 = vmatpush.xpose.msra.mxu0 %v350
    %378 = vmatpush.xpose.msra.mxu0 %v349
    %379 = vmatpush.xpose.msra.mxu0 %v348
    %380 = vmatpush.xpose.msra.mxu0 %v347
    %381 = vmatpush.xpose.msra.mxu0 %v346
    %382 = vmatpush.xpose.msra.mxu0 %v345
    %383 = vmatpush.xpose.msra.mxu0 %v344
    %384 = vmatpush.xpose.msra.mxu0 %v343
    %385 = vmatpush.xpose.msra.mxu0 %v342
    %386 = vmatpush.xpose.msra.mxu0 %v341
    %387 = vmatpush.xpose.msra.mxu0 %v340
    %388 = vmatpush.xpose.msra.mxu0 %v339
    %389 = vmatpush.xpose.msra.mxu0 %v338
    %390 = vmatmul.f32.gmra.mxu0 %v372
    %v391 = vpop.f32.mrf.mxu0
    %v392 = vadd.f32 0.0, %v391
    %393 = vdwg.mxu0
    %v394 = vld [vmem:[#allocation3] sm:$0xff]
    %v395 = vsub.f32 %v394, %v392
    %v396 = vld [vmem:[#allocation4] sm:$0xff]
    %v397 = vsub.f32 %v396, %v372
    %s398 = smul.u32 2, 8
    %s399 = smul.u32 %s398, 1
    %s400 = sshll.u32 %s399, 4
    %401 = dma.done [#allocation7], %s400
    %s402 = sshll.u32 %s399, 4
    %403 = dma.done [#allocation8], %s402
    %v404 = vmax.f32 %v395, 0.0
    %405 = vst [vmem:[#allocation5] sm:$0xff] %v404
    %v406 = vsub.f32 0.0, %v395
    %v407 = vmax.f32 %v406, 0.0
    %408 = vst [vmem:[%s130] sm:$0xff] %v407
    %v409 = vmax.f32 %v397, 0.0
    %410 = vst [vmem:[#allocation6] sm:$0xff] %v409
    %v411 = vsub.f32 0.0, %v397
    %v412 = vmax.f32 %v411, 0.0
    %413 = vst [vmem:[%s136] sm:$0xff] %v412
    %s414 = sadd.s32 32, %s138
    %s415 = scalar_lea.hbm %s3, %s414
    // Predicated region
    $region42: #{tpu_custom_call.1} parent=1 // pred_check
      _
    $region43: #{tpu_custom_call.1} parent=1 // pred_check_branch
      %417 = sbr.rel target = $region45
    $region44: #{tpu_custom_call.1} parent=1 // pred_region
      %418 = sst [smem:[#allocation16]] [#allocation25]
      %419 = sst [smem:[#allocation17]] [#allocation24]
    $region45: #{tpu_custom_call.1} parent=1 // pred_fallthru
      _
    %421 = shalt.err (0)
    %s423 = sshll.u32 [#allocation5], 4
    %s424 = int_to_ptr.vmem [resolvable:$true] %s423
    %s425 = sshll.u32 %s415, 4
    %s426 = int_to_ptr.hbm [resolvable:$true] %s425
    %428 = dma.vmem_to_hbm [thread:$0]  %s424, 256, %s426, [#allocation7]
    %s429 = scalar_lea.hbm %s4, %s414
    // Predicated region
    $region46: #{tpu_custom_call.1} parent=1 // pred_check
      _
    $region47: #{tpu_custom_call.1} parent=1 // pred_check_branch
      %431 = sbr.rel target = $region49
    $region48: #{tpu_custom_call.1} parent=1 // pred_region
      %432 = sst [smem:[#allocation16]] [#allocation27]
      %433 = sst [smem:[#allocation17]] [#allocation26]
    $region49: #{tpu_custom_call.1} parent=1 // pred_fallthru
      _
    %435 = shalt.err (0)
    %s437 = sshll.u32 [#allocation6], 4
    %s438 = int_to_ptr.vmem [resolvable:$true] %s437
    %s439 = sshll.u32 %s429, 4
    %s440 = int_to_ptr.hbm [resolvable:$true] %s439
    %442 = dma.vmem_to_hbm [thread:$0]  %s438, 256, %s440, [#allocation8]
    %443 = vst [vmem:[#allocation3] sm:$0xff] %v392
    %444 = vst [vmem:[#allocation4] sm:$0xff] %v372
    %445 = vst [vmem:[#allocation2] sm:$0xff] %v392
    %v446 = vld [vmem:[#allocation2] sm:$0xff]
    %v447 = vld [vmem:[#allocation9] sm:$0xff]
    %v448 = vld [vmem:[#allocation9 + $0x8] sm:$0xff]
    %v449 = vld [vmem:[#allocation9 + $0x10] sm:$0xff]
    %v450 = vld [vmem:[#allocation9 + $0x18] sm:$0xff]
    %v451 = vld [vmem:[#allocation9 + $0x20] sm:$0xff]
    %v452 = vld [vmem:[#allocation9 + $0x28] sm:$0xff]
    %v453 = vld [vmem:[#allocation9 + $0x30] sm:$0xff]
    %v454 = vld [vmem:[#allocation9 + $0x38] sm:$0xff]
    %v455 = vld [vmem:[#allocation9 + $0x40] sm:$0xff]
    %v456 = vld [vmem:[#allocation9 + $0x48] sm:$0xff]
    %v457 = vld [vmem:[#allocation9 + $0x50] sm:$0xff]
    %v458 = vld [vmem:[#allocation9 + $0x58] sm:$0xff]
    %v459 = vld [vmem:[#allocation9 + $0x60] sm:$0xff]
    %v460 = vld [vmem:[#allocation9 + $0x68] sm:$0xff]
    %v461 = vld [vmem:[#allocation9 + $0x70] sm:$0xff]
    %v462 = vld [vmem:[#allocation9 + $0x78] sm:$0xff]
    %463 = vmatpush.msra.mxu0 %v462
    %464 = vmatpush.msra.mxu0 %v461
    %465 = vmatpush.msra.mxu0 %v460
    %466 = vmatpush.msra.mxu0 %v459
    %467 = vmatpush.msra.mxu0 %v458
    %468 = vmatpush.msra.mxu0 %v457
    %469 = vmatpush.msra.mxu0 %v456
    %470 = vmatpush.msra.mxu0 %v455
    %471 = vmatpush.msra.mxu0 %v454
    %472 = vmatpush.msra.mxu0 %v453
    %473 = vmatpush.msra.mxu0 %v452
    %474 = vmatpush.msra.mxu0 %v451
    %475 = vmatpush.msra.mxu0 %v450
    %476 = vmatpush.msra.mxu0 %v449
    %477 = vmatpush.msra.mxu0 %v448
    %478 = vmatpush.msra.mxu0 %v447
    %479 = vmatmul.f32.gmra.mxu0 %v446
    %v480 = vpop.f32.mrf.mxu0
    %v481 = vadd.f32 0.0, %v480
    %482 = vdwg.mxu0
    %483 = vmatpush.xpose.msra.mxu0 %v462
    %484 = vmatpush.xpose.msra.mxu0 %v461
    %485 = vmatpush.xpose.msra.mxu0 %v460
    %486 = vmatpush.xpose.msra.mxu0 %v459
    %487 = vmatpush.xpose.msra.mxu0 %v458
    %488 = vmatpush.xpose.msra.mxu0 %v457
    %489 = vmatpush.xpose.msra.mxu0 %v456
    %490 = vmatpush.xpose.msra.mxu0 %v455
    %491 = vmatpush.xpose.msra.mxu0 %v454
    %492 = vmatpush.xpose.msra.mxu0 %v453
    %493 = vmatpush.xpose.msra.mxu0 %v452
    %494 = vmatpush.xpose.msra.mxu0 %v451
    %495 = vmatpush.xpose.msra.mxu0 %v450
    %496 = vmatpush.xpose.msra.mxu0 %v449
    %497 = vmatpush.xpose.msra.mxu0 %v448
    %498 = vmatpush.xpose.msra.mxu0 %v447
    %499 = vmatmul.f32.gmra.mxu0 %v481
    %v500 = vpop.f32.mrf.mxu0
    %v501 = vadd.f32 0.0, %v500
    %502 = vdwg.mxu0
    %503 = vst [vmem:[#allocation2] sm:$0xff] %v501
    %v504 = vld [vmem:[#allocation2] sm:$0xff]
    %v505 = vld [vmem:[#allocation9] sm:$0xff]
    %v506 = vld [vmem:[#allocation9 + $0x8] sm:$0xff]
    %v507 = vld [vmem:[#allocation9 + $0x10] sm:$0xff]
    %v508 = vld [vmem:[#allocation9 + $0x18] sm:$0xff]
    %v509 = vld [vmem:[#allocation9 + $0x20] sm:$0xff]
    %v510 = vld [vmem:[#allocation9 + $0x28] sm:$0xff]
    %v511 = vld [vmem:[#allocation9 + $0x30] sm:$0xff]
    %v512 = vld [vmem:[#allocation9 + $0x38] sm:$0xff]
    %v513 = vld [vmem:[#allocation9 + $0x40] sm:$0xff]
    %v514 = vld [vmem:[#allocation9 + $0x48] sm:$0xff]
    %v515 = vld [vmem:[#allocation9 + $0x50] sm:$0xff]
    %v516 = vld [vmem:[#allocation9 + $0x58] sm:$0xff]
    %v517 = vld [vmem:[#allocation9 + $0x60] sm:$0xff]
    %v518 = vld [vmem:[#allocation9 + $0x68] sm:$0xff]
    %v519 = vld [vmem:[#allocation9 + $0x70] sm:$0xff]
    %v520 = vld [vmem:[#allocation9 + $0x78] sm:$0xff]
    %521 = vmatpush.msra.mxu0 %v520
    %522 = vmatpush.msra.mxu0 %v519
    %523 = vmatpush.msra.mxu0 %v518
    %524 = vmatpush.msra.mxu0 %v517
    %525 = vmatpush.msra.mxu0 %v516
    %526 = vmatpush.msra.mxu0 %v515
    %527 = vmatpush.msra.mxu0 %v514
    %528 = vmatpush.msra.mxu0 %v513
    %529 = vmatpush.msra.mxu0 %v512
    %530 = vmatpush.msra.mxu0 %v511
    %531 = vmatpush.msra.mxu0 %v510
    %532 = vmatpush.msra.mxu0 %v509
    %533 = vmatpush.msra.mxu0 %v508
    %534 = vmatpush.msra.mxu0 %v507
    %535 = vmatpush.msra.mxu0 %v506
    %536 = vmatpush.msra.mxu0 %v505
    %537 = vmatmul.f32.gmra.mxu0 %v504
    %v538 = vpop.f32.mrf.mxu0
    %v539 = vadd.f32 0.0, %v538
    %540 = vdwg.mxu0
    %541 = vmatpush.xpose.msra.mxu0 %v520
    %542 = vmatpush.xpose.msra.mxu0 %v519
    %543 = vmatpush.xpose.msra.mxu0 %v518
    %544 = vmatpush.xpose.msra.mxu0 %v517
    %545 = vmatpush.xpose.msra.mxu0 %v516
    %546 = vmatpush.xpose.msra.mxu0 %v515
    %547 = vmatpush.xpose.msra.mxu0 %v514
    %548 = vmatpush.xpose.msra.mxu0 %v513
    %549 = vmatpush.xpose.msra.mxu0 %v512
    %550 = vmatpush.xpose.msra.mxu0 %v511
    %551 = vmatpush.xpose.msra.mxu0 %v510
    %552 = vmatpush.xpose.msra.mxu0 %v509
    %553 = vmatpush.xpose.msra.mxu0 %v508
    %554 = vmatpush.xpose.msra.mxu0 %v507
    %555 = vmatpush.xpose.msra.mxu0 %v506
    %556 = vmatpush.xpose.msra.mxu0 %v505
    %557 = vmatmul.f32.gmra.mxu0 %v539
    %v558 = vpop.f32.mrf.mxu0
    %v559 = vadd.f32 0.0, %v558
    %560 = vdwg.mxu0
    %561 = vst [vmem:[#allocation2] sm:$0xff] %v559
    %v562 = vld [vmem:[#allocation2] sm:$0xff]
    %v563 = vld [vmem:[#allocation9] sm:$0xff]
    %v564 = vld [vmem:[#allocation9 + $0x8] sm:$0xff]
    %v565 = vld [vmem:[#allocation9 + $0x10] sm:$0xff]
    %v566 = vld [vmem:[#allocation9 + $0x18] sm:$0xff]
    %v567 = vld [vmem:[#allocation9 + $0x20] sm:$0xff]
    %v568 = vld [vmem:[#allocation9 + $0x28] sm:$0xff]
    %v569 = vld [vmem:[#allocation9 + $0x30] sm:$0xff]
    %v570 = vld [vmem:[#allocation9 + $0x38] sm:$0xff]
    %v571 = vld [vmem:[#allocation9 + $0x40] sm:$0xff]
    %v572 = vld [vmem:[#allocation9 + $0x48] sm:$0xff]
    %v573 = vld [vmem:[#allocation9 + $0x50] sm:$0xff]
    %v574 = vld [vmem:[#allocation9 + $0x58] sm:$0xff]
    %v575 = vld [vmem:[#allocation9 + $0x60] sm:$0xff]
    %v576 = vld [vmem:[#allocation9 + $0x68] sm:$0xff]
    %v577 = vld [vmem:[#allocation9 + $0x70] sm:$0xff]
    %v578 = vld [vmem:[#allocation9 + $0x78] sm:$0xff]
    %579 = vmatpush.msra.mxu0 %v578
    %580 = vmatpush.msra.mxu0 %v577
    %581 = vmatpush.msra.mxu0 %v576
    %582 = vmatpush.msra.mxu0 %v575
    %583 = vmatpush.msra.mxu0 %v574
    %584 = vmatpush.msra.mxu0 %v573
    %585 = vmatpush.msra.mxu0 %v572
    %586 = vmatpush.msra.mxu0 %v571
    %587 = vmatpush.msra.mxu0 %v570
    %588 = vmatpush.msra.mxu0 %v569
    %589 = vmatpush.msra.mxu0 %v568
    %590 = vmatpush.msra.mxu0 %v567
    %591 = vmatpush.msra.mxu0 %v566
    %592 = vmatpush.msra.mxu0 %v565
    %593 = vmatpush.msra.mxu0 %v564
    %594 = vmatpush.msra.mxu0 %v563
    %595 = vmatmul.f32.gmra.mxu0 %v562
    %v596 = vpop.f32.mrf.mxu0
    %v597 = vadd.f32 0.0, %v596
    %598 = vdwg.mxu0
    %599 = vmatpush.xpose.msra.mxu0 %v578
    %600 = vmatpush.xpose.msra.mxu0 %v577
    %601 = vmatpush.xpose.msra.mxu0 %v576
    %602 = vmatpush.xpose.msra.mxu0 %v575
    %603 = vmatpush.xpose.msra.mxu0 %v574
    %604 = vmatpush.xpose.msra.mxu0 %v573
    %605 = vmatpush.xpose.msra.mxu0 %v572
    %606 = vmatpush.xpose.msra.mxu0 %v571
    %607 = vmatpush.xpose.msra.mxu0 %v570
    %608 = vmatpush.xpose.msra.mxu0 %v569
    %609 = vmatpush.xpose.msra.mxu0 %v568
    %610 = vmatpush.xpose.msra.mxu0 %v567
    %611 = vmatpush.xpose.msra.mxu0 %v566
    %612 = vmatpush.xpose.msra.mxu0 %v565
    %613 = vmatpush.xpose.msra.mxu0 %v564
    %614 = vmatpush.xpose.msra.mxu0 %v563
    %615 = vmatmul.f32.gmra.mxu0 %v597
    %v616 = vpop.f32.mrf.mxu0
    %v617 = vadd.f32 0.0, %v616
    %618 = vdwg.mxu0
    %619 = vst [vmem:[#allocation2] sm:$0xff] %v617
    %v620 = vld [vmem:[#allocation2] sm:$0xff]
    %v621 = vld [vmem:[#allocation9] sm:$0xff]
    %v622 = vld [vmem:[#allocation9 + $0x8] sm:$0xff]
    %v623 = vld [vmem:[#allocation9 + $0x10] sm:$0xff]
    %v624 = vld [vmem:[#allocation9 + $0x18] sm:$0xff]
    %v625 = vld [vmem:[#allocation9 + $0x20] sm:$0xff]
    %v626 = vld [vmem:[#allocation9 + $0x28] sm:$0xff]
    %v627 = vld [vmem:[#allocation9 + $0x30] sm:$0xff]
    %v628 = vld [vmem:[#allocation9 + $0x38] sm:$0xff]
    %v629 = vld [vmem:[#allocation9 + $0x40] sm:$0xff]
    %v630 = vld [vmem:[#allocation9 + $0x48] sm:$0xff]
    %v631 = vld [vmem:[#allocation9 + $0x50] sm:$0xff]
    %v632 = vld [vmem:[#allocation9 + $0x58] sm:$0xff]
    %v633 = vld [vmem:[#allocation9 + $0x60] sm:$0xff]
    %v634 = vld [vmem:[#allocation9 + $0x68] sm:$0xff]
    %v635 = vld [vmem:[#allocation9 + $0x70] sm:$0xff]
    %v636 = vld [vmem:[#allocation9 + $0x78] sm:$0xff]
    %637 = vmatpush.msra.mxu0 %v636
    %638 = vmatpush.msra.mxu0 %v635
    %639 = vmatpush.msra.mxu0 %v634
    %640 = vmatpush.msra.mxu0 %v633
    %641 = vmatpush.msra.mxu0 %v632
    %642 = vmatpush.msra.mxu0 %v631
    %643 = vmatpush.msra.mxu0 %v630
    %644 = vmatpush.msra.mxu0 %v629
    %645 = vmatpush.msra.mxu0 %v628
    %646 = vmatpush.msra.mxu0 %v627
    %647 = vmatpush.msra.mxu0 %v626
    %648 = vmatpush.msra.mxu0 %v625
    %649 = vmatpush.msra.mxu0 %v624
    %650 = vmatpush.msra.mxu0 %v623
    %651 = vmatpush.msra.mxu0 %v622
    %652 = vmatpush.msra.mxu0 %v621
    %653 = vmatmul.f32.gmra.mxu0 %v620
    %v654 = vpop.f32.mrf.mxu0
    %v655 = vadd.f32 0.0, %v654
    %656 = vdwg.mxu0
    %657 = vmatpush.xpose.msra.mxu0 %v636
    %658 = vmatpush.xpose.msra.mxu0 %v635
    %659 = vmatpush.xpose.msra.mxu0 %v634
    %660 = vmatpush.xpose.msra.mxu0 %v633
    %661 = vmatpush.xpose.msra.mxu0 %v632
    %662 = vmatpush.xpose.msra.mxu0 %v631
    %663 = vmatpush.xpose.msra.mxu0 %v630
    %664 = vmatpush.xpose.msra.mxu0 %v629
    %665 = vmatpush.xpose.msra.mxu0 %v628
    %666 = vmatpush.xpose.msra.mxu0 %v627
    %667 = vmatpush.xpose.msra.mxu0 %v626
    %668 = vmatpush.xpose.msra.mxu0 %v625
    %669 = vmatpush.xpose.msra.mxu0 %v624
    %670 = vmatpush.xpose.msra.mxu0 %v623
    %671 = vmatpush.xpose.msra.mxu0 %v622
    %672 = vmatpush.xpose.msra.mxu0 %v621
    %673 = vmatmul.f32.gmra.mxu0 %v655
    %v674 = vpop.f32.mrf.mxu0
    %v675 = vadd.f32 0.0, %v674
    %676 = vdwg.mxu0
    %v677 = vld [vmem:[#allocation3] sm:$0xff]
    %v678 = vsub.f32 %v677, %v675
    %v679 = vld [vmem:[#allocation4] sm:$0xff]
    %v680 = vsub.f32 %v679, %v655
    %s681 = sshll.u32 %s399, 4
    %682 = dma.done %s247, %s681
    %s683 = sshll.u32 %s399, 4
    %684 = dma.done %s262, %s683
    %v685 = vmax.f32 %v678, 0.0
    %686 = vst [vmem:[%s232] sm:$0xff] %v685
    %v687 = vsub.f32 0.0, %v678
    %v688 = vmax.f32 %v687, 0.0
    %689 = vst [vmem:[%s236] sm:$0xff] %v688
    %v690 = vmax.f32 %v680, 0.0
    %691 = vst [vmem:[%s239] sm:$0xff] %v690
    %v692 = vsub.f32 0.0, %v680
    %v693 = vmax.f32 %v692, 0.0
    %694 = vst [vmem:[%s243] sm:$0xff] %v693
    %s695 = sadd.s32 48, %s138
    %s696 = scalar_lea.hbm %s3, %s695
    // Predicated region
    $region50: #{tpu_custom_call.1} parent=1 // pred_check
      _
    $region51: #{tpu_custom_call.1} parent=1 // pred_check_branch
      %698 = sbr.rel target = $region53
    $region52: #{tpu_custom_call.1} parent=1 // pred_region
      %699 = sst [smem:[#allocation16]] [#allocation29]
      %700 = sst [smem:[#allocation17]] [#allocation28]
    $region53: #{tpu_custom_call.1} parent=1 // pred_fallthru
      _
    %702 = shalt.err (0)
    %s704 = sshll.u32 %s232, 4
    %s705 = int_to_ptr.vmem [resolvable:$true] %s704
    %s706 = sshll.u32 %s696, 4
    %s707 = int_to_ptr.hbm [resolvable:$true] %s706
    %709 = dma.vmem_to_hbm [thread:$0]  %s705, 256, %s707, %s247
    %s710 = scalar_lea.hbm %s4, %s695
    // Predicated region
    $region54: #{tpu_custom_call.1} parent=1 // pred_check
      _
    $region55: #{tpu_custom_call.1} parent=1 // pred_check_branch
      %712 = sbr.rel target = $region57
    $region56: #{tpu_custom_call.1} parent=1 // pred_region
      %713 = sst [smem:[#allocation16]] [#allocation31]
      %714 = sst [smem:[#allocation17]] [#allocation30]
    $region57: #{tpu_custom_call.1} parent=1 // pred_fallthru
      _
    %716 = shalt.err (0)
    %s718 = sshll.u32 %s239, 4
    %s719 = int_to_ptr.vmem [resolvable:$true] %s718
    %s720 = sshll.u32 %s710, 4
    %s721 = int_to_ptr.hbm [resolvable:$true] %s720
    %723 = dma.vmem_to_hbm [thread:$0]  %s719, 256, %s721, %s262
    %724 = vst [vmem:[#allocation3] sm:$0xff] %v675
    %725 = vst [vmem:[#allocation4] sm:$0xff] %v655
    %726 = vst [vmem:[#allocation2] sm:$0xff] %v675
    %v727 = vld [vmem:[#allocation2] sm:$0xff]
    %v728 = vld [vmem:[#allocation9] sm:$0xff]
    %v729 = vld [vmem:[#allocation9 + $0x8] sm:$0xff]
    %v730 = vld [vmem:[#allocation9 + $0x10] sm:$0xff]
    %v731 = vld [vmem:[#allocation9 + $0x18] sm:$0xff]
    %v732 = vld [vmem:[#allocation9 + $0x20] sm:$0xff]
    %v733 = vld [vmem:[#allocation9 + $0x28] sm:$0xff]
    %v734 = vld [vmem:[#allocation9 + $0x30] sm:$0xff]
    %v735 = vld [vmem:[#allocation9 + $0x38] sm:$0xff]
    %v736 = vld [vmem:[#allocation9 + $0x40] sm:$0xff]
    %v737 = vld [vmem:[#allocation9 + $0x48] sm:$0xff]
    %v738 = vld [vmem:[#allocation9 + $0x50] sm:$0xff]
    %v739 = vld [vmem:[#allocation9 + $0x58] sm:$0xff]
    %v740 = vld [vmem:[#allocation9 + $0x60] sm:$0xff]
    %v741 = vld [vmem:[#allocation9 + $0x68] sm:$0xff]
    %v742 = vld [vmem:[#allocation9 + $0x70] sm:$0xff]
    %v743 = vld [vmem:[#allocation9 + $0x78] sm:$0xff]
    %744 = vmatpush.msra.mxu0 %v743
    %745 = vmatpush.msra.mxu0 %v742
    %746 = vmatpush.msra.mxu0 %v741
    %747 = vmatpush.msra.mxu0 %v740
    %748 = vmatpush.msra.mxu0 %v739
    %749 = vmatpush.msra.mxu0 %v738
    %750 = vmatpush.msra.mxu0 %v737
    %751 = vmatpush.msra.mxu0 %v736
    %752 = vmatpush.msra.mxu0 %v735
    %753 = vmatpush.msra.mxu0 %v734
    %754 = vmatpush.msra.mxu0 %v733
    %755 = vmatpush.msra.mxu0 %v732
    %756 = vmatpush.msra.mxu0 %v731
    %757 = vmatpush.msra.mxu0 %v730
    %758 = vmatpush.msra.mxu0 %v729
    %759 = vmatpush.msra.mxu0 %v728
    %760 = vmatmul.f32.gmra.mxu0 %v727
    %v761 = vpop.f32.mrf.mxu0
    %v762 = vadd.f32 0.0, %v761
    %763 = vdwg.mxu0
    %764 = vmatpush.xpose.msra.mxu0 %v743
    %765 = vmatpush.xpose.msra.mxu0 %v742
    %766 = vmatpush.xpose.msra.mxu0 %v741
    %767 = vmatpush.xpose.msra.mxu0 %v740
    %768 = vmatpush.xpose.msra.mxu0 %v739
    %769 = vmatpush.xpose.msra.mxu0 %v738
    %770 = vmatpush.xpose.msra.mxu0 %v737
    %771 = vmatpush.xpose.msra.mxu0 %v736
    %772 = vmatpush.xpose.msra.mxu0 %v735
    %773 = vmatpush.xpose.msra.mxu0 %v734
    %774 = vmatpush.xpose.msra.mxu0 %v733
    %775 = vmatpush.xpose.msra.mxu0 %v732
    %776 = vmatpush.xpose.msra.mxu0 %v731
    %777 = vmatpush.xpose.msra.mxu0 %v730
    %778 = vmatpush.xpose.msra.mxu0 %v729
    %779 = vmatpush.xpose.msra.mxu0 %v728
    %780 = vmatmul.f32.gmra.mxu0 %v762
    %v781 = vpop.f32.mrf.mxu0
    %v782 = vadd.f32 0.0, %v781
    %783 = vdwg.mxu0
    %784 = vst [vmem:[#allocation2] sm:$0xff] %v782
    %v785 = vld [vmem:[#allocation2] sm:$0xff]
    %v786 = vld [vmem:[#allocation9] sm:$0xff]
    %v787 = vld [vmem:[#allocation9 + $0x8] sm:$0xff]
    %v788 = vld [vmem:[#allocation9 + $0x10] sm:$0xff]
    %v789 = vld [vmem:[#allocation9 + $0x18] sm:$0xff]
    %v790 = vld [vmem:[#allocation9 + $0x20] sm:$0xff]
    %v791 = vld [vmem:[#allocation9 + $0x28] sm:$0xff]
    %v792 = vld [vmem:[#allocation9 + $0x30] sm:$0xff]
    %v793 = vld [vmem:[#allocation9 + $0x38] sm:$0xff]
    %v794 = vld [vmem:[#allocation9 + $0x40] sm:$0xff]
    %v795 = vld [vmem:[#allocation9 + $0x48] sm:$0xff]
    %v796 = vld [vmem:[#allocation9 + $0x50] sm:$0xff]
    %v797 = vld [vmem:[#allocation9 + $0x58] sm:$0xff]
    %v798 = vld [vmem:[#allocation9 + $0x60] sm:$0xff]
    %v799 = vld [vmem:[#allocation9 + $0x68] sm:$0xff]
    %v800 = vld [vmem:[#allocation9 + $0x70] sm:$0xff]
    %v801 = vld [vmem:[#allocation9 + $0x78] sm:$0xff]
    %802 = vmatpush.msra.mxu0 %v801
    %803 = vmatpush.msra.mxu0 %v800
    %804 = vmatpush.msra.mxu0 %v799
    %805 = vmatpush.msra.mxu0 %v798
    %806 = vmatpush.msra.mxu0 %v797
    %807 = vmatpush.msra.mxu0 %v796
    %808 = vmatpush.msra.mxu0 %v795
    %809 = vmatpush.msra.mxu0 %v794
    %810 = vmatpush.msra.mxu0 %v793
    %811 = vmatpush.msra.mxu0 %v792
    %812 = vmatpush.msra.mxu0 %v791
    %813 = vmatpush.msra.mxu0 %v790
    %814 = vmatpush.msra.mxu0 %v789
    %815 = vmatpush.msra.mxu0 %v788
    %816 = vmatpush.msra.mxu0 %v787
    %817 = vmatpush.msra.mxu0 %v786
    %818 = vmatmul.f32.gmra.mxu0 %v785
    %v819 = vpop.f32.mrf.mxu0
    %v820 = vadd.f32 0.0, %v819
    %821 = vdwg.mxu0
    %822 = vmatpush.xpose.msra.mxu0 %v801
    %823 = vmatpush.xpose.msra.mxu0 %v800
    %824 = vmatpush.xpose.msra.mxu0 %v799
    %825 = vmatpush.xpose.msra.mxu0 %v798
    %826 = vmatpush.xpose.msra.mxu0 %v797
    %827 = vmatpush.xpose.msra.mxu0 %v796
    %828 = vmatpush.xpose.msra.mxu0 %v795
    %829 = vmatpush.xpose.msra.mxu0 %v794
    %830 = vmatpush.xpose.msra.mxu0 %v793
    %831 = vmatpush.xpose.msra.mxu0 %v792
    %832 = vmatpush.xpose.msra.mxu0 %v791
    %833 = vmatpush.xpose.msra.mxu0 %v790
    %834 = vmatpush.xpose.msra.mxu0 %v789
    %835 = vmatpush.xpose.msra.mxu0 %v788
    %836 = vmatpush.xpose.msra.mxu0 %v787
    %837 = vmatpush.xpose.msra.mxu0 %v786
    %838 = vmatmul.f32.gmra.mxu0 %v820
    %v839 = vpop.f32.mrf.mxu0
    %v840 = vadd.f32 0.0, %v839
    %841 = vdwg.mxu0
    %842 = vst [vmem:[#allocation2] sm:$0xff] %v840
    %v843 = vld [vmem:[#allocation2] sm:$0xff]
    %v844 = vld [vmem:[#allocation9] sm:$0xff]
    %v845 = vld [vmem:[#allocation9 + $0x8] sm:$0xff]
    %v846 = vld [vmem:[#allocation9 + $0x10] sm:$0xff]
    %v847 = vld [vmem:[#allocation9 + $0x18] sm:$0xff]
    %v848 = vld [vmem:[#allocation9 + $0x20] sm:$0xff]
    %v849 = vld [vmem:[#allocation9 + $0x28] sm:$0xff]
    %v850 = vld [vmem:[#allocation9 + $0x30] sm:$0xff]
    %v851 = vld [vmem:[#allocation9 + $0x38] sm:$0xff]
    %v852 = vld [vmem:[#allocation9 + $0x40] sm:$0xff]
    %v853 = vld [vmem:[#allocation9 + $0x48] sm:$0xff]
    %v854 = vld [vmem:[#allocation9 + $0x50] sm:$0xff]
    %v855 = vld [vmem:[#allocation9 + $0x58] sm:$0xff]
    %v856 = vld [vmem:[#allocation9 + $0x60] sm:$0xff]
    %v857 = vld [vmem:[#allocation9 + $0x68] sm:$0xff]
    %v858 = vld [vmem:[#allocation9 + $0x70] sm:$0xff]
    %v859 = vld [vmem:[#allocation9 + $0x78] sm:$0xff]
    %860 = vmatpush.msra.mxu0 %v859
    %861 = vmatpush.msra.mxu0 %v858
    %862 = vmatpush.msra.mxu0 %v857
    %863 = vmatpush.msra.mxu0 %v856
    %864 = vmatpush.msra.mxu0 %v855
    %865 = vmatpush.msra.mxu0 %v854
    %866 = vmatpush.msra.mxu0 %v853
    %867 = vmatpush.msra.mxu0 %v852
    %868 = vmatpush.msra.mxu0 %v851
    %869 = vmatpush.msra.mxu0 %v850
    %870 = vmatpush.msra.mxu0 %v849
    %871 = vmatpush.msra.mxu0 %v848
    %872 = vmatpush.msra.mxu0 %v847
    %873 = vmatpush.msra.mxu0 %v846
    %874 = vmatpush.msra.mxu0 %v845
    %875 = vmatpush.msra.mxu0 %v844
    %876 = vmatmul.f32.gmra.mxu0 %v843
    %v877 = vpop.f32.mrf.mxu0
    %v878 = vadd.f32 0.0, %v877
    %879 = vdwg.mxu0
    %880 = vmatpush.xpose.msra.mxu0 %v859
    %881 = vmatpush.xpose.msra.mxu0 %v858
    %882 = vmatpush.xpose.msra.mxu0 %v857
    %883 = vmatpush.xpose.msra.mxu0 %v856
    %884 = vmatpush.xpose.msra.mxu0 %v855
    %885 = vmatpush.xpose.msra.mxu0 %v854
    %886 = vmatpush.xpose.msra.mxu0 %v853
    %887 = vmatpush.xpose.msra.mxu0 %v852
    %888 = vmatpush.xpose.msra.mxu0 %v851
    %889 = vmatpush.xpose.msra.mxu0 %v850
    %890 = vmatpush.xpose.msra.mxu0 %v849
    %891 = vmatpush.xpose.msra.mxu0 %v848
    %892 = vmatpush.xpose.msra.mxu0 %v847
    %893 = vmatpush.xpose.msra.mxu0 %v846
    %894 = vmatpush.xpose.msra.mxu0 %v845
    %895 = vmatpush.xpose.msra.mxu0 %v844
    %896 = vmatmul.f32.gmra.mxu0 %v878
    %v897 = vpop.f32.mrf.mxu0
    %v898 = vadd.f32 0.0, %v897
    %899 = vdwg.mxu0
    %900 = vst [vmem:[#allocation2] sm:$0xff] %v898
    %v901 = vld [vmem:[#allocation2] sm:$0xff]
    %v902 = vld [vmem:[#allocation9] sm:$0xff]
    %v903 = vld [vmem:[#allocation9 + $0x8] sm:$0xff]
    %v904 = vld [vmem:[#allocation9 + $0x10] sm:$0xff]
    %v905 = vld [vmem:[#allocation9 + $0x18] sm:$0xff]
    %v906 = vld [vmem:[#allocation9 + $0x20] sm:$0xff]
    %v907 = vld [vmem:[#allocation9 + $0x28] sm:$0xff]
    %v908 = vld [vmem:[#allocation9 + $0x30] sm:$0xff]
    %v909 = vld [vmem:[#allocation9 + $0x38] sm:$0xff]
    %v910 = vld [vmem:[#allocation9 + $0x40] sm:$0xff]
    %v911 = vld [vmem:[#allocation9 + $0x48] sm:$0xff]
    %v912 = vld [vmem:[#allocation9 + $0x50] sm:$0xff]
    %v913 = vld [vmem:[#allocation9 + $0x58] sm:$0xff]
    %v914 = vld [vmem:[#allocation9 + $0x60] sm:$0xff]
    %v915 = vld [vmem:[#allocation9 + $0x68] sm:$0xff]
    %v916 = vld [vmem:[#allocation9 + $0x70] sm:$0xff]
    %v917 = vld [vmem:[#allocation9 + $0x78] sm:$0xff]
    %918 = vmatpush.msra.mxu0 %v917
    %919 = vmatpush.msra.mxu0 %v916
    %920 = vmatpush.msra.mxu0 %v915
    %921 = vmatpush.msra.mxu0 %v914
    %922 = vmatpush.msra.mxu0 %v913
    %923 = vmatpush.msra.mxu0 %v912
    %924 = vmatpush.msra.mxu0 %v911
    %925 = vmatpush.msra.mxu0 %v910
    %926 = vmatpush.msra.mxu0 %v909
    %927 = vmatpush.msra.mxu0 %v908
    %928 = vmatpush.msra.mxu0 %v907
    %929 = vmatpush.msra.mxu0 %v906
    %930 = vmatpush.msra.mxu0 %v905
    %931 = vmatpush.msra.mxu0 %v904
    %932 = vmatpush.msra.mxu0 %v903
    %933 = vmatpush.msra.mxu0 %v902
    %934 = vmatmul.f32.gmra.mxu0 %v901
    %v935 = vpop.f32.mrf.mxu0
    %v936 = vadd.f32 0.0, %v935
    %937 = vdwg.mxu0
    %938 = vmatpush.xpose.msra.mxu0 %v917
    %939 = vmatpush.xpose.msra.mxu0 %v916
    %940 = vmatpush.xpose.msra.mxu0 %v915
    %941 = vmatpush.xpose.msra.mxu0 %v914
    %942 = vmatpush.xpose.msra.mxu0 %v913
    %943 = vmatpush.xpose.msra.mxu0 %v912
    %944 = vmatpush.xpose.msra.mxu0 %v911
    %945 = vmatpush.xpose.msra.mxu0 %v910
    %946 = vmatpush.xpose.msra.mxu0 %v909
    %947 = vmatpush.xpose.msra.mxu0 %v908
    %948 = vmatpush.xpose.msra.mxu0 %v907
    %949 = vmatpush.xpose.msra.mxu0 %v906
    %950 = vmatpush.xpose.msra.mxu0 %v905
    %951 = vmatpush.xpose.msra.mxu0 %v904
    %952 = vmatpush.xpose.msra.mxu0 %v903
    %953 = vmatpush.xpose.msra.mxu0 %v902
    %954 = vmatmul.f32.gmra.mxu0 %v936
    %v955 = vpop.f32.mrf.mxu0
    %v956 = vadd.f32 0.0, %v955
    %957 = vdwg.mxu0
    %958 = vst [vmem:[#allocation2] sm:$0xff] %v956
    %v959 = vld [vmem:[#allocation2] sm:$0xff]
    %v960 = vld [vmem:[#allocation9] sm:$0xff]
    %v961 = vld [vmem:[#allocation9 + $0x8] sm:$0xff]
    %v962 = vld [vmem:[#allocation9 + $0x10] sm:$0xff]
    %v963 = vld [vmem:[#allocation9 + $0x18] sm:$0xff]
    %v964 = vld [vmem:[#allocation9 + $0x20] sm:$0xff]
    %v965 = vld [vmem:[#allocation9 + $0x28] sm:$0xff]
    %v966 = vld [vmem:[#allocation9 + $0x30] sm:$0xff]
    %v967 = vld [vmem:[#allocation9 + $0x38] sm:$0xff]
    %v968 = vld [vmem:[#allocation9 + $0x40] sm:$0xff]
    %v969 = vld [vmem:[#allocation9 + $0x48] sm:$0xff]
    %v970 = vld [vmem:[#allocation9 + $0x50] sm:$0xff]
    %v971 = vld [vmem:[#allocation9 + $0x58] sm:$0xff]
    %v972 = vld [vmem:[#allocation9 + $0x60] sm:$0xff]
    %v973 = vld [vmem:[#allocation9 + $0x68] sm:$0xff]
    %v974 = vld [vmem:[#allocation9 + $0x70] sm:$0xff]
    %v975 = vld [vmem:[#allocation9 + $0x78] sm:$0xff]
    %976 = vmatpush.msra.mxu0 %v975
    %977 = vmatpush.msra.mxu0 %v974
    %978 = vmatpush.msra.mxu0 %v973
    %979 = vmatpush.msra.mxu0 %v972
    %980 = vmatpush.msra.mxu0 %v971
    %981 = vmatpush.msra.mxu0 %v970
    %982 = vmatpush.msra.mxu0 %v969
    %983 = vmatpush.msra.mxu0 %v968
    %984 = vmatpush.msra.mxu0 %v967
    %985 = vmatpush.msra.mxu0 %v966
    %986 = vmatpush.msra.mxu0 %v965
    %987 = vmatpush.msra.mxu0 %v964
    %988 = vmatpush.msra.mxu0 %v963
    %989 = vmatpush.msra.mxu0 %v962
    %990 = vmatpush.msra.mxu0 %v961
    %991 = vmatpush.msra.mxu0 %v960
    %992 = vmatmul.f32.gmra.mxu0 %v959
    %v993 = vpop.f32.mrf.mxu0
    %v994 = vadd.f32 0.0, %v993
    %995 = vdwg.mxu0
    %996 = vmatpush.xpose.msra.mxu0 %v975
    %997 = vmatpush.xpose.msra.mxu0 %v974
    %998 = vmatpush.xpose.msra.mxu0 %v973
    %999 = vmatpush.xpose.msra.mxu0 %v972
    %1000 = vmatpush.xpose.msra.mxu0 %v971
    %1001 = vmatpush.xpose.msra.mxu0 %v970
    %1002 = vmatpush.xpose.msra.mxu0 %v969
    %1003 = vmatpush.xpose.msra.mxu0 %v968
    %1004 = vmatpush.xpose.msra.mxu0 %v967
    %1005 = vmatpush.xpose.msra.mxu0 %v966
    %1006 = vmatpush.xpose.msra.mxu0 %v965
    %1007 = vmatpush.xpose.msra.mxu0 %v964
    %1008 = vmatpush.xpose.msra.mxu0 %v963
    %1009 = vmatpush.xpose.msra.mxu0 %v962
    %1010 = vmatpush.xpose.msra.mxu0 %v961
    %1011 = vmatpush.xpose.msra.mxu0 %v960
    %1012 = vmatmul.f32.gmra.mxu0 %v994
    %v1013 = vpop.f32.mrf.mxu0
    %v1014 = vadd.f32 0.0, %v1013
    %1015 = vdwg.mxu0
    %1016 = vst [vmem:[#allocation2] sm:$0xff] %v1014
    %v1017 = vld [vmem:[#allocation2] sm:$0xff]
    %v1018 = vld [vmem:[#allocation9] sm:$0xff]
    %v1019 = vld [vmem:[#allocation9 + $0x8] sm:$0xff]
    %v1020 = vld [vmem:[#allocation9 + $0x10] sm:$0xff]
    %v1021 = vld [vmem:[#allocation9 + $0x18] sm:$0xff]
    %v1022 = vld [vmem:[#allocation9 + $0x20] sm:$0xff]
    %v1023 = vld [vmem:[#allocation9 + $0x28] sm:$0xff]
    %v1024 = vld [vmem:[#allocation9 + $0x30] sm:$0xff]
    %v1025 = vld [vmem:[#allocation9 + $0x38] sm:$0xff]
    %v1026 = vld [vmem:[#allocation9 + $0x40] sm:$0xff]
    %v1027 = vld [vmem:[#allocation9 + $0x48] sm:$0xff]
    %v1028 = vld [vmem:[#allocation9 + $0x50] sm:$0xff]
    %v1029 = vld [vmem:[#allocation9 + $0x58] sm:$0xff]
    %v1030 = vld [vmem:[#allocation9 + $0x60] sm:$0xff]
    %v1031 = vld [vmem:[#allocation9 + $0x68] sm:$0xff]
    %v1032 = vld [vmem:[#allocation9 + $0x70] sm:$0xff]
    %v1033 = vld [vmem:[#allocation9 + $0x78] sm:$0xff]
    %1034 = vmatpush.msra.mxu0 %v1033
    %1035 = vmatpush.msra.mxu0 %v1032
    %1036 = vmatpush.msra.mxu0 %v1031
    %1037 = vmatpush.msra.mxu0 %v1030
    %1038 = vmatpush.msra.mxu0 %v1029
    %1039 = vmatpush.msra.mxu0 %v1028
    %1040 = vmatpush.msra.mxu0 %v1027
    %1041 = vmatpush.msra.mxu0 %v1026
    %1042 = vmatpush.msra.mxu0 %v1025
    %1043 = vmatpush.msra.mxu0 %v1024
    %1044 = vmatpush.msra.mxu0 %v1023
    %1045 = vmatpush.msra.mxu0 %v1022
    %1046 = vmatpush.msra.mxu0 %v1021
    %1047 = vmatpush.msra.mxu0 %v1020
    %1048 = vmatpush.msra.mxu0 %v1019
    %1049 = vmatpush.msra.mxu0 %v1018
    %1050 = vmatmul.f32.gmra.mxu0 %v1017
    %v1051 = vpop.f32.mrf.mxu0
    %v1052 = vadd.f32 0.0, %v1051
    %1053 = vdwg.mxu0
    %1054 = vmatpush.xpose.msra.mxu0 %v1033
    %1055 = vmatpush.xpose.msra.mxu0 %v1032
    %1056 = vmatpush.xpose.msra.mxu0 %v1031
    %1057 = vmatpush.xpose.msra.mxu0 %v1030
    %1058 = vmatpush.xpose.msra.mxu0 %v1029
    %1059 = vmatpush.xpose.msra.mxu0 %v1028
    %1060 = vmatpush.xpose.msra.mxu0 %v1027
    %1061 = vmatpush.xpose.msra.mxu0 %v1026
    %1062 = vmatpush.xpose.msra.mxu0 %v1025
    %1063 = vmatpush.xpose.msra.mxu0 %v1024
    %1064 = vmatpush.xpose.msra.mxu0 %v1023
    %1065 = vmatpush.xpose.msra.mxu0 %v1022
    %1066 = vmatpush.xpose.msra.mxu0 %v1021
    %1067 = vmatpush.xpose.msra.mxu0 %v1020
    %1068 = vmatpush.xpose.msra.mxu0 %v1019
    %1069 = vmatpush.xpose.msra.mxu0 %v1018
    %1070 = vmatmul.f32.gmra.mxu0 %v1052
    %v1071 = vpop.f32.mrf.mxu0
    %v1072 = vadd.f32 0.0, %v1071
    %1073 = vdwg.mxu0
    %1074 = vst [vmem:[#allocation2] sm:$0xff] %v1072
    %v1075 = vld [vmem:[#allocation2] sm:$0xff]
    %v1076 = vld [vmem:[#allocation9] sm:$0xff]
    %v1077 = vld [vmem:[#allocation9 + $0x8] sm:$0xff]
    %v1078 = vld [vmem:[#allocation9 + $0x10] sm:$0xff]
    %v1079 = vld [vmem:[#allocation9 + $0x18] sm:$0xff]
    %v1080 = vld [vmem:[#allocation9 + $0x20] sm:$0xff]
    %v1081 = vld [vmem:[#allocation9 + $0x28] sm:$0xff]
    %v1082 = vld [vmem:[#allocation9 + $0x30] sm:$0xff]
    %v1083 = vld [vmem:[#allocation9 + $0x38] sm:$0xff]
    %v1084 = vld [vmem:[#allocation9 + $0x40] sm:$0xff]
    %v1085 = vld [vmem:[#allocation9 + $0x48] sm:$0xff]
    %v1086 = vld [vmem:[#allocation9 + $0x50] sm:$0xff]
    %v1087 = vld [vmem:[#allocation9 + $0x58] sm:$0xff]
    %v1088 = vld [vmem:[#allocation9 + $0x60] sm:$0xff]
    %v1089 = vld [vmem:[#allocation9 + $0x68] sm:$0xff]
    %v1090 = vld [vmem:[#allocation9 + $0x70] sm:$0xff]
    %v1091 = vld [vmem:[#allocation9 + $0x78] sm:$0xff]
    %1092 = vmatpush.msra.mxu0 %v1091
    %1093 = vmatpush.msra.mxu0 %v1090
    %1094 = vmatpush.msra.mxu0 %v1089
    %1095 = vmatpush.msra.mxu0 %v1088
    %1096 = vmatpush.msra.mxu0 %v1087
    %1097 = vmatpush.msra.mxu0 %v1086
    %1098 = vmatpush.msra.mxu0 %v1085
    %1099 = vmatpush.msra.mxu0 %v1084
    %1100 = vmatpush.msra.mxu0 %v1083
    %1101 = vmatpush.msra.mxu0 %v1082
    %1102 = vmatpush.msra.mxu0 %v1081
    %1103 = vmatpush.msra.mxu0 %v1080
    %1104 = vmatpush.msra.mxu0 %v1079
    %1105 = vmatpush.msra.mxu0 %v1078
    %1106 = vmatpush.msra.mxu0 %v1077
    %1107 = vmatpush.msra.mxu0 %v1076
    %1108 = vmatmul.f32.gmra.mxu0 %v1075
    %v1109 = vpop.f32.mrf.mxu0
    %v1110 = vadd.f32 0.0, %v1109
    %1111 = vdwg.mxu0
    %1112 = vmatpush.xpose.msra.mxu0 %v1091
    %1113 = vmatpush.xpose.msra.mxu0 %v1090
    %1114 = vmatpush.xpose.msra.mxu0 %v1089
    %1115 = vmatpush.xpose.msra.mxu0 %v1088
    %1116 = vmatpush.xpose.msra.mxu0 %v1087
    %1117 = vmatpush.xpose.msra.mxu0 %v1086
    %1118 = vmatpush.xpose.msra.mxu0 %v1085
    %1119 = vmatpush.xpose.msra.mxu0 %v1084
    %1120 = vmatpush.xpose.msra.mxu0 %v1083
    %1121 = vmatpush.xpose.msra.mxu0 %v1082
    %1122 = vmatpush.xpose.msra.mxu0 %v1081
    %1123 = vmatpush.xpose.msra.mxu0 %v1080
    %1124 = vmatpush.xpose.msra.mxu0 %v1079
    %1125 = vmatpush.xpose.msra.mxu0 %v1078
    %1126 = vmatpush.xpose.msra.mxu0 %v1077
    %1127 = vmatpush.xpose.msra.mxu0 %v1076
    %1128 = vmatmul.f32.gmra.mxu0 %v1110
    %v1129 = vpop.f32.mrf.mxu0
    %v1130 = vadd.f32 0.0, %v1129
    %1131 = vdwg.mxu0
    %1132 = vst [vmem:[#allocation2] sm:$0xff] %v1130
    %v1133 = vld [vmem:[#allocation2] sm:$0xff]
    %v1134 = vld [vmem:[#allocation9] sm:$0xff]
    %v1135 = vld [vmem:[#allocation9 + $0x8] sm:$0xff]
    %v1136 = vld [vmem:[#allocation9 + $0x10] sm:$0xff]
    %v1137 = vld [vmem:[#allocation9 + $0x18] sm:$0xff]
    %v1138 = vld [vmem:[#allocation9 + $0x20] sm:$0xff]
    %v1139 = vld [vmem:[#allocation9 + $0x28] sm:$0xff]
    %v1140 = vld [vmem:[#allocation9 + $0x30] sm:$0xff]
    %v1141 = vld [vmem:[#allocation9 + $0x38] sm:$0xff]
    %v1142 = vld [vmem:[#allocation9 + $0x40] sm:$0xff]
    %v1143 = vld [vmem:[#allocation9 + $0x48] sm:$0xff]
    %v1144 = vld [vmem:[#allocation9 + $0x50] sm:$0xff]
    %v1145 = vld [vmem:[#allocation9 + $0x58] sm:$0xff]
    %v1146 = vld [vmem:[#allocation9 + $0x60] sm:$0xff]
    %v1147 = vld [vmem:[#allocation9 + $0x68] sm:$0xff]
    %v1148 = vld [vmem:[#allocation9 + $0x70] sm:$0xff]
    %v1149 = vld [vmem:[#allocation9 + $0x78] sm:$0xff]
    %1150 = vmatpush.msra.mxu0 %v1149
    %1151 = vmatpush.msra.mxu0 %v1148
    %1152 = vmatpush.msra.mxu0 %v1147
    %1153 = vmatpush.msra.mxu0 %v1146
    %1154 = vmatpush.msra.mxu0 %v1145
    %1155 = vmatpush.msra.mxu0 %v1144
    %1156 = vmatpush.msra.mxu0 %v1143
    %1157 = vmatpush.msra.mxu0 %v1142
    %1158 = vmatpush.msra.mxu0 %v1141
    %1159 = vmatpush.msra.mxu0 %v1140
    %1160 = vmatpush.msra.mxu0 %v1139
    %1161 = vmatpush.msra.mxu0 %v1138
    %1162 = vmatpush.msra.mxu0 %v1137
    %1163 = vmatpush.msra.mxu0 %v1136
    %1164 = vmatpush.msra.mxu0 %v1135
    %1165 = vmatpush.msra.mxu0 %v1134
    %1166 = vmatmul.f32.gmra.mxu0 %v1133
    %v1167 = vpop.f32.mrf.mxu0
    %v1168 = vadd.f32 0.0, %v1167
    %1169 = vdwg.mxu0
    %1170 = vmatpush.xpose.msra.mxu0 %v1149
    %1171 = vmatpush.xpose.msra.mxu0 %v1148
    %1172 = vmatpush.xpose.msra.mxu0 %v1147
    %1173 = vmatpush.xpose.msra.mxu0 %v1146
    %1174 = vmatpush.xpose.msra.mxu0 %v1145
    %1175 = vmatpush.xpose.msra.mxu0 %v1144
    %1176 = vmatpush.xpose.msra.mxu0 %v1143
    %1177 = vmatpush.xpose.msra.mxu0 %v1142
    %1178 = vmatpush.xpose.msra.mxu0 %v1141
    %1179 = vmatpush.xpose.msra.mxu0 %v1140
    %1180 = vmatpush.xpose.msra.mxu0 %v1139
    %1181 = vmatpush.xpose.msra.mxu0 %v1138
    %1182 = vmatpush.xpose.msra.mxu0 %v1137
    %1183 = vmatpush.xpose.msra.mxu0 %v1136
    %1184 = vmatpush.xpose.msra.mxu0 %v1135
    %1185 = vmatpush.xpose.msra.mxu0 %v1134
    %1186 = vmatmul.f32.gmra.mxu0 %v1168
    %v1187 = vpop.f32.mrf.mxu0
    %v1188 = vadd.f32 0.0, %v1187
    %1189 = vdwg.mxu0
    %v1190 = vld [vmem:[#allocation3] sm:$0xff]
    %v1191 = vsub.f32 %v1190, %v1188
    %v1192 = vld [vmem:[#allocation4] sm:$0xff]
    %v1193 = vsub.f32 %v1192, %v1168
    %s1194 = sshll.u32 %s399, 4
    %1195 = dma.done [#allocation7], %s1194
    %s1196 = sshll.u32 %s399, 4
    %1197 = dma.done [#allocation8], %s1196
    %v1198 = vmax.f32 %v1191, 0.0
    %1199 = vst [vmem:[#allocation5] sm:$0xff] %v1198
    %v1200 = vsub.f32 0.0, %v1191
    %v1201 = vmax.f32 %v1200, 0.0
    %1202 = vst [vmem:[%s130] sm:$0xff] %v1201
    %v1203 = vmax.f32 %v1193, 0.0
    %1204 = vst [vmem:[#allocation6] sm:$0xff] %v1203
    %v1205 = vsub.f32 0.0, %v1193
    %v1206 = vmax.f32 %v1205, 0.0
    %1207 = vst [vmem:[%s136] sm:$0xff] %v1206
    %s1208 = sadd.s32 64, %s138
    %s1209 = scalar_lea.hbm %s3, %s1208
    // Predicated region
    $region58: #{tpu_custom_call.1} parent=1 // pred_check
      _
    $region59: #{tpu_custom_call.1} parent=1 // pred_check_branch
      %1211 = sbr.rel target = $region61
    $region60: #{tpu_custom_call.1} parent=1 // pred_region
      %1212 = sst [smem:[#allocation16]] [#allocation33]
      %1213 = sst [smem:[#allocation17]] [#allocation32]
    $region61: #{tpu_custom_call.1} parent=1 // pred_fallthru
      _
    %1215 = shalt.err (0)
    %s1217 = sshll.u32 [#allocation5], 4
    %s1218 = int_to_ptr.vmem [resolvable:$true] %s1217
    %s1219 = sshll.u32 %s1209, 4
    %s1220 = int_to_ptr.hbm [resolvable:$true] %s1219
    %1222 = dma.vmem_to_hbm [thread:$0]  %s1218, 256, %s1220, [#allocation7]
    %s1223 = scalar_lea.hbm %s4, %s1208
    // Predicated region
    $region62: #{tpu_custom_call.1} parent=1 // pred_check
      _
    $region63: #{tpu_custom_call.1} parent=1 // pred_check_branch
      %1225 = sbr.rel target = $region65
    $region64: #{tpu_custom_call.1} parent=1 // pred_region
      %1226 = sst [smem:[#allocation16]] [#allocation35]
      %1227 = sst [smem:[#allocation17]] [#allocation34]
    $region65: #{tpu_custom_call.1} parent=1 // pred_fallthru
      _
    %1229 = shalt.err (0)
    %s1231 = sshll.u32 [#allocation6], 4
    %s1232 = int_to_ptr.vmem [resolvable:$true] %s1231
    %s1233 = sshll.u32 %s1223, 4
    %s1234 = int_to_ptr.hbm [resolvable:$true] %s1233
    %1236 = dma.vmem_to_hbm [thread:$0]  %s1232, 256, %s1234, [#allocation8]
    %1237 = vst [vmem:[#allocation3] sm:$0xff] %v1188
    %1238 = vst [vmem:[#allocation4] sm:$0xff] %v1168
    %v1239 = vld [vmem:[#allocation3] sm:$0xff]
    %v1240 = vld [vmem:[#allocation4] sm:$0xff]
    %s1241 = sshll.u32 %s399, 4
    %1242 = dma.done %s247, %s1241
    %s1243 = sshll.u32 %s399, 4
    %1244 = dma.done %s262, %s1243
    %v1245 = vmax.f32 %v1239, 0.0
    %1246 = vst [vmem:[%s232] sm:$0xff] %v1245
    %v1247 = vsub.f32 0.0, %v1239
    %v1248 = vmax.f32 %v1247, 0.0
    %1249 = vst [vmem:[%s236] sm:$0xff] %v1248
    %v1250 = vmax.f32 %v1240, 0.0
    %1251 = vst [vmem:[%s239] sm:$0xff] %v1250
    %v1252 = vsub.f32 0.0, %v1240
    %v1253 = vmax.f32 %v1252, 0.0
    %1254 = vst [vmem:[%s243] sm:$0xff] %v1253
    %s1255 = sadd.s32 80, %s138
    %s1256 = scalar_lea.hbm %s3, %s1255
    // Predicated region
    $region66: #{tpu_custom_call.1} parent=1 // pred_check
      _
    $region67: #{tpu_custom_call.1} parent=1 // pred_check_branch
      %1258 = sbr.rel target = $region69
    $region68: #{tpu_custom_call.1} parent=1 // pred_region
      %1259 = sst [smem:[#allocation16]] [#allocation37]
      %1260 = sst [smem:[#allocation17]] [#allocation36]
    $region69: #{tpu_custom_call.1} parent=1 // pred_fallthru
      _
    %1262 = shalt.err (0)
    %s1264 = sshll.u32 %s232, 4
    %s1265 = int_to_ptr.vmem [resolvable:$true] %s1264
    %s1266 = sshll.u32 %s1256, 4
    %s1267 = int_to_ptr.hbm [resolvable:$true] %s1266
    %1269 = dma.vmem_to_hbm [thread:$0]  %s1265, 256, %s1267, %s247
    %s1270 = scalar_lea.hbm %s4, %s1255
    // Predicated region
    $region70: #{tpu_custom_call.1} parent=1 // pred_check
      _
    $region71: #{tpu_custom_call.1} parent=1 // pred_check_branch
      %1272 = sbr.rel target = $region73
    $region72: #{tpu_custom_call.1} parent=1 // pred_region
      %1273 = sst [smem:[#allocation16]] [#allocation39]
      %1274 = sst [smem:[#allocation17]] [#allocation38]
    $region73: #{tpu_custom_call.1} parent=1 // pred_fallthru
      _
    %1276 = shalt.err (0)
    %s1278 = sshll.u32 %s239, 4
    %s1279 = int_to_ptr.vmem [resolvable:$true] %s1278
    %s1280 = sshll.u32 %s1270, 4
    %s1281 = int_to_ptr.hbm [resolvable:$true] %s1280
    %1283 = dma.vmem_to_hbm [thread:$0]  %s1279, 256, %s1281, %s262
    %s1284 = sshll.u32 %s399, 4
    %1285 = dma.done [#allocation7], %s1284
    %s1286 = sshll.u32 %s399, 4
    %1287 = dma.done [#allocation8], %s1286
    %s1288 = sshll.u32 %s399, 4
    %1289 = dma.done %s247, %s1288
    %s1290 = sshll.u32 %s399, 4
    %1291 = dma.done %s262, %s1290
    %1292 = vsyncpa [#allocation10], 1
    %1293 = vsyncpa [#allocation12], 1
  %1294 = vsyncmov [#allocation7]
  %s1295 = vpop.sfrf %1294
  %p1296 = scmp.eq.s32.totalorder %s1295, 0
  %p1297 = pneg %p1296
  %1299 = shalt.err (%p1297)
  %s1300 = scalar_lea.sflag [#allocation7], 1
  %1301 = vsyncmov %s1300
  %s1302 = vpop.sfrf %1301
  %p1303 = scmp.eq.s32.totalorder %s1302, 0
  %p1304 = pneg %p1303
  %1306 = shalt.err (%p1304)
  %1307 = vsyncmov [#allocation8]
  %s1308 = vpop.sfrf %1307
  %p1309 = scmp.eq.s32.totalorder %s1308, 0
  %p1310 = pneg %p1309
  %1312 = shalt.err (%p1310)
  %s1313 = scalar_lea.sflag [#allocation8], 1
  %1314 = vsyncmov %s1313
  %s1315 = vpop.sfrf %1314
  %p1316 = scmp.eq.s32.totalorder %s1315, 0
  %p1317 = pneg %p1316
  %1319 = shalt.err (%p1317)

</llo_original>
